<compile_context>
chip_gen: v7x
topology: tpu7x:2x2x1
jax: 0.10.0
libtpu: 0.0.40
codegen_flags: <defaults>
</compile_context>

<pallas_src>
import numpy as np
import jax
import jax.numpy as jnp
from jax import lax
from jax.experimental import pallas as pl
from jax.experimental.pallas import tpu as pltpu

# CNN_2 fixed sizes (the FC layers hard-wire 28x28 MNIST input)
C_OUT = 16                       # conv output channels
POOL_HW = 14                     # spatial size after 2x2 max-pool
S = POOL_HW * POOL_HW            # 196 spatial positions per channel
S_PAD = 200                      # lane-padded spatial size (so F_PAD % 128 == 0)
F_IN = C_OUT * S                 # 3136 real features (torch .view(B,-1) order)
F_PAD = C_OUT * S_PAD            # 3200 padded features = 25 * 128
N1, N2, N3 = 32 * 32, 16 * 16, 10
N_K_FC1 = 5                      # fc1 K-pipeline chunks
K_CHUNK = F_PAD // N_K_FC1       # 640 rows of (padded) W1 per chunk, lane-dense


def _sigmoid_ref(v):
    return 1.0 / (1.0 + jnp.exp(-v))


def _sigmoid_kernel(v):
    # exp on the EUP; approximate reciprocal also on the EUP (free slot).
    return pl.reciprocal(1.0 + jnp.exp(-v), approx=True)


# ---------------------------------------------------------------------------
# Kernel 1: Conv2d(1->16, k=3, s=1, pad=1) + ReLU + MaxPool2d(2)  (MXU matmul)
#   p_ref : VMEM (BB, 36, 196) bf16  im2col patches, rows = pool_offset*9 + tap
#   w_ref : VMEM (16, 9)       bf16  conv taps (tap = dy*3+dx, cross-correlation)
#   b_ref : VMEM (16, 1)       f32   conv bias
#   o_ref : VMEM (BB, 16, 200) bf16  pooled features, channel-major, 4 pad lanes
# ---------------------------------------------------------------------------
def conv_relu_pool_kernel(p_ref, w_ref, b_ref, o_ref):
    w = w_ref[...]                                    # (16, 9) bf16, hoisted
    bias = b_ref[...]                                 # (16, 1) f32, hoisted
    bb = p_ref.shape[0]

    # zero the 4 pad lanes per channel once per grid step (tiny masked store)
    o_ref[:, :, S:] = jnp.zeros((bb, C_OUT, S_PAD - S), dtype=o_ref.dtype)

    def per_image(b, carry):
        pooled = None
        for o in range(4):                            # 2x2 pool offsets (static)
            patch = p_ref[b, o * 9:(o + 1) * 9, :]    # (9, 196) bf16, static slice
            y = jnp.dot(w, patch, preferred_element_type=jnp.float32) + bias
            y = jnp.maximum(y, 0.0)                   # bias + ReLU (f32)
            pooled = y if pooled is None else jnp.maximum(pooled, y)
        # one lane-dense write of the real 196 lanes per image
        o_ref[b, :, :S] = pooled.astype(o_ref.dtype)
        return carry

    lax.fori_loop(0, bb, per_image, 0, unroll=2)


def conv_relu_pool(x, w_taps, bias_c, *, block_b=32):
    """x: (B,1,28,28) f32 -> (B,16,200) bf16 pooled features (channel-major)."""
    B = x.shape[0]
    BB = min(B, block_b)
    xpad = jnp.pad(x, ((0, 0), (0, 0), (1, 1), (1, 1)))            # (B,1,30,30)
    # im2col (layout plumbing only; all arithmetic is in the kernel):
    #   P[b, o*9 + dy*3+dx, i*14+j] = xpad[b, 0, 2i+di+dy, 2j+dj+dx], o=(di,dj)
    cols = []
    for di in (0, 1):
        for dj in (0, 1):
            for dy in range(3):
                for dx in range(3):
                    sl = xpad[:, 0, di + dy::2, dj + dx::2][:, :POOL_HW, :POOL_HW]
                    cols.append(sl.reshape(B, S))
    P = jnp.stack(cols, axis=1).astype(jnp.bfloat16)               # (B,36,196) bf16

    return pl.pallas_call(
        conv_relu_pool_kernel,
        out_shape=jax.ShapeDtypeStruct((B, C_OUT, S_PAD), jnp.bfloat16),
        grid=(pl.cdiv(B, BB),),
        in_specs=[
            pl.BlockSpec((BB, 36, S), lambda g: (g, 0, 0)),
            pl.BlockSpec((C_OUT, 9), lambda g: (0, 0)),
            pl.BlockSpec((C_OUT, 1), lambda g: (0, 0)),
        ],
        out_specs=pl.BlockSpec((BB, C_OUT, S_PAD), lambda g: (g, 0, 0)),
        compiler_params=pltpu.CompilerParams(dimension_semantics=("parallel",)),
    )(P, w_taps, bias_c)


# ---------------------------------------------------------------------------
# Kernel 2: fused MLP head with K-pipelined fc1 (chunking expressed in BlockSpec)
#   x_ref  : (BM, 640)   bf16  feature chunk k (padded torch flatten order)
#   w1_ref : (640, 1024) bf16  fc1 weight chunk k (pad rows are zero)
#   b1/w2/b2/w3/b3 : resident full blocks (bf16 weights, f32 biases)
#   acc_ref: (BM, 1024) f32 VMEM accumulator across the K grid axis
# ---------------------------------------------------------------------------
def mlp_head_kernel(x_ref, w1_ref, b1_ref, w2_ref, b2_ref, w3_ref, b3_ref,
                    o_ref, acc_ref):
    k = pl.program_id(1)

    @pl.when(k == 0)
    def _init():
        acc_ref[...] = jnp.zeros_like(acc_ref)

    # x already arrives bf16 from kernel 1; bf16 only as MXU operands.
    acc_ref[...] += jnp.dot(x_ref[...], w1_ref[...],
                            preferred_element_type=jnp.float32)

    @pl.when(k == pl.num_programs(1) - 1)
    def _finalize():
        h1 = _sigmoid_kernel(acc_ref[...] + b1_ref[...])           # (BM,1024) f32
        z2 = jnp.dot(h1.astype(jnp.bfloat16), w2_ref[...],
                     preferred_element_type=jnp.float32) + b2_ref[...]
        h2 = _sigmoid_kernel(z2)                                   # (BM,256)  f32
        logits = jnp.dot(h2.astype(jnp.bfloat16), w3_ref[...],
                         preferred_element_type=jnp.float32) + b3_ref[...]
        p = _sigmoid_kernel(logits)                                # (BM,10)   f32
        # exact row-normalize (10 lanes -> exact division is essentially free)
        o_ref[...] = p / jnp.sum(p, axis=1, keepdims=True)


def mlp_head(x, w1p, b1, w2, b2, w3, b3, *, block_m=128):
    """x: (B, 3200) bf16, w1p: (3200, 1024) bf16 -> (B, 10) f32.

    block_m=128 is right for v5e; raise to 256 on v6e/v7x when B >= 256 to
    halve the number of W1 re-streams (dominant HBM byte term).
    """
    B = x.shape[0]
    BM = min(B, block_m)
    grid = (pl.cdiv(B, BM), N_K_FC1)            # batch "parallel", K reduction last
    return pl.pallas_call(
        mlp_head_kernel,
        out_shape=jax.ShapeDtypeStruct((B, N3), jnp.float32),
        grid_spec=pltpu.PrefetchScalarGridSpec(
            num_scalar_prefetch=0,
            grid=grid,
            in_specs=[
                pl.BlockSpec((BM, K_CHUNK), lambda m, k: (m, k)),
                pl.BlockSpec((K_CHUNK, N1), lambda m, k: (k, 0)),
                pl.BlockSpec((1, N1), lambda m, k: (0, 0)),
                pl.BlockSpec((N1, N2), lambda m, k: (0, 0)),
                pl.BlockSpec((1, N2), lambda m, k: (0, 0)),
                pl.BlockSpec((N2, N3), lambda m, k: (0, 0)),
                pl.BlockSpec((1, N3), lambda m, k: (0, 0)),
            ],
            out_specs=pl.BlockSpec((BM, N3), lambda m, k: (m, 0)),
            scratch_shapes=[pltpu.VMEM((BM, N1), jnp.float32)],
        ),
        compiler_params=pltpu.CompilerParams(
            dimension_semantics=("parallel", "arbitrary"),
            vmem_limit_bytes=24 * 1024 * 1024,
        ),
    )(x, w1p, b1, w2, b2, w3, b3)


# ---------------------------------------------------------------------------
# One-time parameter packing (outside the per-step forward: no per-call HBM
# traffic for the bf16 casts or the W1 row re-indexing).
# ---------------------------------------------------------------------------
def prepare_params(params):
    wc, bc, w1, b1, w2, b2, w3, b3 = params
    # Re-index W1 rows from c*196+s to c*200+s with zero rows in the pad band,
    # so kernel-1's lane-padded (B,16,200) slab flattens straight into fc1.
    w1p = w1.reshape(C_OUT, S, N1)
    w1p = jnp.pad(w1p, ((0, 0), (0, S_PAD - S), (0, 0)))
    w1p = w1p.reshape(F_PAD, N1).astype(jnp.bfloat16)
    return dict(
        w_taps=wc.reshape(C_OUT, 9).astype(jnp.bfloat16),
        bias_c=bc.reshape(C_OUT, 1).astype(jnp.float32),
        w1=w1p,
        b1=b1.reshape(1, N1).astype(jnp.float32),
        w2=w2.astype(jnp.bfloat16),
        b2=b2.reshape(1, N2).astype(jnp.float32),
        w3=w3.astype(jnp.bfloat16),
        b3=b3.reshape(1, N3).astype(jnp.float32),
    )


@jax.jit
def cnn2_forward(x, prep):
    feat = conv_relu_pool(x, prep["w_taps"], prep["bias_c"])       # (B,16,200) bf16
    B = feat.shape[0]
    # contiguous reshape only (no transpose, no extra HBM round trip)
    x2 = feat.reshape(B, F_PAD)
    return mlp_head(x2, prep["w1"], prep["b1"], prep["w2"], prep["b2"],
                    prep["w3"], prep["b3"])


# ---------------------------------------------------------------------------
# Pure-JAX f32 reference (same math, plain XLA) for a sanity check.
# ---------------------------------------------------------------------------
def reference_forward(x, params):
    wc, bc, w1, b1, w2, b2, w3, b3 = params
    y = jax.lax.conv_general_dilated(
        x, wc, window_strides=(1, 1), padding=((1, 1), (1, 1)),
        dimension_numbers=("NCHW", "OIHW", "NCHW"))
    y = jnp.maximum(y + bc[None, :, None, None], 0.0)
    B = x.shape[0]
    y = y.reshape(B, 16, 14, 2, 14, 2).max(axis=(3, 5))
    h = y.reshape(B, -1)
    h = _sigmoid_ref(h @ w1 + b1)
    h = _sigmoid_ref(h @ w2 + b2)
    p = _sigmoid_ref(h @ w3 + b3)
    return p / p.sum(axis=1, keepdims=True)


if __name__ == "__main__":
    key = jax.random.PRNGKey(0)
    ks = jax.random.split(key, 9)

    def uinit(k, shape, fan_in):
        bound = 1.0 / float(np.sqrt(fan_in))
        return jax.random.uniform(k, shape, jnp.float32, -bound, bound)

    # Parameter shapes from CNN_2.__init__ (Linear weights stored as (in, out)).
    params = (
        uinit(ks[0], (C_OUT, 1, 3, 3), 9),       # conv w
        uinit(ks[1], (C_OUT,), 9),               # conv b
        uinit(ks[2], (F_IN, N1), F_IN),          # fc1 w
        uinit(ks[3], (N1,), F_IN),               # fc1 b
        uinit(ks[4], (N1, N2), N1),              # fc2 w
        uinit(ks[5], (N2,), N1),                 # fc2 b
        uinit(ks[6], (N2, N3), N2),              # fc3 w
        uinit(ks[7], (N3,), N2),                 # fc3 b
    )
    # The FC sizes hard-wire 28x28 MNIST input; batch kept small (2).
    x = jax.random.normal(ks[8], (2, 1, 28, 28), jnp.float32)

    prep = prepare_params(params)
    out = jax.block_until_ready(cnn2_forward(x, prep))
    ref = jax.block_until_ready(reference_forward(x, params))

    assert out.shape == (2, 10), out.shape
    # exact final normalize -> rows sum to 1 up to f32 rounding
    assert np.allclose(np.asarray(out).sum(axis=1), 1.0, atol=1e-3)
    # bf16 MXU operands + approx-EUP sigmoid vs f32 reference
    assert np.allclose(np.asarray(out), np.asarray(ref), atol=1e-2, rtol=1e-2)
    print("KERNEL_OK")
</pallas_src>

<mosaic_0001>
module attributes {stable_mosaic.version = 11 : i64} {
  func.func @conv_relu_pool_kernel(%arg0: i32, %arg1: memref<2x36x196xbf16, #tpu.memory_space<vmem>>, %arg2: memref<16x9xbf16, #tpu.memory_space<vmem>>, %arg3: memref<16x1xf32, #tpu.memory_space<vmem>>, %arg4: memref<2x16x200xbf16, #tpu.memory_space<vmem>>) attributes {dimension_semantics = [#tpu.dimension_semantics<parallel>], iteration_bounds = array<i64: 1>, scalar_prefetch = 0 : i64, scratch_operands = 0 : i64, tpu.core_type = #tpu.core_type<tc>, window_params = [{transform_indices = @transform_0, window_bounds = array<i64: 2, 36, 196>}, {pipeline_mode = #tpu.pipeline_mode<synchronous>, transform_indices = @transform_1, window_bounds = array<i64: 16, 9>}, {pipeline_mode = #tpu.pipeline_mode<synchronous>, transform_indices = @transform_2, window_bounds = array<i64: 16, 1>}, {transform_indices = @transform_3, window_bounds = array<i64: 2, 16, 200>}]} {
    %c0 = arith.constant 0 : index
    %c0_0 = arith.constant 0 : index
    %0 = vector.load %arg2[%c0, %c0_0] : memref<16x9xbf16, #tpu.memory_space<vmem>>, vector<16x9xbf16>
    %c0_1 = arith.constant 0 : index
    %c0_2 = arith.constant 0 : index
    %1 = vector.load %arg3[%c0_1, %c0_2] : memref<16x1xf32, #tpu.memory_space<vmem>>, vector<16x1xf32>
    %cst = arith.constant 0.000000e+00 : bf16
    %2 = vector.broadcast %cst : bf16 to vector<2x16x4xbf16>
    %c0_3 = arith.constant 0 : index
    %c0_4 = arith.constant 0 : index
    %c196 = arith.constant 196 : index
    %3 = vector.load %arg4[%c0_3, %c0_4, %c196] : memref<2x16x200xbf16, #tpu.memory_space<vmem>>, vector<2x16x4xbf16>
    tpu.vector_store %arg4[%c0_3, %c0_4, %c196], %2 {strides = array<i32>} : memref<2x16x200xbf16, #tpu.memory_space<vmem>>, vector<2x16x4xbf16>,
    %c0_i32 = arith.constant 0 : i32
    %4 = arith.index_cast %c0_i32 : i32 to index
    %c0_5 = arith.constant 0 : index
    %c0_6 = arith.constant 0 : index
    %5 = vector.load %arg1[%4, %c0_5, %c0_6] : memref<2x36x196xbf16, #tpu.memory_space<vmem>>, vector<1x9x196xbf16>
    %6 = vector.shape_cast %5 : vector<1x9x196xbf16> to vector<9x196xbf16>
    %cst_7 = arith.constant dense<0.000000e+00> : vector<16x196xf32>
    %7 = tpu.matmul %0, %6, %cst_7 {dimension_numbers = #tpu.dot_dimension_numbers<[1], [0], [0], [1], [0, 0, 1, 1], [], []>} : vector<16x9xbf16>, vector<9x196xbf16>, vector<16x196xf32> -> vector<16x196xf32>
    %8 = vector.broadcast %1 : vector<16x1xf32> to vector<16x196xf32>
    %9 = arith.addf %7, %8 : vector<16x196xf32>
    %cst_8 = arith.constant 0.000000e+00 : f32
    %10 = vector.broadcast %cst_8 : f32 to vector<16x196xf32>
    %11 = arith.maximumf %9, %10 : vector<16x196xf32>
    %12 = arith.index_cast %c0_i32 : i32 to index
    %c9 = arith.constant 9 : index
    %c0_9 = arith.constant 0 : index
    %13 = vector.load %arg1[%12, %c9, %c0_9] : memref<2x36x196xbf16, #tpu.memory_space<vmem>>, vector<1x9x196xbf16>
    %14 = vector.shape_cast %13 : vector<1x9x196xbf16> to vector<9x196xbf16>
    %cst_10 = arith.constant dense<0.000000e+00> : vector<16x196xf32>
    %15 = tpu.matmul %0, %14, %cst_10 {dimension_numbers = #tpu.dot_dimension_numbers<[1], [0], [0], [1], [0, 0, 1, 1], [], []>} : vector<16x9xbf16>, vector<9x196xbf16>, vector<16x196xf32> -> vector<16x196xf32>
    %16 = vector.broadcast %1 : vector<16x1xf32> to vector<16x196xf32>
    %17 = arith.addf %15, %16 : vector<16x196xf32>
    %cst_11 = arith.constant 0.000000e+00 : f32
    %18 = vector.broadcast %cst_11 : f32 to vector<16x196xf32>
    %19 = arith.maximumf %17, %18 : vector<16x196xf32>
    %20 = arith.maximumf %11, %19 : vector<16x196xf32>
    %21 = arith.index_cast %c0_i32 : i32 to index
    %c18 = arith.constant 18 : index
    %c0_12 = arith.constant 0 : index
    %22 = vector.load %arg1[%21, %c18, %c0_12] : memref<2x36x196xbf16, #tpu.memory_space<vmem>>, vector<1x9x196xbf16>
    %23 = vector.shape_cast %22 : vector<1x9x196xbf16> to vector<9x196xbf16>
    %cst_13 = arith.constant dense<0.000000e+00> : vector<16x196xf32>
    %24 = tpu.matmul %0, %23, %cst_13 {dimension_numbers = #tpu.dot_dimension_numbers<[1], [0], [0], [1], [0, 0, 1, 1], [], []>} : vector<16x9xbf16>, vector<9x196xbf16>, vector<16x196xf32> -> vector<16x196xf32>
    %25 = vector.broadcast %1 : vector<16x1xf32> to vector<16x196xf32>
    %26 = arith.addf %24, %25 : vector<16x196xf32>
    %cst_14 = arith.constant 0.000000e+00 : f32
    %27 = vector.broadcast %cst_14 : f32 to vector<16x196xf32>
    %28 = arith.maximumf %26, %27 : vector<16x196xf32>
    %29 = arith.maximumf %20, %28 : vector<16x196xf32>
    %30 = arith.index_cast %c0_i32 : i32 to index
    %c27 = arith.constant 27 : index
    %c0_15 = arith.constant 0 : index
    %31 = vector.load %arg1[%30, %c27, %c0_15] : memref<2x36x196xbf16, #tpu.memory_space<vmem>>, vector<1x9x196xbf16>
    %32 = vector.shape_cast %31 : vector<1x9x196xbf16> to vector<9x196xbf16>
    %cst_16 = arith.constant dense<0.000000e+00> : vector<16x196xf32>
    %33 = tpu.matmul %0, %32, %cst_16 {dimension_numbers = #tpu.dot_dimension_numbers<[1], [0], [0], [1], [0, 0, 1, 1], [], []>} : vector<16x9xbf16>, vector<9x196xbf16>, vector<16x196xf32> -> vector<16x196xf32>
    %34 = vector.broadcast %1 : vector<16x1xf32> to vector<16x196xf32>
    %35 = arith.addf %33, %34 : vector<16x196xf32>
    %cst_17 = arith.constant 0.000000e+00 : f32
    %36 = vector.broadcast %cst_17 : f32 to vector<16x196xf32>
    %37 = arith.maximumf %35, %36 : vector<16x196xf32>
    %38 = arith.maximumf %29, %37 : vector<16x196xf32>
    %39 = arith.truncf %38 : vector<16x196xf32> to vector<16x196xbf16>
    %40 = arith.index_cast %c0_i32 : i32 to index
    %c0_18 = arith.constant 0 : index
    %c0_19 = arith.constant 0 : index
    %41 = vector.load %arg4[%40, %c0_18, %c0_19] : memref<2x16x200xbf16, #tpu.memory_space<vmem>>, vector<1x16x196xbf16>
    %42 = vector.shape_cast %41 : vector<1x16x196xbf16> to vector<16x196xbf16>
    %43 = vector.shape_cast %39 : vector<16x196xbf16> to vector<1x16x196xbf16>
    tpu.vector_store %arg4[%40, %c0_18, %c0_19], %43 {strides = array<i32>} : memref<2x16x200xbf16, #tpu.memory_space<vmem>>, vector<1x16x196xbf16>,
    %c1_i32 = arith.constant 1 : i32
    %44 = arith.index_cast %c1_i32 : i32 to index
    %c0_20 = arith.constant 0 : index
    %c0_21 = arith.constant 0 : index
    %45 = vector.load %arg1[%44, %c0_20, %c0_21] : memref<2x36x196xbf16, #tpu.memory_space<vmem>>, vector<1x9x196xbf16>
    %46 = vector.shape_cast %45 : vector<1x9x196xbf16> to vector<9x196xbf16>
    %cst_22 = arith.constant dense<0.000000e+00> : vector<16x196xf32>
    %47 = tpu.matmul %0, %46, %cst_22 {dimension_numbers = #tpu.dot_dimension_numbers<[1], [0], [0], [1], [0, 0, 1, 1], [], []>} : vector<16x9xbf16>, vector<9x196xbf16>, vector<16x196xf32> -> vector<16x196xf32>
    %48 = vector.broadcast %1 : vector<16x1xf32> to vector<16x196xf32>
    %49 = arith.addf %47, %48 : vector<16x196xf32>
    %cst_23 = arith.constant 0.000000e+00 : f32
    %50 = vector.broadcast %cst_23 : f32 to vector<16x196xf32>
    %51 = arith.maximumf %49, %50 : vector<16x196xf32>
    %52 = arith.index_cast %c1_i32 : i32 to index
    %c9_24 = arith.constant 9 : index
    %c0_25 = arith.constant 0 : index
    %53 = vector.load %arg1[%52, %c9_24, %c0_25] : memref<2x36x196xbf16, #tpu.memory_space<vmem>>, vector<1x9x196xbf16>
    %54 = vector.shape_cast %53 : vector<1x9x196xbf16> to vector<9x196xbf16>
    %cst_26 = arith.constant dense<0.000000e+00> : vector<16x196xf32>
    %55 = tpu.matmul %0, %54, %cst_26 {dimension_numbers = #tpu.dot_dimension_numbers<[1], [0], [0], [1], [0, 0, 1, 1], [], []>} : vector<16x9xbf16>, vector<9x196xbf16>, vector<16x196xf32> -> vector<16x196xf32>
    %56 = vector.broadcast %1 : vector<16x1xf32> to vector<16x196xf32>
    %57 = arith.addf %55, %56 : vector<16x196xf32>
    %cst_27 = arith.constant 0.000000e+00 : f32
    %58 = vector.broadcast %cst_27 : f32 to vector<16x196xf32>
    %59 = arith.maximumf %57, %58 : vector<16x196xf32>
    %60 = arith.maximumf %51, %59 : vector<16x196xf32>
    %61 = arith.index_cast %c1_i32 : i32 to index
    %c18_28 = arith.constant 18 : index
    %c0_29 = arith.constant 0 : index
    %62 = vector.load %arg1[%61, %c18_28, %c0_29] : memref<2x36x196xbf16, #tpu.memory_space<vmem>>, vector<1x9x196xbf16>
    %63 = vector.shape_cast %62 : vector<1x9x196xbf16> to vector<9x196xbf16>
    %cst_30 = arith.constant dense<0.000000e+00> : vector<16x196xf32>
    %64 = tpu.matmul %0, %63, %cst_30 {dimension_numbers = #tpu.dot_dimension_numbers<[1], [0], [0], [1], [0, 0, 1, 1], [], []>} : vector<16x9xbf16>, vector<9x196xbf16>, vector<16x196xf32> -> vector<16x196xf32>
    %65 = vector.broadcast %1 : vector<16x1xf32> to vector<16x196xf32>
    %66 = arith.addf %64, %65 : vector<16x196xf32>
    %cst_31 = arith.constant 0.000000e+00 : f32
    %67 = vector.broadcast %cst_31 : f32 to vector<16x196xf32>
    %68 = arith.maximumf %66, %67 : vector<16x196xf32>
    %69 = arith.maximumf %60, %68 : vector<16x196xf32>
    %70 = arith.index_cast %c1_i32 : i32 to index
    %c27_32 = arith.constant 27 : index
    %c0_33 = arith.constant 0 : index
    %71 = vector.load %arg1[%70, %c27_32, %c0_33] : memref<2x36x196xbf16, #tpu.memory_space<vmem>>, vector<1x9x196xbf16>
    %72 = vector.shape_cast %71 : vector<1x9x196xbf16> to vector<9x196xbf16>
    %cst_34 = arith.constant dense<0.000000e+00> : vector<16x196xf32>
    %73 = tpu.matmul %0, %72, %cst_34 {dimension_numbers = #tpu.dot_dimension_numbers<[1], [0], [0], [1], [0, 0, 1, 1], [], []>} : vector<16x9xbf16>, vector<9x196xbf16>, vector<16x196xf32> -> vector<16x196xf32>
    %74 = vector.broadcast %1 : vector<16x1xf32> to vector<16x196xf32>
    %75 = arith.addf %73, %74 : vector<16x196xf32>
    %cst_35 = arith.constant 0.000000e+00 : f32
    %76 = vector.broadcast %cst_35 : f32 to vector<16x196xf32>
    %77 = arith.maximumf %75, %76 : vector<16x196xf32>
    %78 = arith.maximumf %69, %77 : vector<16x196xf32>
    %79 = arith.truncf %78 : vector<16x196xf32> to vector<16x196xbf16>
    %80 = arith.index_cast %c1_i32 : i32 to index
    %c0_36 = arith.constant 0 : index
    %c0_37 = arith.constant 0 : index
    %81 = vector.load %arg4[%80, %c0_36, %c0_37] : memref<2x16x200xbf16, #tpu.memory_space<vmem>>, vector<1x16x196xbf16>
    %82 = vector.shape_cast %81 : vector<1x16x196xbf16> to vector<16x196xbf16>
    %83 = vector.shape_cast %79 : vector<16x196xbf16> to vector<1x16x196xbf16>
    tpu.vector_store %arg4[%80, %c0_36, %c0_37], %83 {strides = array<i32>} : memref<2x16x200xbf16, #tpu.memory_space<vmem>>, vector<1x16x196xbf16>,
    %c2_i32 = arith.constant 2 : i32
    return
  }
  func.func @transform_0(%arg0: i32) -> (i32, i32, i32) {
    %c0_i32 = arith.constant 0 : i32
    %c0_i32_0 = arith.constant 0 : i32
    %c0_i32_1 = arith.constant 0 : i32
    return %arg0, %c0_i32, %c0_i32_0 : i32, i32, i32
  }
  func.func @transform_1(%arg0: i32) -> (i32, i32) {
    %c0_i32 = arith.constant 0 : i32
    %c0_i32_0 = arith.constant 0 : i32
    %c0_i32_1 = arith.constant 0 : i32
    return %c0_i32, %c0_i32_0 : i32, i32
  }
  func.func @transform_2(%arg0: i32) -> (i32, i32) {
    %c0_i32 = arith.constant 0 : i32
    %c0_i32_0 = arith.constant 0 : i32
    %c0_i32_1 = arith.constant 0 : i32
    return %c0_i32, %c0_i32_0 : i32, i32
  }
  func.func @transform_3(%arg0: i32) -> (i32, i32, i32) {
    %c0_i32 = arith.constant 0 : i32
    %c0_i32_0 = arith.constant 0 : i32
    %c0_i32_1 = arith.constant 0 : i32
    return %arg0, %c0_i32, %c0_i32_0 : i32, i32, i32
  }
}

module attributes {stable_mosaic.version = 11 : i64} {
  func.func @mlp_head_kernel(%arg0: i32, %arg1: i32, %arg2: memref<2x640xbf16, #tpu.memory_space<vmem>>, %arg3: memref<640x1024xbf16, #tpu.memory_space<vmem>>, %arg4: memref<1x1024xf32, #tpu.memory_space<vmem>>, %arg5: memref<1024x256xbf16, #tpu.memory_space<vmem>>, %arg6: memref<1x256xf32, #tpu.memory_space<vmem>>, %arg7: memref<256x10xbf16, #tpu.memory_space<vmem>>, %arg8: memref<1x10xf32, #tpu.memory_space<vmem>>, %arg9: memref<2x10xf32, #tpu.memory_space<vmem>>, %arg10: memref<2x1024xf32, #tpu.memory_space<vmem>>) attributes {dimension_semantics = [#tpu.dimension_semantics<parallel>, #tpu.dimension_semantics<arbitrary>], iteration_bounds = array<i64: 1, 5>, scalar_prefetch = 0 : i64, scratch_operands = 1 : i64, tpu.core_type = #tpu.core_type<tc>, window_params = [{transform_indices = @transform_0, window_bounds = array<i64: 2, 640>}, {transform_indices = @transform_1, window_bounds = array<i64: 640, 1024>}, {pipeline_mode = #tpu.pipeline_mode<synchronous>, transform_indices = @transform_2, window_bounds = array<i64: 1, 1024>}, {pipeline_mode = #tpu.pipeline_mode<synchronous>, transform_indices = @transform_3, window_bounds = array<i64: 1024, 256>}, {pipeline_mode = #tpu.pipeline_mode<synchronous>, transform_indices = @transform_4, window_bounds = array<i64: 1, 256>}, {pipeline_mode = #tpu.pipeline_mode<synchronous>, transform_indices = @transform_5, window_bounds = array<i64: 256, 10>}, {pipeline_mode = #tpu.pipeline_mode<synchronous>, transform_indices = @transform_6, window_bounds = array<i64: 1, 10>}, {transform_indices = @transform_7, window_bounds = array<i64: 2, 10>}]} {
    %c0_i32 = arith.constant 0 : i32
    %0 = arith.cmpi eq, %arg1, %c0_i32 : i32
    %1 = arith.extui %0 : i1 to i32
    %c0_i32_0 = arith.constant 0 : i32
    %2 = arith.cmpi ne, %1, %c0_i32_0 : i32
    scf.if %2 {
      %cst_9 = arith.constant 0.000000e+00 : f32
      %12 = vector.broadcast %cst_9 : f32 to vector<2x1024xf32>
      %c0_10 = arith.constant 0 : index
      %c0_11 = arith.constant 0 : index
      %13 = vector.load %arg10[%c0_10, %c0_11] : memref<2x1024xf32, #tpu.memory_space<vmem>>, vector<2x1024xf32>
      tpu.vector_store %arg10[%c0_10, %c0_11], %12 {strides = array<i32>} : memref<2x1024xf32, #tpu.memory_space<vmem>>, vector<2x1024xf32>,
    } else {
    }
    %c0 = arith.constant 0 : index
    %c0_1 = arith.constant 0 : index
    %3 = vector.load %arg10[%c0, %c0_1] : memref<2x1024xf32, #tpu.memory_space<vmem>>, vector<2x1024xf32>
    %c0_2 = arith.constant 0 : index
    %c0_3 = arith.constant 0 : index
    %4 = vector.load %arg2[%c0_2, %c0_3] : memref<2x640xbf16, #tpu.memory_space<vmem>>, vector<2x640xbf16>
    %c0_4 = arith.constant 0 : index
    %c0_5 = arith.constant 0 : index
    %5 = vector.load %arg3[%c0_4, %c0_5] : memref<640x1024xbf16, #tpu.memory_space<vmem>>, vector<640x1024xbf16>
    %cst = arith.constant dense<0.000000e+00> : vector<2x1024xf32>
    %6 = tpu.matmul %4, %5, %cst {dimension_numbers = #tpu.dot_dimension_numbers<[1], [0], [0], [1], [0, 0, 1, 1], [], []>} : vector<2x640xbf16>, vector<640x1024xbf16>, vector<2x1024xf32> -> vector<2x1024xf32>
    %7 = arith.addf %3, %6 : vector<2x1024xf32>
    %c0_6 = arith.constant 0 : index
    %c0_7 = arith.constant 0 : index
    %8 = vector.load %arg10[%c0_6, %c0_7] : memref<2x1024xf32, #tpu.memory_space<vmem>>, vector<2x1024xf32>
    tpu.vector_store %arg10[%c0_6, %c0_7], %7 {strides = array<i32>} : memref<2x1024xf32, #tpu.memory_space<vmem>>, vector<2x1024xf32>,
    %c4_i32 = arith.constant 4 : i32
    %9 = arith.cmpi eq, %arg1, %c4_i32 : i32
    %10 = arith.extui %9 : i1 to i32
    %c0_i32_8 = arith.constant 0 : i32
    %11 = arith.cmpi ne, %10, %c0_i32_8 : i32
    scf.if %11 {
      %c0_9 = arith.constant 0 : index
      %c0_10 = arith.constant 0 : index
      %12 = vector.load %arg10[%c0_9, %c0_10] : memref<2x1024xf32, #tpu.memory_space<vmem>>, vector<2x1024xf32>
      %c0_11 = arith.constant 0 : index
      %c0_12 = arith.constant 0 : index
      %13 = vector.load %arg4[%c0_11, %c0_12] : memref<1x1024xf32, #tpu.memory_space<vmem>>, vector<1x1024xf32>
      %14 = vector.broadcast %13 : vector<1x1024xf32> to vector<2x1024xf32>
      %15 = arith.addf %12, %14 : vector<2x1024xf32>
      %cst_13 = arith.constant 0.000000e+00 : f32
      %16 = vector.broadcast %cst_13 : f32 to vector<2x1024xf32>
      %17 = arith.subf %16, %15 : vector<2x1024xf32>
      %18 = math.exp %17 : vector<2x1024xf32>
      %cst_14 = arith.constant 1.000000e+00 : f32
      %19 = vector.broadcast %cst_14 : f32 to vector<2x1024xf32>
      %20 = arith.addf %19, %18 : vector<2x1024xf32>
      %21 = tpu.reciprocal %20 {approx = true} : vector<2x1024xf32> -> vector<2x1024xf32>
      %22 = arith.truncf %21 : vector<2x1024xf32> to vector<2x1024xbf16>
      %c0_15 = arith.constant 0 : index
      %c0_16 = arith.constant 0 : index
      %23 = vector.load %arg5[%c0_15, %c0_16] : memref<1024x256xbf16, #tpu.memory_space<vmem>>, vector<1024x256xbf16>
      %cst_17 = arith.constant dense<0.000000e+00> : vector<2x256xf32>
      %24 = tpu.matmul %22, %23, %cst_17 {dimension_numbers = #tpu.dot_dimension_numbers<[1], [0], [0], [1], [0, 0, 1, 1], [], []>} : vector<2x1024xbf16>, vector<1024x256xbf16>, vector<2x256xf32> -> vector<2x256xf32>
      %c0_18 = arith.constant 0 : index
      %c0_19 = arith.constant 0 : index
      %25 = vector.load %arg6[%c0_18, %c0_19] : memref<1x256xf32, #tpu.memory_space<vmem>>, vector<1x256xf32>
      %26 = vector.broadcast %25 : vector<1x256xf32> to vector<2x256xf32>
      %27 = arith.addf %24, %26 : vector<2x256xf32>
      %cst_20 = arith.constant 0.000000e+00 : f32
      %28 = vector.broadcast %cst_20 : f32 to vector<2x256xf32>
      %29 = arith.subf %28, %27 : vector<2x256xf32>
      %30 = math.exp %29 : vector<2x256xf32>
      %cst_21 = arith.constant 1.000000e+00 : f32
      %31 = vector.broadcast %cst_21 : f32 to vector<2x256xf32>
      %32 = arith.addf %31, %30 : vector<2x256xf32>
      %33 = tpu.reciprocal %32 {approx = true} : vector<2x256xf32> -> vector<2x256xf32>
      %34 = arith.truncf %33 : vector<2x256xf32> to vector<2x256xbf16>
      %c0_22 = arith.constant 0 : index
      %c0_23 = arith.constant 0 : index
      %35 = vector.load %arg7[%c0_22, %c0_23] : memref<256x10xbf16, #tpu.memory_space<vmem>>, vector<256x10xbf16>
      %cst_24 = arith.constant dense<0.000000e+00> : vector<2x10xf32>
      %36 = tpu.matmul %34, %35, %cst_24 {dimension_numbers = #tpu.dot_dimension_numbers<[1], [0], [0], [1], [0, 0, 1, 1], [], []>} : vector<2x256xbf16>, vector<256x10xbf16>, vector<2x10xf32> -> vector<2x10xf32>
      %c0_25 = arith.constant 0 : index
      %c0_26 = arith.constant 0 : index
      %37 = vector.load %arg8[%c0_25, %c0_26] : memref<1x10xf32, #tpu.memory_space<vmem>>, vector<1x10xf32>
      %38 = vector.broadcast %37 : vector<1x10xf32> to vector<2x10xf32>
      %39 = arith.addf %36, %38 : vector<2x10xf32>
      %cst_27 = arith.constant 0.000000e+00 : f32
      %40 = vector.broadcast %cst_27 : f32 to vector<2x10xf32>
      %41 = arith.subf %40, %39 : vector<2x10xf32>
      %42 = math.exp %41 : vector<2x10xf32>
      %cst_28 = arith.constant 1.000000e+00 : f32
      %43 = vector.broadcast %cst_28 : f32 to vector<2x10xf32>
      %44 = arith.addf %43, %42 : vector<2x10xf32>
      %45 = tpu.reciprocal %44 {approx = true} : vector<2x10xf32> -> vector<2x10xf32>
      %cst_29 = arith.constant dense<0.000000e+00> : vector<2xf32>
      %46 = vector.multi_reduction <add>, %45, %cst_29 [1] : vector<2x10xf32> to vector<2xf32>
      %47 = vector.shape_cast %46 : vector<2xf32> to vector<2x1xf32>
      %48 = vector.broadcast %47 : vector<2x1xf32> to vector<2x10xf32>
      %49 = arith.divf %45, %48 : vector<2x10xf32>
      %c0_30 = arith.constant 0 : index
      %c0_31 = arith.constant 0 : index
      %50 = vector.load %arg9[%c0_30, %c0_31] : memref<2x10xf32, #tpu.memory_space<vmem>>, vector<2x10xf32>
      tpu.vector_store %arg9[%c0_30, %c0_31], %49 {strides = array<i32>} : memref<2x10xf32, #tpu.memory_space<vmem>>, vector<2x10xf32>,
    } else {
    }
    return
  }
  func.func @transform_0(%arg0: i32, %arg1: i32) -> (i32, i32) {
    %c0_i32 = arith.constant 0 : i32
    return %arg0, %arg1 : i32, i32
  }
  func.func @transform_1(%arg0: i32, %arg1: i32) -> (i32, i32) {
    %c0_i32 = arith.constant 0 : i32
    %c0_i32_0 = arith.constant 0 : i32
    return %arg1, %c0_i32 : i32, i32
  }
  func.func @transform_2(%arg0: i32, %arg1: i32) -> (i32, i32) {
    %c0_i32 = arith.constant 0 : i32
    %c0_i32_0 = arith.constant 0 : i32
    %c0_i32_1 = arith.constant 0 : i32
    return %c0_i32, %c0_i32_0 : i32, i32
  }
  func.func @transform_3(%arg0: i32, %arg1: i32) -> (i32, i32) {
    %c0_i32 = arith.constant 0 : i32
    %c0_i32_0 = arith.constant 0 : i32
    %c0_i32_1 = arith.constant 0 : i32
    return %c0_i32, %c0_i32_0 : i32, i32
  }
  func.func @transform_4(%arg0: i32, %arg1: i32) -> (i32, i32) {
    %c0_i32 = arith.constant 0 : i32
    %c0_i32_0 = arith.constant 0 : i32
    %c0_i32_1 = arith.constant 0 : i32
    return %c0_i32, %c0_i32_0 : i32, i32
  }
  func.func @transform_5(%arg0: i32, %arg1: i32) -> (i32, i32) {
    %c0_i32 = arith.constant 0 : i32
    %c0_i32_0 = arith.constant 0 : i32
    %c0_i32_1 = arith.constant 0 : i32
    return %c0_i32, %c0_i32_0 : i32, i32
  }
  func.func @transform_6(%arg0: i32, %arg1: i32) -> (i32, i32) {
    %c0_i32 = arith.constant 0 : i32
    %c0_i32_0 = arith.constant 0 : i32
    %c0_i32_1 = arith.constant 0 : i32
    return %c0_i32, %c0_i32_0 : i32, i32
  }
  func.func @transform_7(%arg0: i32, %arg1: i32) -> (i32, i32) {
    %c0_i32 = arith.constant 0 : i32
    %c0_i32_0 = arith.constant 0 : i32
    return %arg0, %c0_i32 : i32, i32
  }
}

</mosaic_0001>

<llo_original>
// kernel: cnn2_forward.2
$region0: #{cnn2_forward.2}
  #allocation0 [shape = 'u32[]', space=smem, size = 0x4, offset = 0x4, fixed_abs, tag = 'smem constant byte address 0x4 - core index']
  #allocation1 [shape = 'u32[144,128]{1,0:T(1,128)}', space=vmem, size = 0x12000, scoped, tag = 'internal scratch']
  %s0 = inlined_call_operand.vmem [shape: bf16[2,36,196], index: 0, kind: input, shape index: {}]
  %s1 = inlined_call_operand.hbm [shape: bf16[16,9], index: 1, kind: input, shape index: {}]
  %s2 = inlined_call_operand.vmem [shape: f32[16,1], index: 2, kind: input, shape index: {}]
  %s3 = inlined_call_operand.vmem [shape: bf16[2,16,200], index: 3, kind: output, shape index: {}]
  %s4 = sld [smem:[#allocation0]]
  $region26: #{cnn2_forward.2} parent=0
    _
  %s6 = ssub.s32 1, %s4
  %s7 = scalar_select 0, %s6, %s4
  $region1: #{cnn2_forward.2} parent=0
    #allocation2 [shape = 'u8[4096]{0}', space=vmem, size = 0x1000, scoped, tag = 'input window, operand 1, single buffered']
    #allocation3 [shape = 's32[1]{0}', space=sflag, size = 0x4, scoped, tag = 'scoped memory for cnn2_forward.2']
    %8 = vsyncpa [#allocation3], 0
    // Predicated region
    $region2: #{cnn2_forward.2} parent=1 // pred_check
      _
    $region3: #{cnn2_forward.2} parent=1 // pred_check_branch
      %10 = sbr.rel (0) target = $region5
    $region4: #{cnn2_forward.2} parent=1 // pred_region
      _
    $region5: #{cnn2_forward.2} parent=1 // pred_fallthru
      _
    // Predicated region
    $region6: #{cnn2_forward.2} parent=1 // pred_check
      _
    $region7: #{cnn2_forward.2} parent=1 // pred_check_branch
      %12 = sbr.rel (0) target = $region9
    $region8: #{cnn2_forward.2} parent=1 // pred_region
      %s14 = ssub.s32 128, 128
      %15 = vsyncadd [#allocation3], %s14
      %s16 = sshll.u32 [#allocation2], 4
      %s17 = int_to_ptr.vmem [resolvable:$true] %s16
      %22 = dma.hbm_to_vmem [thread:$0]  %s1, 128, %s17, [#allocation3], 64, 64, 4
    $region9: #{cnn2_forward.2} parent=1 // pred_fallthru
      _
    // Predicated region
    $region10: #{cnn2_forward.2} parent=1 // pred_check
      _
    $region11: #{cnn2_forward.2} parent=1 // pred_check_branch
      %24 = sbr.rel (0) target = $region13
    $region12: #{cnn2_forward.2} parent=1 // pred_region
      _
    $region13: #{cnn2_forward.2} parent=1 // pred_fallthru
      _
    // Predicated region
    $region14: #{cnn2_forward.2} parent=1 // pred_check
      _
    $region15: #{cnn2_forward.2} parent=1 // pred_check_branch
      %26 = sbr.rel (0) target = $region17
    $region16: #{cnn2_forward.2} parent=1 // pred_region
      %27 = dma.done [#allocation3], 128
    $region17: #{cnn2_forward.2} parent=1 // pred_fallthru
      _
    %v29 = vld [vmem:[#allocation2] sm:$0xf]
    %v30 = vld [vmem:[#allocation2 + $0x4] sm:$0xf]
    %v31 = vld [vmem:[%s2] sm:$0xff]
    %v32 = vld [vmem:[%s2 + $0x8] sm:$0xff]
    %vm33 = vcmask 585248
    %34 = vst.msk [vmem:[%s3 + $0x4] sm:$0xf] %vm33, 0
    %35 = vst.msk [vmem:[%s3 + $0xc] sm:$0xf] %vm33, 0
    %36 = vst.msk [vmem:[%s3 + $0x14] sm:$0xf] %vm33, 0
    %37 = vst.msk [vmem:[%s3 + $0x1c] sm:$0xf] %vm33, 0
    %v38 = vld [vmem:[%s0] sm:$0xff]
    %v39 = vld [vmem:[%s0 + $0x8] sm:$0x11]
    %41 = vset.pattern.permute.xlu0 0
    %42 = vperm.xlu0 %41, %v31
    %v43 = vpop.permute.xlu0 %42
    %46 = vset.pattern.permute.xlu0 0
    %47 = vperm.xlu0 %46, %v32
    %v48 = vpop.permute.xlu0 %47
    %v52 = vunpack.c.l.b16 %v29
    %v53 = vunpack.c.l.b16 %v30
    %v54 = vpack.c.b16 %v53, %v52
    %v57 = vunpack.c.l.b16 %v38
    %v58 = vunpack.c.h.b16 %v38
    %v59 = vunpack.c.l.b16 %v39
    %v60 = vunpack.c.h.b16 %v39
    %v61 = vpack.c.b16 %v59, %v57
    %v62 = vpack.c.b16 %v60, %v58
    %vm63 = vcmask 72704
    %v65 = vsel %vm63, %v54, 0
    %vm67 = vcmask 1043456
    %vm68 = vcmask 1044480
    %v69 = vsel %vm67, 4294967295, 65535
    %v70 = vsel %vm68, %v69, 0
    %v72 = vand.u32 %v61, %v70
    %v75 = vand.u32 %v62, %v70
    %77 = vmatprep.subr.bf16.mxu0 %v75
    %78 = vmatpush1.bf16.msra.mxu0 %v72
    %79 = vmatprep.subr.bf16.mxu0 0
    %80 = vmatpush1.bf16.msra.mxu0 0
    %81 = vmatprep.subr.bf16.mxu0 0
    %82 = vmatpush1.bf16.msra.mxu0 0
    %83 = vmatprep.subr.bf16.mxu0 0
    %84 = vmatpush1.bf16.msra.mxu0 0
    %85 = vmatprep.subr.bf16.mxu0 0
    %86 = vmatpush1.bf16.msra.mxu0 0
    %87 = vmatprep.subr.bf16.mxu0 0
    %88 = vmatpush1.bf16.msra.mxu0 0
    %89 = vmatprep.subr.bf16.mxu0 0
    %90 = vmatpush1.bf16.msra.mxu0 0
    %91 = vmatprep.subr.bf16.mxu0 0
    %92 = vmatpush1.bf16.msra.mxu0 0
    %93 = vmatprep.subr.bf16.mxu0 0
    %94 = vmatpush1.bf16.msra.mxu0 0
    %95 = vmatprep.subr.bf16.mxu0 0
    %96 = vmatpush1.bf16.msra.mxu0 0
    %97 = vmatprep.subr.bf16.mxu0 0
    %98 = vmatpush1.bf16.msra.mxu0 0
    %99 = vmatprep.subr.bf16.mxu0 0
    %100 = vmatpush1.bf16.msra.mxu0 0
    %101 = vmatprep.subr.bf16.mxu0 0
    %102 = vmatpush1.bf16.msra.mxu0 0
    %103 = vmatprep.subr.bf16.mxu0 0
    %104 = vmatpush1.bf16.msra.mxu0 0
    %105 = vmatprep.subr.bf16.mxu0 0
    %106 = vmatpush1.bf16.msra.mxu0 0
    %107 = vmatprep.subr.bf16.mxu0 0
    %108 = vmatpush1.bf16.msra.mxu0 0
    %109 = vmatprep.mubr.bf16.mxu0 0
    %110 = vmatmul.mubr.bf16.gmra.mrb[0].mxu0 %v65
    %v111 = vpop.f32.mrb[0].mxu0
    %v112 = vadd.f32 %v43, %v111
    %v113 = vpop.f32.mrb[0].mxu0
    %v114 = vadd.f32 %v43, %v113
    %v115 = vpop.f32.mrb[0].mxu0
    %v116 = vadd.f32 %v48, %v115
    %v117 = vpop.f32.mrb[0].mxu0
    %v118 = vadd.f32 %v48, %v117
    %119 = vdwg.mxu0
    %v120 = vmax.f32 %v112, 0.0
    %v121 = vmax.f32 %v114, 0.0
    %v122 = vmax.f32 %v116, 0.0
    %v123 = vmax.f32 %v118, 0.0
    %v124 = vld [vmem:[%s0 + $0x8] sm:$0xff]
    %v125 = vld [vmem:[%s0 + $0x10] sm:$0x11]
    %v128 = vunpack.c.l.b16 %v124
    %v129 = vunpack.c.h.b16 %v124
    %v130 = vunpack.c.l.b16 %v125
    %v131 = vunpack.c.h.b16 %v125
    %v132 = vpack.c.b16 %v130, %v128
    %v133 = vpack.c.b16 %v131, %v129
    %v135 = vshrl.u32 %v132, 16
    %v137 = vshll.u32 %v132, 16
    %v139 = vrot.slane %v137, 1
    %v140 = vor.u32 %v135, %v139
    %v142 = vshrl.u32 %v133, 16
    %v144 = vshll.u32 %v133, 16
    %v146 = vrot.slane %v144, 1
    %v147 = vor.u32 %v142, %v146
    %v149 = vand.u32 %v140, %v70
    %v152 = vand.u32 %v147, %v70
    %154 = vmatprep.subr.bf16.mxu0 %v152
    %155 = vmatpush1.bf16.msra.mxu0 %v149
    %156 = vmatprep.subr.bf16.mxu0 0
    %157 = vmatpush1.bf16.msra.mxu0 0
    %158 = vmatprep.subr.bf16.mxu0 0
    %159 = vmatpush1.bf16.msra.mxu0 0
    %160 = vmatprep.subr.bf16.mxu0 0
    %161 = vmatpush1.bf16.msra.mxu0 0
    %162 = vmatprep.subr.bf16.mxu0 0
    %163 = vmatpush1.bf16.msra.mxu0 0
    %164 = vmatprep.subr.bf16.mxu0 0
    %165 = vmatpush1.bf16.msra.mxu0 0
    %166 = vmatprep.subr.bf16.mxu0 0
    %167 = vmatpush1.bf16.msra.mxu0 0
    %168 = vmatprep.subr.bf16.mxu0 0
    %169 = vmatpush1.bf16.msra.mxu0 0
    %170 = vmatprep.subr.bf16.mxu0 0
    %171 = vmatpush1.bf16.msra.mxu0 0
    %172 = vmatprep.subr.bf16.mxu0 0
    %173 = vmatpush1.bf16.msra.mxu0 0
    %174 = vmatprep.subr.bf16.mxu0 0
    %175 = vmatpush1.bf16.msra.mxu0 0
    %176 = vmatprep.subr.bf16.mxu0 0
    %177 = vmatpush1.bf16.msra.mxu0 0
    %178 = vmatprep.subr.bf16.mxu0 0
    %179 = vmatpush1.bf16.msra.mxu0 0
    %180 = vmatprep.subr.bf16.mxu0 0
    %181 = vmatpush1.bf16.msra.mxu0 0
    %182 = vmatprep.subr.bf16.mxu0 0
    %183 = vmatpush1.bf16.msra.mxu0 0
    %184 = vmatprep.subr.bf16.mxu0 0
    %185 = vmatpush1.bf16.msra.mxu0 0
    %186 = vmatprep.mubr.bf16.mxu0 0
    %187 = vmatmul.mubr.bf16.gmra.mrb[0].mxu0 %v65
    %v188 = vpop.f32.mrb[0].mxu0
    %v189 = vadd.f32 %v43, %v188
    %v190 = vpop.f32.mrb[0].mxu0
    %v191 = vadd.f32 %v43, %v190
    %v192 = vpop.f32.mrb[0].mxu0
    %v193 = vadd.f32 %v48, %v192
    %v194 = vpop.f32.mrb[0].mxu0
    %v195 = vadd.f32 %v48, %v194
    %196 = vdwg.mxu0
    %v197 = vmax.f32 %v189, 0.0
    %v198 = vmax.f32 %v191, 0.0
    %v199 = vmax.f32 %v193, 0.0
    %v200 = vmax.f32 %v195, 0.0
    %v201 = vmax.f32 %v120, %v197
    %v202 = vmax.f32 %v121, %v198
    %v203 = vmax.f32 %v122, %v199
    %v204 = vmax.f32 %v123, %v200
    %v205 = vld [vmem:[%s0 + $0x10] sm:$0xee]
    %v206 = vld [vmem:[%s0 + $0x18] sm:$0x33]
    %v209 = vunpack.c.l.b16 %v205
    %v210 = vunpack.c.h.b16 %v205
    %v211 = vunpack.c.l.b16 %v206
    %v212 = vunpack.c.h.b16 %v206
    %v213 = vpack.c.b16 %v211, %v209
    %v214 = vpack.c.b16 %v212, %v210
    %v215 = vrot.slane %v213, 1
    %v216 = vrot.slane %v214, 1
    %v218 = vand.u32 %v215, %v70
    %v221 = vand.u32 %v216, %v70
    %223 = vmatprep.subr.bf16.mxu0 %v221
    %224 = vmatpush1.bf16.msra.mxu0 %v218
    %225 = vmatprep.subr.bf16.mxu0 0
    %226 = vmatpush1.bf16.msra.mxu0 0
    %227 = vmatprep.subr.bf16.mxu0 0
    %228 = vmatpush1.bf16.msra.mxu0 0
    %229 = vmatprep.subr.bf16.mxu0 0
    %230 = vmatpush1.bf16.msra.mxu0 0
    %231 = vmatprep.subr.bf16.mxu0 0
    %232 = vmatpush1.bf16.msra.mxu0 0
    %233 = vmatprep.subr.bf16.mxu0 0
    %234 = vmatpush1.bf16.msra.mxu0 0
    %235 = vmatprep.subr.bf16.mxu0 0
    %236 = vmatpush1.bf16.msra.mxu0 0
    %237 = vmatprep.subr.bf16.mxu0 0
    %238 = vmatpush1.bf16.msra.mxu0 0
    %239 = vmatprep.subr.bf16.mxu0 0
    %240 = vmatpush1.bf16.msra.mxu0 0
    %241 = vmatprep.subr.bf16.mxu0 0
    %242 = vmatpush1.bf16.msra.mxu0 0
    %243 = vmatprep.subr.bf16.mxu0 0
    %244 = vmatpush1.bf16.msra.mxu0 0
    %245 = vmatprep.subr.bf16.mxu0 0
    %246 = vmatpush1.bf16.msra.mxu0 0
    %247 = vmatprep.subr.bf16.mxu0 0
    %248 = vmatpush1.bf16.msra.mxu0 0
    %249 = vmatprep.subr.bf16.mxu0 0
    %250 = vmatpush1.bf16.msra.mxu0 0
    %251 = vmatprep.subr.bf16.mxu0 0
    %252 = vmatpush1.bf16.msra.mxu0 0
    %253 = vmatprep.subr.bf16.mxu0 0
    %254 = vmatpush1.bf16.msra.mxu0 0
    %255 = vmatprep.mubr.bf16.mxu0 0
    %256 = vmatmul.mubr.bf16.gmra.mrb[0].mxu0 %v65
    %v257 = vpop.f32.mrb[0].mxu0
    %v258 = vadd.f32 %v43, %v257
    %v259 = vpop.f32.mrb[0].mxu0
    %v260 = vadd.f32 %v43, %v259
    %v261 = vpop.f32.mrb[0].mxu0
    %v262 = vadd.f32 %v48, %v261
    %v263 = vpop.f32.mrb[0].mxu0
    %v264 = vadd.f32 %v48, %v263
    %265 = vdwg.mxu0
    %v266 = vmax.f32 %v258, 0.0
    %v267 = vmax.f32 %v260, 0.0
    %v268 = vmax.f32 %v262, 0.0
    %v269 = vmax.f32 %v264, 0.0
    %v270 = vmax.f32 %v201, %v266
    %v271 = vmax.f32 %v202, %v267
    %v272 = vmax.f32 %v203, %v268
    %v273 = vmax.f32 %v204, %v269
    %v274 = vld [vmem:[%s0 + $0x18] sm:$0xee]
    %v275 = vld [vmem:[%s0 + $0x20] sm:$0x33]
    %v278 = vunpack.c.l.b16 %v274
    %v279 = vunpack.c.h.b16 %v274
    %v280 = vunpack.c.l.b16 %v275
    %v281 = vunpack.c.h.b16 %v275
    %v282 = vpack.c.b16 %v280, %v278
    %v283 = vpack.c.b16 %v281, %v279
    %v285 = vshrl.u32 %v282, 16
    %v287 = vrot.slane %v285, 1
    %v288 = vshll.u32 %v282, 16
    %v290 = vrot.slane %v288, 2
    %v291 = vor.u32 %v287, %v290
    %v293 = vshrl.u32 %v283, 16
    %v295 = vrot.slane %v293, 1
    %v296 = vshll.u32 %v283, 16
    %v298 = vrot.slane %v296, 2
    %v299 = vor.u32 %v295, %v298
    %v301 = vand.u32 %v291, %v70
    %v304 = vand.u32 %v299, %v70
    %306 = vmatprep.subr.bf16.mxu0 %v304
    %307 = vmatpush1.bf16.msra.mxu0 %v301
    %308 = vmatprep.subr.bf16.mxu0 0
    %309 = vmatpush1.bf16.msra.mxu0 0
    %310 = vmatprep.subr.bf16.mxu0 0
    %311 = vmatpush1.bf16.msra.mxu0 0
    %312 = vmatprep.subr.bf16.mxu0 0
    %313 = vmatpush1.bf16.msra.mxu0 0
    %314 = vmatprep.subr.bf16.mxu0 0
    %315 = vmatpush1.bf16.msra.mxu0 0
    %316 = vmatprep.subr.bf16.mxu0 0
    %317 = vmatpush1.bf16.msra.mxu0 0
    %318 = vmatprep.subr.bf16.mxu0 0
    %319 = vmatpush1.bf16.msra.mxu0 0
    %320 = vmatprep.subr.bf16.mxu0 0
    %321 = vmatpush1.bf16.msra.mxu0 0
    %322 = vmatprep.subr.bf16.mxu0 0
    %323 = vmatpush1.bf16.msra.mxu0 0
    %324 = vmatprep.subr.bf16.mxu0 0
    %325 = vmatpush1.bf16.msra.mxu0 0
    %326 = vmatprep.subr.bf16.mxu0 0
    %327 = vmatpush1.bf16.msra.mxu0 0
    %328 = vmatprep.subr.bf16.mxu0 0
    %329 = vmatpush1.bf16.msra.mxu0 0
    %330 = vmatprep.subr.bf16.mxu0 0
    %331 = vmatpush1.bf16.msra.mxu0 0
    %332 = vmatprep.subr.bf16.mxu0 0
    %333 = vmatpush1.bf16.msra.mxu0 0
    %334 = vmatprep.subr.bf16.mxu0 0
    %335 = vmatpush1.bf16.msra.mxu0 0
    %336 = vmatprep.subr.bf16.mxu0 0
    %337 = vmatpush1.bf16.msra.mxu0 0
    %338 = vmatprep.mubr.bf16.mxu0 0
    %339 = vmatmul.mubr.bf16.gmra.mrb[0].mxu0 %v65
    %v340 = vpop.f32.mrb[0].mxu0
    %v341 = vadd.f32 %v43, %v340
    %v342 = vpop.f32.mrb[0].mxu0
    %v343 = vadd.f32 %v43, %v342
    %v344 = vpop.f32.mrb[0].mxu0
    %v345 = vadd.f32 %v48, %v344
    %v346 = vpop.f32.mrb[0].mxu0
    %v347 = vadd.f32 %v48, %v346
    %348 = vdwg.mxu0
    %v349 = vmax.f32 %v341, 0.0
    %v350 = vmax.f32 %v343, 0.0
    %v351 = vmax.f32 %v345, 0.0
    %v352 = vmax.f32 %v347, 0.0
    %v353 = vmax.f32 %v270, %v349
    %v354 = vmax.f32 %v271, %v350
    %v355 = vmax.f32 %v272, %v351
    %v356 = vmax.f32 %v273, %v352
    %v357 = vpack.c.bf16 %v355, %v353
    %v358 = vpack.c.bf16 %v356, %v354
    %v361 = vunpack.c.l.b16 %v357
    %v362 = vunpack.c.l.b16 %v358
    %v363 = vunpack.c.h.b16 %v357
    %v364 = vunpack.c.h.b16 %v358
    %v365 = vpack.c.b16 %v362, %v361
    %v366 = vpack.c.b16 %v364, %v363
    %vm369 = vcmask 556036
    %vm370 = vmor %vm369, %vm67
    %371 = vst.msk [vmem:[%s3] sm:$0xff] %vm370, %v365
    %372 = vst.msk [vmem:[%s3 + $0x8] sm:$0xff] %vm370, %v366
    %s373 = scalar_lea.vmem %s0, 40
    %v374 = vld [vmem:[%s373] sm:$0xff]
    %v375 = vld [vmem:[%s373 + $0x8] sm:$0x11]
    %v378 = vunpack.c.l.b16 %v374
    %v379 = vunpack.c.h.b16 %v374
    %v380 = vunpack.c.l.b16 %v375
    %v381 = vunpack.c.h.b16 %v375
    %v382 = vpack.c.b16 %v380, %v378
    %v383 = vpack.c.b16 %v381, %v379
    %v385 = vand.u32 %v382, %v70
    %v388 = vand.u32 %v383, %v70
    %390 = vmatprep.subr.bf16.mxu0 %v388
    %391 = vmatpush1.bf16.msra.mxu0 %v385
    %392 = vmatprep.subr.bf16.mxu0 0
    %393 = vmatpush1.bf16.msra.mxu0 0
    %394 = vmatprep.subr.bf16.mxu0 0
    %395 = vmatpush1.bf16.msra.mxu0 0
    %396 = vmatprep.subr.bf16.mxu0 0
    %397 = vmatpush1.bf16.msra.mxu0 0
    %398 = vmatprep.subr.bf16.mxu0 0
    %399 = vmatpush1.bf16.msra.mxu0 0
    %400 = vmatprep.subr.bf16.mxu0 0
    %401 = vmatpush1.bf16.msra.mxu0 0
    %402 = vmatprep.subr.bf16.mxu0 0
    %403 = vmatpush1.bf16.msra.mxu0 0
    %404 = vmatprep.subr.bf16.mxu0 0
    %405 = vmatpush1.bf16.msra.mxu0 0
    %406 = vmatprep.subr.bf16.mxu0 0
    %407 = vmatpush1.bf16.msra.mxu0 0
    %408 = vmatprep.subr.bf16.mxu0 0
    %409 = vmatpush1.bf16.msra.mxu0 0
    %410 = vmatprep.subr.bf16.mxu0 0
    %411 = vmatpush1.bf16.msra.mxu0 0
    %412 = vmatprep.subr.bf16.mxu0 0
    %413 = vmatpush1.bf16.msra.mxu0 0
    %414 = vmatprep.subr.bf16.mxu0 0
    %415 = vmatpush1.bf16.msra.mxu0 0
    %416 = vmatprep.subr.bf16.mxu0 0
    %417 = vmatpush1.bf16.msra.mxu0 0
    %418 = vmatprep.subr.bf16.mxu0 0
    %419 = vmatpush1.bf16.msra.mxu0 0
    %420 = vmatprep.subr.bf16.mxu0 0
    %421 = vmatpush1.bf16.msra.mxu0 0
    %422 = vmatprep.mubr.bf16.mxu0 0
    %423 = vmatmul.mubr.bf16.gmra.mrb[0].mxu0 %v65
    %v424 = vpop.f32.mrb[0].mxu0
    %v425 = vadd.f32 %v43, %v424
    %v426 = vpop.f32.mrb[0].mxu0
    %v427 = vadd.f32 %v43, %v426
    %v428 = vpop.f32.mrb[0].mxu0
    %v429 = vadd.f32 %v48, %v428
    %v430 = vpop.f32.mrb[0].mxu0
    %v431 = vadd.f32 %v48, %v430
    %432 = vdwg.mxu0
    %v433 = vmax.f32 %v425, 0.0
    %v434 = vmax.f32 %v427, 0.0
    %v435 = vmax.f32 %v429, 0.0
    %v436 = vmax.f32 %v431, 0.0
    %v437 = vld [vmem:[%s373 + $0x8] sm:$0xff]
    %v438 = vld [vmem:[%s373 + $0x10] sm:$0x11]
    %v441 = vunpack.c.l.b16 %v437
    %v442 = vunpack.c.h.b16 %v437
    %v443 = vunpack.c.l.b16 %v438
    %v444 = vunpack.c.h.b16 %v438
    %v445 = vpack.c.b16 %v443, %v441
    %v446 = vpack.c.b16 %v444, %v442
    %v448 = vshrl.u32 %v445, 16
    %v450 = vshll.u32 %v445, 16
    %v452 = vrot.slane %v450, 1
    %v453 = vor.u32 %v448, %v452
    %v455 = vshrl.u32 %v446, 16
    %v457 = vshll.u32 %v446, 16
    %v459 = vrot.slane %v457, 1
    %v460 = vor.u32 %v455, %v459
    %v462 = vand.u32 %v453, %v70
    %v465 = vand.u32 %v460, %v70
    %467 = vmatprep.subr.bf16.mxu0 %v465
    %468 = vmatpush1.bf16.msra.mxu0 %v462
    %469 = vmatprep.subr.bf16.mxu0 0
    %470 = vmatpush1.bf16.msra.mxu0 0
    %471 = vmatprep.subr.bf16.mxu0 0
    %472 = vmatpush1.bf16.msra.mxu0 0
    %473 = vmatprep.subr.bf16.mxu0 0
    %474 = vmatpush1.bf16.msra.mxu0 0
    %475 = vmatprep.subr.bf16.mxu0 0
    %476 = vmatpush1.bf16.msra.mxu0 0
    %477 = vmatprep.subr.bf16.mxu0 0
    %478 = vmatpush1.bf16.msra.mxu0 0
    %479 = vmatprep.subr.bf16.mxu0 0
    %480 = vmatpush1.bf16.msra.mxu0 0
    %481 = vmatprep.subr.bf16.mxu0 0
    %482 = vmatpush1.bf16.msra.mxu0 0
    %483 = vmatprep.subr.bf16.mxu0 0
    %484 = vmatpush1.bf16.msra.mxu0 0
    %485 = vmatprep.subr.bf16.mxu0 0
    %486 = vmatpush1.bf16.msra.mxu0 0
    %487 = vmatprep.subr.bf16.mxu0 0
    %488 = vmatpush1.bf16.msra.mxu0 0
    %489 = vmatprep.subr.bf16.mxu0 0
    %490 = vmatpush1.bf16.msra.mxu0 0
    %491 = vmatprep.subr.bf16.mxu0 0
    %492 = vmatpush1.bf16.msra.mxu0 0
    %493 = vmatprep.subr.bf16.mxu0 0
    %494 = vmatpush1.bf16.msra.mxu0 0
    %495 = vmatprep.subr.bf16.mxu0 0
    %496 = vmatpush1.bf16.msra.mxu0 0
    %497 = vmatprep.subr.bf16.mxu0 0
    %498 = vmatpush1.bf16.msra.mxu0 0
    %499 = vmatprep.mubr.bf16.mxu0 0
    %500 = vmatmul.mubr.bf16.gmra.mrb[0].mxu0 %v65
    %v501 = vpop.f32.mrb[0].mxu0
    %v502 = vadd.f32 %v43, %v501
    %v503 = vpop.f32.mrb[0].mxu0
    %v504 = vadd.f32 %v43, %v503
    %v505 = vpop.f32.mrb[0].mxu0
    %v506 = vadd.f32 %v48, %v505
    %v507 = vpop.f32.mrb[0].mxu0
    %v508 = vadd.f32 %v48, %v507
    %509 = vdwg.mxu0
    %v510 = vmax.f32 %v502, 0.0
    %v511 = vmax.f32 %v504, 0.0
    %v512 = vmax.f32 %v506, 0.0
    %v513 = vmax.f32 %v508, 0.0
    %v514 = vmax.f32 %v433, %v510
    %v515 = vmax.f32 %v434, %v511
    %v516 = vmax.f32 %v435, %v512
    %v517 = vmax.f32 %v436, %v513
    %v518 = vld [vmem:[%s373 + $0x10] sm:$0xee]
    %v519 = vld [vmem:[%s373 + $0x18] sm:$0x33]
    %v522 = vunpack.c.l.b16 %v518
    %v523 = vunpack.c.h.b16 %v518
    %v524 = vunpack.c.l.b16 %v519
    %v525 = vunpack.c.h.b16 %v519
    %v526 = vpack.c.b16 %v524, %v522
    %v527 = vpack.c.b16 %v525, %v523
    %v528 = vrot.slane %v526, 1
    %v529 = vrot.slane %v527, 1
    %v531 = vand.u32 %v528, %v70
    %v534 = vand.u32 %v529, %v70
    %536 = vmatprep.subr.bf16.mxu0 %v534
    %537 = vmatpush1.bf16.msra.mxu0 %v531
    %538 = vmatprep.subr.bf16.mxu0 0
    %539 = vmatpush1.bf16.msra.mxu0 0
    %540 = vmatprep.subr.bf16.mxu0 0
    %541 = vmatpush1.bf16.msra.mxu0 0
    %542 = vmatprep.subr.bf16.mxu0 0
    %543 = vmatpush1.bf16.msra.mxu0 0
    %544 = vmatprep.subr.bf16.mxu0 0
    %545 = vmatpush1.bf16.msra.mxu0 0
    %546 = vmatprep.subr.bf16.mxu0 0
    %547 = vmatpush1.bf16.msra.mxu0 0
    %548 = vmatprep.subr.bf16.mxu0 0
    %549 = vmatpush1.bf16.msra.mxu0 0
    %550 = vmatprep.subr.bf16.mxu0 0
    %551 = vmatpush1.bf16.msra.mxu0 0
    %552 = vmatprep.subr.bf16.mxu0 0
    %553 = vmatpush1.bf16.msra.mxu0 0
    %554 = vmatprep.subr.bf16.mxu0 0
    %555 = vmatpush1.bf16.msra.mxu0 0
    %556 = vmatprep.subr.bf16.mxu0 0
    %557 = vmatpush1.bf16.msra.mxu0 0
    %558 = vmatprep.subr.bf16.mxu0 0
    %559 = vmatpush1.bf16.msra.mxu0 0
    %560 = vmatprep.subr.bf16.mxu0 0
    %561 = vmatpush1.bf16.msra.mxu0 0
    %562 = vmatprep.subr.bf16.mxu0 0
    %563 = vmatpush1.bf16.msra.mxu0 0
    %564 = vmatprep.subr.bf16.mxu0 0
    %565 = vmatpush1.bf16.msra.mxu0 0
    %566 = vmatprep.subr.bf16.mxu0 0
    %567 = vmatpush1.bf16.msra.mxu0 0
    %568 = vmatprep.mubr.bf16.mxu0 0
    %569 = vmatmul.mubr.bf16.gmra.mrb[0].mxu0 %v65
    %v570 = vpop.f32.mrb[0].mxu0
    %v571 = vadd.f32 %v43, %v570
    %v572 = vpop.f32.mrb[0].mxu0
    %v573 = vadd.f32 %v43, %v572
    %v574 = vpop.f32.mrb[0].mxu0
    %v575 = vadd.f32 %v48, %v574
    %v576 = vpop.f32.mrb[0].mxu0
    %v577 = vadd.f32 %v48, %v576
    %578 = vdwg.mxu0
    %v579 = vmax.f32 %v571, 0.0
    %v580 = vmax.f32 %v573, 0.0
    %v581 = vmax.f32 %v575, 0.0
    %v582 = vmax.f32 %v577, 0.0
    %v583 = vmax.f32 %v514, %v579
    %v584 = vmax.f32 %v515, %v580
    %v585 = vmax.f32 %v516, %v581
    %v586 = vmax.f32 %v517, %v582
    %v587 = vld [vmem:[%s373 + $0x18] sm:$0xee]
    %v588 = vld [vmem:[%s373 + $0x20] sm:$0x33]
    %v591 = vunpack.c.l.b16 %v587
    %v592 = vunpack.c.h.b16 %v587
    %v593 = vunpack.c.l.b16 %v588
    %v594 = vunpack.c.h.b16 %v588
    %v595 = vpack.c.b16 %v593, %v591
    %v596 = vpack.c.b16 %v594, %v592
    %v598 = vshrl.u32 %v595, 16
    %v600 = vrot.slane %v598, 1
    %v601 = vshll.u32 %v595, 16
    %v603 = vrot.slane %v601, 2
    %v604 = vor.u32 %v600, %v603
    %v606 = vshrl.u32 %v596, 16
    %v608 = vrot.slane %v606, 1
    %v609 = vshll.u32 %v596, 16
    %v611 = vrot.slane %v609, 2
    %v612 = vor.u32 %v608, %v611
    %v614 = vand.u32 %v604, %v70
    %v617 = vand.u32 %v612, %v70
    %619 = vmatprep.subr.bf16.mxu0 %v617
    %620 = vmatpush1.bf16.msra.mxu0 %v614
    %621 = vmatprep.subr.bf16.mxu0 0
    %622 = vmatpush1.bf16.msra.mxu0 0
    %623 = vmatprep.subr.bf16.mxu0 0
    %624 = vmatpush1.bf16.msra.mxu0 0
    %625 = vmatprep.subr.bf16.mxu0 0
    %626 = vmatpush1.bf16.msra.mxu0 0
    %627 = vmatprep.subr.bf16.mxu0 0
    %628 = vmatpush1.bf16.msra.mxu0 0
    %629 = vmatprep.subr.bf16.mxu0 0
    %630 = vmatpush1.bf16.msra.mxu0 0
    %631 = vmatprep.subr.bf16.mxu0 0
    %632 = vmatpush1.bf16.msra.mxu0 0
    %633 = vmatprep.subr.bf16.mxu0 0
    %634 = vmatpush1.bf16.msra.mxu0 0
    %635 = vmatprep.subr.bf16.mxu0 0
    %636 = vmatpush1.bf16.msra.mxu0 0
    %637 = vmatprep.subr.bf16.mxu0 0
    %638 = vmatpush1.bf16.msra.mxu0 0
    %639 = vmatprep.subr.bf16.mxu0 0
    %640 = vmatpush1.bf16.msra.mxu0 0
    %641 = vmatprep.subr.bf16.mxu0 0
    %642 = vmatpush1.bf16.msra.mxu0 0
    %643 = vmatprep.subr.bf16.mxu0 0
    %644 = vmatpush1.bf16.msra.mxu0 0
    %645 = vmatprep.subr.bf16.mxu0 0
    %646 = vmatpush1.bf16.msra.mxu0 0
    %647 = vmatprep.subr.bf16.mxu0 0
    %648 = vmatpush1.bf16.msra.mxu0 0
    %649 = vmatprep.subr.bf16.mxu0 0
    %650 = vmatpush1.bf16.msra.mxu0 0
    %651 = vmatprep.mubr.bf16.mxu0 0
    %652 = vmatmul.mubr.bf16.gmra.mrb[0].mxu0 %v65
    %v653 = vpop.f32.mrb[0].mxu0
    %v654 = vadd.f32 %v43, %v653
    %v655 = vpop.f32.mrb[0].mxu0
    %v656 = vadd.f32 %v43, %v655
    %v657 = vpop.f32.mrb[0].mxu0
    %v658 = vadd.f32 %v48, %v657
    %v659 = vpop.f32.mrb[0].mxu0
    %v660 = vadd.f32 %v48, %v659
    %661 = vdwg.mxu0
    %v662 = vmax.f32 %v654, 0.0
    %v663 = vmax.f32 %v656, 0.0
    %v664 = vmax.f32 %v658, 0.0
    %v665 = vmax.f32 %v660, 0.0
    %v666 = vmax.f32 %v583, %v662
    %v667 = vmax.f32 %v584, %v663
    %v668 = vmax.f32 %v585, %v664
    %v669 = vmax.f32 %v586, %v665
    %v670 = vpack.c.bf16 %v668, %v666
    %v671 = vpack.c.bf16 %v669, %v667
    %v674 = vunpack.c.l.b16 %v670
    %v675 = vunpack.c.l.b16 %v671
    %v676 = vunpack.c.h.b16 %v670
    %v677 = vunpack.c.h.b16 %v671
    %v678 = vpack.c.b16 %v675, %v674
    %v679 = vpack.c.b16 %v677, %v676
    %s682 = scalar_lea.vmem %s3, 16
    %683 = vst.msk [vmem:[%s682] sm:$0xff] %vm370, %v678
    %684 = vst.msk [vmem:[%s682 + $0x8] sm:$0xff] %vm370, %v679
    // Predicated region
    $region18: #{cnn2_forward.2} parent=1 // pred_check
      _
    $region19: #{cnn2_forward.2} parent=1 // pred_check_branch
      %686 = sbr.rel (0) target = $region21
    $region20: #{cnn2_forward.2} parent=1 // pred_region
      _
    $region21: #{cnn2_forward.2} parent=1 // pred_fallthru
      _
    // Predicated region
    $region22: #{cnn2_forward.2} parent=1 // pred_check
      _
    $region23: #{cnn2_forward.2} parent=1 // pred_check_branch
      %688 = sbr.rel (0) target = $region25
    $region24: #{cnn2_forward.2} parent=1 // pred_region
      _
    $region25: #{cnn2_forward.2} parent=1 // pred_fallthru
      _
    %689 = vsyncpa [#allocation3], 1

// kernel: cnn2_forward.3
$region0: #{cnn2_forward.3}
  #allocation0 [shape = 'u32[]', space=smem, size = 0x4, offset = 0x4, fixed_abs, tag = 'smem constant byte address 0x4 - core index']
  #allocation1 [shape = 'u32[144,128]{1,0:T(1,128)}', space=vmem, size = 0x12000, scoped, tag = 'internal scratch']
  #allocation2 [shape = 'f32[2,1024]{1,0:T(2,128)}', space=vmem, size = 0x2000, scoped, tag = 'scratch operand']
  %s0 = inlined_call_operand.vmem [shape: bf16[2,3200], index: 0, kind: input, shape index: {}]
  %s1 = inlined_call_operand.hbm [shape: bf16[3200,1024], index: 1, kind: input, shape index: {}]
  %s2 = inlined_call_operand.hbm [shape: f32[1,1024], index: 2, kind: input, shape index: {}]
  %s3 = inlined_call_operand.hbm [shape: bf16[1024,256], index: 3, kind: input, shape index: {}]
  %s4 = inlined_call_operand.hbm [shape: f32[1,256], index: 4, kind: input, shape index: {}]
  %s5 = inlined_call_operand.vmem [shape: bf16[256,10], index: 5, kind: input, shape index: {}]
  %s6 = inlined_call_operand.hbm [shape: f32[1,10], index: 6, kind: input, shape index: {}]
  %s7 = inlined_call_operand.hbm [shape: f32[2,10], index: 7, kind: output, shape index: {}]
  %s8 = sld [smem:[#allocation0]]
  $region89: #{cnn2_forward.3} parent=0
    _
  %s10 = ssub.s32 1, %s8
  %s11 = scalar_select 0, %s10, %s8
  $region1: #{cnn2_forward.3} parent=0
    #allocation3 [shape = 'u8[2621440]{0}', space=vmem, size = 0x280000, scoped, tag = 'input window, operand 1']
    #allocation4 [shape = 's32[2]{0}', space=sflag, size = 0x8, scoped, tag = 'scoped memory for cnn2_forward.3']
    #allocation5 [shape = 's32[2]{0}', space=sflag, size = 0x8, scoped, tag = 'scoped memory for cnn2_forward.3']
    #allocation6 [shape = 'u8[4096]{0}', space=vmem, size = 0x1000, scoped, tag = 'input window, operand 2, single buffered']
    #allocation7 [shape = 's32[1]{0}', space=sflag, size = 0x4, scoped, tag = 'scoped memory for cnn2_forward.3']
    #allocation8 [shape = 'u8[524288]{0}', space=vmem, size = 0x80000, scoped, tag = 'input window, operand 3, single buffered']
    #allocation9 [shape = 'u8[1024]{0}', space=vmem, size = 0x400, scoped, tag = 'input window, operand 4, single buffered']
    #allocation10 [shape = 's32[1]{0}', space=sflag, size = 0x4, scoped, tag = 'scoped memory for cnn2_forward.3']
    #allocation11 [shape = 'u8[512]{0}', space=vmem, size = 0x400, scoped, tag = 'input window, operand 6, single buffered']
    #allocation12 [shape = 'u8[1024]{0}', space=vmem, size = 0x400, scoped, tag = 'output window, operand 0, single buffered']
    %12 = vsyncpa [#allocation4], 0
    %s13 = scalar_lea.sflag [#allocation4], 1
    %14 = vsyncpa %s13, 0
    %15 = vsyncpa [#allocation7], 0
    %16 = vsyncpa [#allocation10], 0
    %17 = vsyncpa [#allocation5], 0
    loop: start=0, step=1, limit=7
    $region2: #{cnn2_forward.3} parent=1 // loop_pre_header
      _
    $region3: #{cnn2_forward.3} parent=1 // loop_header
      %s19 = sphi 0, %s23
      %p20 = scmp.ge.s32.totalorder %s19, 7
      %s26 = sphi 0, %s38
      %s27 = sphi 0, %s34
      %s28 = sphi 0, %s26
      %s29 = sphi 0, %s27
      %s30 = sphi 0, %s28
      %s31 = sphi 0, %s29
      %s43 = sphi 0, %s45
      %s46 = sphi 0, %s43
      %s47 = sphi 0, %s46
      %s63 = sphi 0, %s47
      %s69 = sphi 0, %s71
      %s72 = sphi 0, %s69
      %s73 = sphi 0, %s72
      %s89 = sphi 0, %s73
      %s93 = sphi 0, %s93
      %s95 = sphi 0, %s93
      %s96 = sphi 0, %s95
      %s110 = sphi 0, %s96
      %s114 = sphi 0, %s114
      %s116 = sphi 0, %s114
      %s117 = sphi 0, %s116
      %s131 = sphi 0, %s117
      %s135 = sphi 0, %s135
      %s137 = sphi 0, %s135
      %s138 = sphi 0, %s137
      %s152 = sphi 0, %s138
      %s156 = sphi 0, %s156
      %s158 = sphi 0, %s156
      %s159 = sphi 0, %s158
      %s173 = sphi 0, %s159
      %s177 = sphi 0, %s177
      %s179 = sphi 0, %s177
      %s180 = sphi 0, %s179
      %s194 = sphi 0, %s180
      %s200 = sphi 0, %s202
      %s203 = sphi 0, %s200
      %s204 = sphi 0, %s203
      %s220 = sphi 0, %s204
    $region4: #{cnn2_forward.3} parent=1 // loop_header_branch
      %22 = sbr.rel (%p20) target = $region8
    $region5: #{cnn2_forward.3} parent=1 // loop_body
      %s24 = ssub.s32 %s19, 1
      %s25 = ssub.s32 %s19, 2
      %s32 = sadd.s32 1, %s27
      %p33 = scmp.ge.s32.totalorder %s32, 5
      %s34 = scalar_select %p33, 0, %s32
      %s35 = sadd.s32 1, %s26
      %s36 = scalar_select %p33, %s35, %s26
      %p37 = scmp.ge.s32.totalorder %s36, 1
      %s38 = scalar_select %p37, 0, %s36
      %s39 = ssub.s32 %s26, %s38
      %s40 = ssub.s32 %s27, %s34
      %s41 = sor.u32 %s39, %s40
      %p42 = scmp.eq.s32.totalorder %s41, 0
      %s44 = sadd.s32 %s43, 1
      %s45 = scalar_select %p42, %s43, %s44
      %p48 = pneg %p42
      %p49 = scmp.eq.s32.totalorder %s19, 4
      %p50 = por %p48, %p49
      %p51 = scmp.ne.s32.totalorder %s43, %s46
      %p52 = scmp.eq.s32.totalorder %s19, 0
      %p53 = por %p51, %p52
      %p54 = scmp.ne.s32.totalorder %s43, %s46
      %p55 = scmp.eq.s32.totalorder %s24, 4
      %p56 = por %p54, %p55
      %p57 = scmp.ne.s32.totalorder %s46, %s47
      %p58 = scmp.eq.s32.totalorder %s24, 0
      %p59 = por %p57, %p58
      %p60 = scmp.ne.s32.totalorder %s46, %s47
      %p61 = scmp.eq.s32.totalorder %s25, 4
      %p62 = por %p60, %p61
      %p64 = scmp.ne.s32.totalorder %s47, %s63
      %p65 = scmp.eq.s32.totalorder %s25, 0
      %p66 = por %p64, %p65
      %s67 = ssub.s32 %s27, %s34
      %p68 = scmp.eq.s32.totalorder %s67, 0
      %s70 = sadd.s32 %s69, 1
      %s71 = scalar_select %p68, %s69, %s70
      %p74 = pneg %p68
      %p75 = scmp.eq.s32.totalorder %s19, 4
      %p76 = por %p74, %p75
      %p77 = scmp.ne.s32.totalorder %s69, %s72
      %p78 = scmp.eq.s32.totalorder %s19, 0
      %p79 = por %p77, %p78
      %p80 = scmp.ne.s32.totalorder %s69, %s72
      %p81 = scmp.eq.s32.totalorder %s24, 4
      %p82 = por %p80, %p81
      %p83 = scmp.ne.s32.totalorder %s72, %s73
      %p84 = scmp.eq.s32.totalorder %s24, 0
      %p85 = por %p83, %p84
      %p86 = scmp.ne.s32.totalorder %s72, %s73
      %p87 = scmp.eq.s32.totalorder %s25, 4
      %p88 = por %p86, %p87
      %p90 = scmp.ne.s32.totalorder %s73, %s89
      %p91 = scmp.eq.s32.totalorder %s25, 0
      %p92 = por %p90, %p91
      %s94 = sadd.s32 %s93, 1
      %p97 = scmp.eq.s32.totalorder %s19, 4
      %p98 = scmp.ne.s32.totalorder %s93, %s95
      %p99 = scmp.eq.s32.totalorder %s19, 0
      %p100 = por %p98, %p99
      %p101 = scmp.ne.s32.totalorder %s93, %s95
      %p102 = scmp.eq.s32.totalorder %s24, 4
      %p103 = por %p101, %p102
      %p104 = scmp.ne.s32.totalorder %s95, %s96
      %p105 = scmp.eq.s32.totalorder %s24, 0
      %p106 = por %p104, %p105
      %p107 = scmp.ne.s32.totalorder %s95, %s96
      %p108 = scmp.eq.s32.totalorder %s25, 4
      %p109 = por %p107, %p108
      %p111 = scmp.ne.s32.totalorder %s96, %s110
      %p112 = scmp.eq.s32.totalorder %s25, 0
      %p113 = por %p111, %p112
      %s115 = sadd.s32 %s114, 1
      %p118 = scmp.eq.s32.totalorder %s19, 4
      %p119 = scmp.ne.s32.totalorder %s114, %s116
      %p120 = scmp.eq.s32.totalorder %s19, 0
      %p121 = por %p119, %p120
      %p122 = scmp.ne.s32.totalorder %s114, %s116
      %p123 = scmp.eq.s32.totalorder %s24, 4
      %p124 = por %p122, %p123
      %p125 = scmp.ne.s32.totalorder %s116, %s117
      %p126 = scmp.eq.s32.totalorder %s24, 0
      %p127 = por %p125, %p126
      %p128 = scmp.ne.s32.totalorder %s116, %s117
      %p129 = scmp.eq.s32.totalorder %s25, 4
      %p130 = por %p128, %p129
      %p132 = scmp.ne.s32.totalorder %s117, %s131
      %p133 = scmp.eq.s32.totalorder %s25, 0
      %p134 = por %p132, %p133
      %s136 = sadd.s32 %s135, 1
      %p139 = scmp.eq.s32.totalorder %s19, 4
      %p140 = scmp.ne.s32.totalorder %s135, %s137
      %p141 = scmp.eq.s32.totalorder %s19, 0
      %p142 = por %p140, %p141
      %p143 = scmp.ne.s32.totalorder %s135, %s137
      %p144 = scmp.eq.s32.totalorder %s24, 4
      %p145 = por %p143, %p144
      %p146 = scmp.ne.s32.totalorder %s137, %s138
      %p147 = scmp.eq.s32.totalorder %s24, 0
      %p148 = por %p146, %p147
      %p149 = scmp.ne.s32.totalorder %s137, %s138
      %p150 = scmp.eq.s32.totalorder %s25, 4
      %p151 = por %p149, %p150
      %p153 = scmp.ne.s32.totalorder %s138, %s152
      %p154 = scmp.eq.s32.totalorder %s25, 0
      %p155 = por %p153, %p154
      %s157 = sadd.s32 %s156, 1
      %p160 = scmp.eq.s32.totalorder %s19, 4
      %p161 = scmp.ne.s32.totalorder %s156, %s158
      %p162 = scmp.eq.s32.totalorder %s19, 0
      %p163 = por %p161, %p162
      %p164 = scmp.ne.s32.totalorder %s156, %s158
      %p165 = scmp.eq.s32.totalorder %s24, 4
      %p166 = por %p164, %p165
      %p167 = scmp.ne.s32.totalorder %s158, %s159
      %p168 = scmp.eq.s32.totalorder %s24, 0
      %p169 = por %p167, %p168
      %p170 = scmp.ne.s32.totalorder %s158, %s159
      %p171 = scmp.eq.s32.totalorder %s25, 4
      %p172 = por %p170, %p171
      %p174 = scmp.ne.s32.totalorder %s159, %s173
      %p175 = scmp.eq.s32.totalorder %s25, 0
      %p176 = por %p174, %p175
      %s178 = sadd.s32 %s177, 1
      %p181 = scmp.eq.s32.totalorder %s19, 4
      %p182 = scmp.ne.s32.totalorder %s177, %s179
      %p183 = scmp.eq.s32.totalorder %s19, 0
      %p184 = por %p182, %p183
      %p185 = scmp.ne.s32.totalorder %s177, %s179
      %p186 = scmp.eq.s32.totalorder %s24, 4
      %p187 = por %p185, %p186
      %p188 = scmp.ne.s32.totalorder %s179, %s180
      %p189 = scmp.eq.s32.totalorder %s24, 0
      %p190 = por %p188, %p189
      %p191 = scmp.ne.s32.totalorder %s179, %s180
      %p192 = scmp.eq.s32.totalorder %s25, 4
      %p193 = por %p191, %p192
      %p195 = scmp.ne.s32.totalorder %s180, %s194
      %p196 = scmp.eq.s32.totalorder %s25, 0
      %p197 = por %p195, %p196
      %s198 = ssub.s32 %s26, %s38
      %p199 = scmp.eq.s32.totalorder %s198, 0
      %s201 = sadd.s32 %s200, 1
      %s202 = scalar_select %p199, %s200, %s201
      %p205 = pneg %p199
      %p206 = scmp.eq.s32.totalorder %s19, 4
      %p207 = por %p205, %p206
      %p208 = scmp.ne.s32.totalorder %s200, %s203
      %p209 = scmp.eq.s32.totalorder %s19, 0
      %p210 = por %p208, %p209
      %p211 = scmp.ne.s32.totalorder %s200, %s203
      %p212 = scmp.eq.s32.totalorder %s24, 4
      %p213 = por %p211, %p212
      %p214 = scmp.ne.s32.totalorder %s203, %s204
      %p215 = scmp.eq.s32.totalorder %s24, 0
      %p216 = por %p214, %p215
      %p217 = scmp.ne.s32.totalorder %s203, %s204
      %p218 = scmp.eq.s32.totalorder %s25, 4
      %p219 = por %p217, %p218
      %p221 = scmp.ne.s32.totalorder %s204, %s220
      %p222 = scmp.eq.s32.totalorder %s25, 0
      %p223 = por %p221, %p222
      %p224 = scmp.le.s32.totalorder 1, %s19
      %p225 = scmp.lt.s32.totalorder %s19, 6
      %p226 = pnand %p224, %p225
      %p227 = pneg %p226
      // Predicated region
      $region9: #{cnn2_forward.3} parent=5 // pred_check
        _
      $region10: #{cnn2_forward.3} parent=5 // pred_check_branch
        %229 = sbr.rel (%p226) target = $region12
      $region11: #{cnn2_forward.3} parent=5 // pred_region
        %s230 = ssub.s32 %s19, 1
        // Predicated region
        $region13: #{cnn2_forward.3} parent=11 // pred_check
          %p231 = pneg %p106
        $region14: #{cnn2_forward.3} parent=11 // pred_check_branch
          %233 = sbr.rel (%p231) target = $region16
        $region15: #{cnn2_forward.3} parent=11 // pred_region
          %s235 = ssub.s32 128, 128
          %236 = vsyncadd [#allocation7], %s235
          %s238 = sshll.u32 [#allocation6], 4
          %s239 = int_to_ptr.vmem [resolvable:$true] %s238
          %241 = dma.hbm_to_vmem [thread:$0]  %s2, 128, %s239, [#allocation7]
        $region16: #{cnn2_forward.3} parent=11 // pred_fallthru
          _
        // Predicated region
        $region17: #{cnn2_forward.3} parent=11 // pred_check
          %p242 = pneg %p127
        $region18: #{cnn2_forward.3} parent=11 // pred_check_branch
          %244 = sbr.rel (%p242) target = $region20
        $region19: #{cnn2_forward.3} parent=11 // pred_region
          %s246 = ssub.s32 16384, 16384
          %247 = vsyncadd [#allocation7], %s246
          %s248 = sshll.u32 [#allocation8], 4
          %s249 = int_to_ptr.vmem [resolvable:$true] %s248
          %254 = dma.hbm_to_vmem [thread:$0]  %s3, 16384, %s249, [#allocation7], 128, 128, 8
        $region20: #{cnn2_forward.3} parent=11 // pred_fallthru
          _
        // Predicated region
        $region21: #{cnn2_forward.3} parent=11 // pred_check
          %p255 = pneg %p148
        $region22: #{cnn2_forward.3} parent=11 // pred_check_branch
          %257 = sbr.rel (%p255) target = $region24
        $region23: #{cnn2_forward.3} parent=11 // pred_region
          %s259 = ssub.s32 32, 32
          %260 = vsyncadd [#allocation10], %s259
          %s262 = sshll.u32 [#allocation9], 4
          %s263 = int_to_ptr.vmem [resolvable:$true] %s262
          %265 = dma.hbm_to_vmem [thread:$0]  %s4, 32, %s263, [#allocation10]
        $region24: #{cnn2_forward.3} parent=11 // pred_fallthru
          _
        // Predicated region
        $region25: #{cnn2_forward.3} parent=11 // pred_check
          %p266 = pneg %p169
        $region26: #{cnn2_forward.3} parent=11 // pred_check_branch
          %268 = sbr.rel (%p266) target = $region28
        $region27: #{cnn2_forward.3} parent=11 // pred_region
          _
        $region28: #{cnn2_forward.3} parent=11 // pred_fallthru
          _
        // Predicated region
        $region29: #{cnn2_forward.3} parent=11 // pred_check
          %p269 = pneg %p190
        $region30: #{cnn2_forward.3} parent=11 // pred_check_branch
          %271 = sbr.rel (%p269) target = $region32
        $region31: #{cnn2_forward.3} parent=11 // pred_region
          %s273 = ssub.s32 16, 16
          %274 = vsyncadd [#allocation10], %s273
          %s276 = sshll.u32 [#allocation11], 4
          %s277 = int_to_ptr.vmem [resolvable:$true] %s276
          %279 = dma.hbm_to_vmem [thread:$0]  %s6, 16, %s277, [#allocation10]
        $region32: #{cnn2_forward.3} parent=11 // pred_fallthru
          _
      $region12: #{cnn2_forward.3} parent=5 // pred_fallthru
        _
      %p280 = scmp.lt.s32.totalorder %s19, 5
      // Predicated region
      $region33: #{cnn2_forward.3} parent=5 // pred_check
        %p281 = pneg %p280
      $region34: #{cnn2_forward.3} parent=5 // pred_check_branch
        %283 = sbr.rel (%p281) target = $region36
      $region35: #{cnn2_forward.3} parent=5 // pred_region
        // Predicated region
        $region37: #{cnn2_forward.3} parent=35 // pred_check
          %p284 = pneg %p53
        $region38: #{cnn2_forward.3} parent=35 // pred_check_branch
          %286 = sbr.rel (%p284) target = $region40
        $region39: #{cnn2_forward.3} parent=35 // pred_region
          %s287 = smul.u32 5, %s27
          %p288 = scmp.lt.s32.totalorder %s26, 0
          %s289 = scalar_select %p288, %s26, 0
          %p290 = scmp.lt.s32.totalorder %s287, 24
          %s291 = scalar_select %p290, %s287, 24
          %s292 = smul.addr %s289, 25
          %s293 = sadd.s32 %s291, %s292
          %s294 = scalar_lea.vmem %s0, %s293
          %s295 = smul.u32 5, %s27
        $region40: #{cnn2_forward.3} parent=35 // pred_fallthru
          _
        // Predicated region
        $region41: #{cnn2_forward.3} parent=35 // pred_check
          %p296 = pneg %p79
        $region42: #{cnn2_forward.3} parent=35 // pred_check_branch
          %298 = sbr.rel (%p296) target = $region44
        $region43: #{cnn2_forward.3} parent=35 // pred_region
          %s299 = sand.u32 %s69, 1
          %s300 = scalar_lea.sflag [#allocation4], %s299
          %s301 = sand.u32 %s69, 1
          %s302 = smul.addr %s301, 2560
          %s303 = scalar_lea.vmem [#allocation3], %s302
          %s304 = smul.u32 80, %s27
          %s306 = ssub.s32 40960, 40960
          %307 = vsyncadd %s300, %s306
          %s308 = smul.addr %s304, 8
          %s309 = smul.addr %s308, 64
          %s310 = scalar_lea.hbm %s1, %s309
          %s311 = sshll.u32 %s303, 4
          %s312 = int_to_ptr.vmem [resolvable:$true] %s311
          %317 = dma.hbm_to_vmem [thread:$0]  %s310, 40960, %s312, %s300, 512, 512, 32
        $region44: #{cnn2_forward.3} parent=35 // pred_fallthru
          _
      $region36: #{cnn2_forward.3} parent=5 // pred_fallthru
        _
      %p318 = scmp.le.s32.totalorder 1, %s19
      %p319 = scmp.lt.s32.totalorder %s19, 6
      %p320 = pnand %p318, %p319
      %p321 = pneg %p320
      // Predicated region
      $region45: #{cnn2_forward.3} parent=5 // pred_check
        _
      $region46: #{cnn2_forward.3} parent=5 // pred_check_branch
        %323 = sbr.rel (%p320) target = $region48
      $region47: #{cnn2_forward.3} parent=5 // pred_region
        %s324 = ssub.s32 %s19, 1
        %s325 = sand.u32 %s72, 1
        %s326 = scalar_lea.sflag [#allocation4], %s325
        %s327 = sand.u32 %s72, 1
        %s328 = smul.addr %s327, 2560
        %s329 = scalar_lea.vmem [#allocation3], %s328
        // Predicated region
        $region49: #{cnn2_forward.3} parent=47 // pred_check
          %p330 = pneg %p85
        $region50: #{cnn2_forward.3} parent=47 // pred_check_branch
          %332 = sbr.rel (%p330) target = $region52
        $region51: #{cnn2_forward.3} parent=47 // pred_region
          %333 = dma.done %s326, 40960
        $region52: #{cnn2_forward.3} parent=47 // pred_fallthru
          _
        // Predicated region
        $region53: #{cnn2_forward.3} parent=47 // pred_check
          %p334 = pneg %p106
        $region54: #{cnn2_forward.3} parent=47 // pred_check_branch
          %336 = sbr.rel (%p334) target = $region56
        $region55: #{cnn2_forward.3} parent=47 // pred_region
          %337 = dma.done [#allocation7], 128
        $region56: #{cnn2_forward.3} parent=47 // pred_fallthru
          _
        // Predicated region
        $region57: #{cnn2_forward.3} parent=47 // pred_check
          %p338 = pneg %p127
        $region58: #{cnn2_forward.3} parent=47 // pred_check_branch
          %340 = sbr.rel (%p338) target = $region60
        $region59: #{cnn2_forward.3} parent=47 // pred_region
          %341 = dma.done [#allocation7], 16384
        $region60: #{cnn2_forward.3} parent=47 // pred_fallthru
          _
        // Predicated region
        $region61: #{cnn2_forward.3} parent=47 // pred_check
          %p342 = pneg %p148
        $region62: #{cnn2_forward.3} parent=47 // pred_check_branch
          %344 = sbr.rel (%p342) target = $region64
        $region63: #{cnn2_forward.3} parent=47 // pred_region
          %345 = dma.done [#allocation10], 32
        $region64: #{cnn2_forward.3} parent=47 // pred_fallthru
          _
        // Predicated region
        $region65: #{cnn2_forward.3} parent=47 // pred_check
          %p346 = pneg %p190
        $region66: #{cnn2_forward.3} parent=47 // pred_check_branch
          %348 = sbr.rel (%p346) target = $region68
        $region67: #{cnn2_forward.3} parent=47 // pred_region
          %349 = dma.done [#allocation10], 16
        $region68: #{cnn2_forward.3} parent=47 // pred_fallthru
          _
        %s350 = smul.u32 5, %s29
        %p351 = scmp.lt.s32.totalorder %s28, 0
        %s352 = scalar_select %p351, %s28, 0
        %p353 = scmp.lt.s32.totalorder %s350, 24
        %s354 = scalar_select %p353, %s350, 24
        %s355 = smul.addr %s352, 25
        %s356 = sadd.s32 %s354, %s355
        %s357 = scalar_lea.vmem %s0, %s356
        %p358 = pneg %p59
        %p359 = pneg %p56
        %s360 = sand.u32 %s72, 1
        %s361 = scalar_lea.sflag [#allocation4], %s360
        %s362 = sand.u32 %s72, 1
        %s363 = smul.addr %s362, 2560
        %s364 = scalar_lea.vmem [#allocation3], %s363
        %p365 = pneg %p85
        %p366 = pneg %p82
        %p367 = pneg %p106
        %p368 = pneg %p103
        %p369 = pneg %p127
        %p370 = pneg %p124
        %p371 = pneg %p148
        %p372 = pneg %p145
        %p373 = pneg %p169
        %p374 = pneg %p166
        %p375 = pneg %p190
        %p376 = pneg %p187
        %p377 = pneg %p216
        %p378 = pneg %p213
        %s379 = smul.u32 5, %s29
        %p380 = scmp.lt.s32.totalorder %s28, 0
        %s381 = scalar_select %p380, %s28, 0
        %p382 = scmp.lt.s32.totalorder %s379, 24
        %s383 = scalar_select %p382, %s379, 24
        %s384 = smul.addr %s381, 25
        %s385 = sadd.s32 %s383, %s384
        %s386 = scalar_lea.vmem %s0, %s385
        %s387 = smul.u32 5, %s29
        %s388 = smul.u32 80, %s29
        %p390 = scmp.eq.s32.totalorder %s29, 0
        // Predicated region
        $region69: #{cnn2_forward.3} parent=47 // pred_check
          %p391 = pneg %p390
        $region70: #{cnn2_forward.3} parent=47 // pred_check_branch
          %393 = sbr.rel (%p391) target = $region72
        $region71: #{cnn2_forward.3} parent=47 // pred_region
          %394 = vst [vmem:[#allocation2] sm:$0xff] 0.0
          %395 = vst [vmem:[#allocation2 + $0x8] sm:$0xff] 0.0
        $region72: #{cnn2_forward.3} parent=47 // pred_fallthru
          _
        %v396 = vld [vmem:[#allocation2] sm:$0xff]
        %v397 = vld [vmem:[#allocation2 + $0x8] sm:$0xff]
        %v398 = vld [vmem:[%s386] sm:$0x1f]
        %v399 = vld [vmem:[%s329] sm:$0xff]
        %v400 = vld [vmem:[%s329 + $0x8] sm:$0xff]
        %v401 = vld [vmem:[%s329 + $0x10] sm:$0xff]
        %v402 = vld [vmem:[%s329 + $0x18] sm:$0xff]
        %v403 = vld [vmem:[%s329 + $0x20] sm:$0xff]
        %v404 = vld [vmem:[%s329 + $0x28] sm:$0xff]
        %v405 = vld [vmem:[%s329 + $0x30] sm:$0xff]
        %v406 = vld [vmem:[%s329 + $0x38] sm:$0xff]
        %v407 = vld [vmem:[%s329 + $0x40] sm:$0xff]
        %v408 = vld [vmem:[%s329 + $0x48] sm:$0xff]
        %v409 = vld [vmem:[%s329 + $0x50] sm:$0xff]
        %v410 = vld [vmem:[%s329 + $0x58] sm:$0xff]
        %v411 = vld [vmem:[%s329 + $0x60] sm:$0xff]
        %v412 = vld [vmem:[%s329 + $0x68] sm:$0xff]
        %v413 = vld [vmem:[%s329 + $0x70] sm:$0xff]
        %v414 = vld [vmem:[%s329 + $0x78] sm:$0xff]
        %v415 = vld [vmem:[%s329 + $0x80] sm:$0xff]
        %v416 = vld [vmem:[%s329 + $0x88] sm:$0xff]
        %v417 = vld [vmem:[%s329 + $0x90] sm:$0xff]
        %v418 = vld [vmem:[%s329 + $0x98] sm:$0xff]
        %v419 = vld [vmem:[%s329 + $0xa0] sm:$0xff]
        %v420 = vld [vmem:[%s329 + $0xa8] sm:$0xff]
        %v421 = vld [vmem:[%s329 + $0xb0] sm:$0xff]
        %v422 = vld [vmem:[%s329 + $0xb8] sm:$0xff]
        %v423 = vld [vmem:[%s329 + $0xc0] sm:$0xff]
        %v424 = vld [vmem:[%s329 + $0xc8] sm:$0xff]
        %v425 = vld [vmem:[%s329 + $0xd0] sm:$0xff]
        %v426 = vld [vmem:[%s329 + $0xd8] sm:$0xff]
        %v427 = vld [vmem:[%s329 + $0xe0] sm:$0xff]
        %v428 = vld [vmem:[%s329 + $0xe8] sm:$0xff]
        %v429 = vld [vmem:[%s329 + $0xf0] sm:$0xff]
        %v430 = vld [vmem:[%s329 + $0xf8] sm:$0xff]
        %v431 = vld [vmem:[%s329 + $0x100] sm:$0xff]
        %v432 = vld [vmem:[%s329 + $0x108] sm:$0xff]
        %v433 = vld [vmem:[%s329 + $0x110] sm:$0xff]
        %v434 = vld [vmem:[%s329 + $0x118] sm:$0xff]
        %v435 = vld [vmem:[%s329 + $0x120] sm:$0xff]
        %v436 = vld [vmem:[%s329 + $0x128] sm:$0xff]
        %v437 = vld [vmem:[%s329 + $0x130] sm:$0xff]
        %v438 = vld [vmem:[%s329 + $0x138] sm:$0xff]
        %v439 = vld [vmem:[%s329 + $0x140] sm:$0xff]
        %v440 = vld [vmem:[%s329 + $0x148] sm:$0xff]
        %v441 = vld [vmem:[%s329 + $0x150] sm:$0xff]
        %v442 = vld [vmem:[%s329 + $0x158] sm:$0xff]
        %v443 = vld [vmem:[%s329 + $0x160] sm:$0xff]
        %v444 = vld [vmem:[%s329 + $0x168] sm:$0xff]
        %v445 = vld [vmem:[%s329 + $0x170] sm:$0xff]
        %v446 = vld [vmem:[%s329 + $0x178] sm:$0xff]
        %v447 = vld [vmem:[%s329 + $0x180] sm:$0xff]
        %v448 = vld [vmem:[%s329 + $0x188] sm:$0xff]
        %v449 = vld [vmem:[%s329 + $0x190] sm:$0xff]
        %v450 = vld [vmem:[%s329 + $0x198] sm:$0xff]
        %v451 = vld [vmem:[%s329 + $0x1a0] sm:$0xff]
        %v452 = vld [vmem:[%s329 + $0x1a8] sm:$0xff]
        %v453 = vld [vmem:[%s329 + $0x1b0] sm:$0xff]
        %v454 = vld [vmem:[%s329 + $0x1b8] sm:$0xff]
        %v455 = vld [vmem:[%s329 + $0x1c0] sm:$0xff]
        %v456 = vld [vmem:[%s329 + $0x1c8] sm:$0xff]
        %v457 = vld [vmem:[%s329 + $0x1d0] sm:$0xff]
        %v458 = vld [vmem:[%s329 + $0x1d8] sm:$0xff]
        %v459 = vld [vmem:[%s329 + $0x1e0] sm:$0xff]
        %v460 = vld [vmem:[%s329 + $0x1e8] sm:$0xff]
        %v461 = vld [vmem:[%s329 + $0x1f0] sm:$0xff]
        %v462 = vld [vmem:[%s329 + $0x1f8] sm:$0xff]
        %v463 = vld [vmem:[%s329 + $0x200] sm:$0xff]
        %v464 = vld [vmem:[%s329 + $0x208] sm:$0xff]
        %v465 = vld [vmem:[%s329 + $0x210] sm:$0xff]
        %v466 = vld [vmem:[%s329 + $0x218] sm:$0xff]
        %v467 = vld [vmem:[%s329 + $0x220] sm:$0xff]
        %v468 = vld [vmem:[%s329 + $0x228] sm:$0xff]
        %v469 = vld [vmem:[%s329 + $0x230] sm:$0xff]
        %v470 = vld [vmem:[%s329 + $0x238] sm:$0xff]
        %v471 = vld [vmem:[%s329 + $0x240] sm:$0xff]
        %v472 = vld [vmem:[%s329 + $0x248] sm:$0xff]
        %v473 = vld [vmem:[%s329 + $0x250] sm:$0xff]
        %v474 = vld [vmem:[%s329 + $0x258] sm:$0xff]
        %v475 = vld [vmem:[%s329 + $0x260] sm:$0xff]
        %v476 = vld [vmem:[%s329 + $0x268] sm:$0xff]
        %v477 = vld [vmem:[%s329 + $0x270] sm:$0xff]
        %v478 = vld [vmem:[%s329 + $0x278] sm:$0xff]
        %v479 = vld [vmem:[%s329 + $0x280] sm:$0xff]
        %v480 = vld [vmem:[%s329 + $0x288] sm:$0xff]
        %v481 = vld [vmem:[%s329 + $0x290] sm:$0xff]
        %v482 = vld [vmem:[%s329 + $0x298] sm:$0xff]
        %v483 = vld [vmem:[%s329 + $0x2a0] sm:$0xff]
        %v484 = vld [vmem:[%s329 + $0x2a8] sm:$0xff]
        %v485 = vld [vmem:[%s329 + $0x2b0] sm:$0xff]
        %v486 = vld [vmem:[%s329 + $0x2b8] sm:$0xff]
        %v487 = vld [vmem:[%s329 + $0x2c0] sm:$0xff]
        %v488 = vld [vmem:[%s329 + $0x2c8] sm:$0xff]
        %v489 = vld [vmem:[%s329 + $0x2d0] sm:$0xff]
        %v490 = vld [vmem:[%s329 + $0x2d8] sm:$0xff]
        %v491 = vld [vmem:[%s329 + $0x2e0] sm:$0xff]
        %v492 = vld [vmem:[%s329 + $0x2e8] sm:$0xff]
        %v493 = vld [vmem:[%s329 + $0x2f0] sm:$0xff]
        %v494 = vld [vmem:[%s329 + $0x2f8] sm:$0xff]
        %v495 = vld [vmem:[%s329 + $0x300] sm:$0xff]
        %v496 = vld [vmem:[%s329 + $0x308] sm:$0xff]
        %v497 = vld [vmem:[%s329 + $0x310] sm:$0xff]
        %v498 = vld [vmem:[%s329 + $0x318] sm:$0xff]
        %v499 = vld [vmem:[%s329 + $0x320] sm:$0xff]
        %v500 = vld [vmem:[%s329 + $0x328] sm:$0xff]
        %v501 = vld [vmem:[%s329 + $0x330] sm:$0xff]
        %v502 = vld [vmem:[%s329 + $0x338] sm:$0xff]
        %v503 = vld [vmem:[%s329 + $0x340] sm:$0xff]
        %v504 = vld [vmem:[%s329 + $0x348] sm:$0xff]
        %v505 = vld [vmem:[%s329 + $0x350] sm:$0xff]
        %v506 = vld [vmem:[%s329 + $0x358] sm:$0xff]
        %v507 = vld [vmem:[%s329 + $0x360] sm:$0xff]
        %v508 = vld [vmem:[%s329 + $0x368] sm:$0xff]
        %v509 = vld [vmem:[%s329 + $0x370] sm:$0xff]
        %v510 = vld [vmem:[%s329 + $0x378] sm:$0xff]
        %v511 = vld [vmem:[%s329 + $0x380] sm:$0xff]
        %v512 = vld [vmem:[%s329 + $0x388] sm:$0xff]
        %v513 = vld [vmem:[%s329 + $0x390] sm:$0xff]
        %v514 = vld [vmem:[%s329 + $0x398] sm:$0xff]
        %v515 = vld [vmem:[%s329 + $0x3a0] sm:$0xff]
        %v516 = vld [vmem:[%s329 + $0x3a8] sm:$0xff]
        %v517 = vld [vmem:[%s329 + $0x3b0] sm:$0xff]
        %v518 = vld [vmem:[%s329 + $0x3b8] sm:$0xff]
        %v519 = vld [vmem:[%s329 + $0x3c0] sm:$0xff]
        %v520 = vld [vmem:[%s329 + $0x3c8] sm:$0xff]
        %v521 = vld [vmem:[%s329 + $0x3d0] sm:$0xff]
        %v522 = vld [vmem:[%s329 + $0x3d8] sm:$0xff]
        %v523 = vld [vmem:[%s329 + $0x3e0] sm:$0xff]
        %v524 = vld [vmem:[%s329 + $0x3e8] sm:$0xff]
        %v525 = vld [vmem:[%s329 + $0x3f0] sm:$0xff]
        %v526 = vld [vmem:[%s329 + $0x3f8] sm:$0xff]
        %v527 = vld [vmem:[%s329 + $0x400] sm:$0xff]
        %v528 = vld [vmem:[%s329 + $0x408] sm:$0xff]
        %v529 = vld [vmem:[%s329 + $0x410] sm:$0xff]
        %v530 = vld [vmem:[%s329 + $0x418] sm:$0xff]
        %v531 = vld [vmem:[%s329 + $0x420] sm:$0xff]
        %v532 = vld [vmem:[%s329 + $0x428] sm:$0xff]
        %v533 = vld [vmem:[%s329 + $0x430] sm:$0xff]
        %v534 = vld [vmem:[%s329 + $0x438] sm:$0xff]
        %v535 = vld [vmem:[%s329 + $0x440] sm:$0xff]
        %v536 = vld [vmem:[%s329 + $0x448] sm:$0xff]
        %v537 = vld [vmem:[%s329 + $0x450] sm:$0xff]
        %v538 = vld [vmem:[%s329 + $0x458] sm:$0xff]
        %v539 = vld [vmem:[%s329 + $0x460] sm:$0xff]
        %v540 = vld [vmem:[%s329 + $0x468] sm:$0xff]
        %v541 = vld [vmem:[%s329 + $0x470] sm:$0xff]
        %v542 = vld [vmem:[%s329 + $0x478] sm:$0xff]
        %v543 = vld [vmem:[%s329 + $0x480] sm:$0xff]
        %v544 = vld [vmem:[%s329 + $0x488] sm:$0xff]
        %v545 = vld [vmem:[%s329 + $0x490] sm:$0xff]
        %v546 = vld [vmem:[%s329 + $0x498] sm:$0xff]
        %v547 = vld [vmem:[%s329 + $0x4a0] sm:$0xff]
        %v548 = vld [vmem:[%s329 + $0x4a8] sm:$0xff]
        %v549 = vld [vmem:[%s329 + $0x4b0] sm:$0xff]
        %v550 = vld [vmem:[%s329 + $0x4b8] sm:$0xff]
        %v551 = vld [vmem:[%s329 + $0x4c0] sm:$0xff]
        %v552 = vld [vmem:[%s329 + $0x4c8] sm:$0xff]
        %v553 = vld [vmem:[%s329 + $0x4d0] sm:$0xff]
        %v554 = vld [vmem:[%s329 + $0x4d8] sm:$0xff]
        %v555 = vld [vmem:[%s329 + $0x4e0] sm:$0xff]
        %v556 = vld [vmem:[%s329 + $0x4e8] sm:$0xff]
        %v557 = vld [vmem:[%s329 + $0x4f0] sm:$0xff]
        %v558 = vld [vmem:[%s329 + $0x4f8] sm:$0xff]
        %v559 = vld [vmem:[%s329 + $0x500] sm:$0xff]
        %v560 = vld [vmem:[%s329 + $0x508] sm:$0xff]
        %v561 = vld [vmem:[%s329 + $0x510] sm:$0xff]
        %v562 = vld [vmem:[%s329 + $0x518] sm:$0xff]
        %v563 = vld [vmem:[%s329 + $0x520] sm:$0xff]
        %v564 = vld [vmem:[%s329 + $0x528] sm:$0xff]
        %v565 = vld [vmem:[%s329 + $0x530] sm:$0xff]
        %v566 = vld [vmem:[%s329 + $0x538] sm:$0xff]
        %v567 = vld [vmem:[%s329 + $0x540] sm:$0xff]
        %v568 = vld [vmem:[%s329 + $0x548] sm:$0xff]
        %v569 = vld [vmem:[%s329 + $0x550] sm:$0xff]
        %v570 = vld [vmem:[%s329 + $0x558] sm:$0xff]
        %v571 = vld [vmem:[%s329 + $0x560] sm:$0xff]
        %v572 = vld [vmem:[%s329 + $0x568] sm:$0xff]
        %v573 = vld [vmem:[%s329 + $0x570] sm:$0xff]
        %v574 = vld [vmem:[%s329 + $0x578] sm:$0xff]
        %v575 = vld [vmem:[%s329 + $0x580] sm:$0xff]
        %v576 = vld [vmem:[%s329 + $0x588] sm:$0xff]
        %v577 = vld [vmem:[%s329 + $0x590] sm:$0xff]
        %v578 = vld [vmem:[%s329 + $0x598] sm:$0xff]
        %v579 = vld [vmem:[%s329 + $0x5a0] sm:$0xff]
        %v580 = vld [vmem:[%s329 + $0x5a8] sm:$0xff]
        %v581 = vld [vmem:[%s329 + $0x5b0] sm:$0xff]
        %v582 = vld [vmem:[%s329 + $0x5b8] sm:$0xff]
        %v583 = vld [vmem:[%s329 + $0x5c0] sm:$0xff]
        %v584 = vld [vmem:[%s329 + $0x5c8] sm:$0xff]
        %v585 = vld [vmem:[%s329 + $0x5d0] sm:$0xff]
        %v586 = vld [vmem:[%s329 + $0x5d8] sm:$0xff]
        %v587 = vld [vmem:[%s329 + $0x5e0] sm:$0xff]
        %v588 = vld [vmem:[%s329 + $0x5e8] sm:$0xff]
        %v589 = vld [vmem:[%s329 + $0x5f0] sm:$0xff]
        %v590 = vld [vmem:[%s329 + $0x5f8] sm:$0xff]
        %v591 = vld [vmem:[%s329 + $0x600] sm:$0xff]
        %v592 = vld [vmem:[%s329 + $0x608] sm:$0xff]
        %v593 = vld [vmem:[%s329 + $0x610] sm:$0xff]
        %v594 = vld [vmem:[%s329 + $0x618] sm:$0xff]
        %v595 = vld [vmem:[%s329 + $0x620] sm:$0xff]
        %v596 = vld [vmem:[%s329 + $0x628] sm:$0xff]
        %v597 = vld [vmem:[%s329 + $0x630] sm:$0xff]
        %v598 = vld [vmem:[%s329 + $0x638] sm:$0xff]
        %v599 = vld [vmem:[%s329 + $0x640] sm:$0xff]
        %v600 = vld [vmem:[%s329 + $0x648] sm:$0xff]
        %v601 = vld [vmem:[%s329 + $0x650] sm:$0xff]
        %v602 = vld [vmem:[%s329 + $0x658] sm:$0xff]
        %v603 = vld [vmem:[%s329 + $0x660] sm:$0xff]
        %v604 = vld [vmem:[%s329 + $0x668] sm:$0xff]
        %v605 = vld [vmem:[%s329 + $0x670] sm:$0xff]
        %v606 = vld [vmem:[%s329 + $0x678] sm:$0xff]
        %v607 = vld [vmem:[%s329 + $0x680] sm:$0xff]
        %v608 = vld [vmem:[%s329 + $0x688] sm:$0xff]
        %v609 = vld [vmem:[%s329 + $0x690] sm:$0xff]
        %v610 = vld [vmem:[%s329 + $0x698] sm:$0xff]
        %v611 = vld [vmem:[%s329 + $0x6a0] sm:$0xff]
        %v612 = vld [vmem:[%s329 + $0x6a8] sm:$0xff]
        %v613 = vld [vmem:[%s329 + $0x6b0] sm:$0xff]
        %v614 = vld [vmem:[%s329 + $0x6b8] sm:$0xff]
        %v615 = vld [vmem:[%s329 + $0x6c0] sm:$0xff]
        %v616 = vld [vmem:[%s329 + $0x6c8] sm:$0xff]
        %v617 = vld [vmem:[%s329 + $0x6d0] sm:$0xff]
        %v618 = vld [vmem:[%s329 + $0x6d8] sm:$0xff]
        %v619 = vld [vmem:[%s329 + $0x6e0] sm:$0xff]
        %v620 = vld [vmem:[%s329 + $0x6e8] sm:$0xff]
        %v621 = vld [vmem:[%s329 + $0x6f0] sm:$0xff]
        %v622 = vld [vmem:[%s329 + $0x6f8] sm:$0xff]
        %v623 = vld [vmem:[%s329 + $0x700] sm:$0xff]
        %v624 = vld [vmem:[%s329 + $0x708] sm:$0xff]
        %v625 = vld [vmem:[%s329 + $0x710] sm:$0xff]
        %v626 = vld [vmem:[%s329 + $0x718] sm:$0xff]
        %v627 = vld [vmem:[%s329 + $0x720] sm:$0xff]
        %v628 = vld [vmem:[%s329 + $0x728] sm:$0xff]
        %v629 = vld [vmem:[%s329 + $0x730] sm:$0xff]
        %v630 = vld [vmem:[%s329 + $0x738] sm:$0xff]
        %v631 = vld [vmem:[%s329 + $0x740] sm:$0xff]
        %v632 = vld [vmem:[%s329 + $0x748] sm:$0xff]
        %v633 = vld [vmem:[%s329 + $0x750] sm:$0xff]
        %v634 = vld [vmem:[%s329 + $0x758] sm:$0xff]
        %v635 = vld [vmem:[%s329 + $0x760] sm:$0xff]
        %v636 = vld [vmem:[%s329 + $0x768] sm:$0xff]
        %v637 = vld [vmem:[%s329 + $0x770] sm:$0xff]
        %v638 = vld [vmem:[%s329 + $0x778] sm:$0xff]
        %v639 = vld [vmem:[%s329 + $0x780] sm:$0xff]
        %v640 = vld [vmem:[%s329 + $0x788] sm:$0xff]
        %v641 = vld [vmem:[%s329 + $0x790] sm:$0xff]
        %v642 = vld [vmem:[%s329 + $0x798] sm:$0xff]
        %v643 = vld [vmem:[%s329 + $0x7a0] sm:$0xff]
        %v644 = vld [vmem:[%s329 + $0x7a8] sm:$0xff]
        %v645 = vld [vmem:[%s329 + $0x7b0] sm:$0xff]
        %v646 = vld [vmem:[%s329 + $0x7b8] sm:$0xff]
        %v647 = vld [vmem:[%s329 + $0x7c0] sm:$0xff]
        %v648 = vld [vmem:[%s329 + $0x7c8] sm:$0xff]
        %v649 = vld [vmem:[%s329 + $0x7d0] sm:$0xff]
        %v650 = vld [vmem:[%s329 + $0x7d8] sm:$0xff]
        %v651 = vld [vmem:[%s329 + $0x7e0] sm:$0xff]
        %v652 = vld [vmem:[%s329 + $0x7e8] sm:$0xff]
        %v653 = vld [vmem:[%s329 + $0x7f0] sm:$0xff]
        %v654 = vld [vmem:[%s329 + $0x7f8] sm:$0xff]
        %v655 = vld [vmem:[%s329 + $0x800] sm:$0xff]
        %v656 = vld [vmem:[%s329 + $0x808] sm:$0xff]
        %v657 = vld [vmem:[%s329 + $0x810] sm:$0xff]
        %v658 = vld [vmem:[%s329 + $0x818] sm:$0xff]
        %v659 = vld [vmem:[%s329 + $0x820] sm:$0xff]
        %v660 = vld [vmem:[%s329 + $0x828] sm:$0xff]
        %v661 = vld [vmem:[%s329 + $0x830] sm:$0xff]
        %v662 = vld [vmem:[%s329 + $0x838] sm:$0xff]
        %v663 = vld [vmem:[%s329 + $0x840] sm:$0xff]
        %v664 = vld [vmem:[%s329 + $0x848] sm:$0xff]
        %v665 = vld [vmem:[%s329 + $0x850] sm:$0xff]
        %v666 = vld [vmem:[%s329 + $0x858] sm:$0xff]
        %v667 = vld [vmem:[%s329 + $0x860] sm:$0xff]
        %v668 = vld [vmem:[%s329 + $0x868] sm:$0xff]
        %v669 = vld [vmem:[%s329 + $0x870] sm:$0xff]
        %v670 = vld [vmem:[%s329 + $0x878] sm:$0xff]
        %v671 = vld [vmem:[%s329 + $0x880] sm:$0xff]
        %v672 = vld [vmem:[%s329 + $0x888] sm:$0xff]
        %v673 = vld [vmem:[%s329 + $0x890] sm:$0xff]
        %v674 = vld [vmem:[%s329 + $0x898] sm:$0xff]
        %v675 = vld [vmem:[%s329 + $0x8a0] sm:$0xff]
        %v676 = vld [vmem:[%s329 + $0x8a8] sm:$0xff]
        %v677 = vld [vmem:[%s329 + $0x8b0] sm:$0xff]
        %v678 = vld [vmem:[%s329 + $0x8b8] sm:$0xff]
        %v679 = vld [vmem:[%s329 + $0x8c0] sm:$0xff]
        %v680 = vld [vmem:[%s329 + $0x8c8] sm:$0xff]
        %v681 = vld [vmem:[%s329 + $0x8d0] sm:$0xff]
        %v682 = vld [vmem:[%s329 + $0x8d8] sm:$0xff]
        %v683 = vld [vmem:[%s329 + $0x8e0] sm:$0xff]
        %v684 = vld [vmem:[%s329 + $0x8e8] sm:$0xff]
        %v685 = vld [vmem:[%s329 + $0x8f0] sm:$0xff]
        %v686 = vld [vmem:[%s329 + $0x8f8] sm:$0xff]
        %v687 = vld [vmem:[%s329 + $0x900] sm:$0xff]
        %v688 = vld [vmem:[%s329 + $0x908] sm:$0xff]
        %v689 = vld [vmem:[%s329 + $0x910] sm:$0xff]
        %v690 = vld [vmem:[%s329 + $0x918] sm:$0xff]
        %v691 = vld [vmem:[%s329 + $0x920] sm:$0xff]
        %v692 = vld [vmem:[%s329 + $0x928] sm:$0xff]
        %v693 = vld [vmem:[%s329 + $0x930] sm:$0xff]
        %v694 = vld [vmem:[%s329 + $0x938] sm:$0xff]
        %v695 = vld [vmem:[%s329 + $0x940] sm:$0xff]
        %v696 = vld [vmem:[%s329 + $0x948] sm:$0xff]
        %v697 = vld [vmem:[%s329 + $0x950] sm:$0xff]
        %v698 = vld [vmem:[%s329 + $0x958] sm:$0xff]
        %v699 = vld [vmem:[%s329 + $0x960] sm:$0xff]
        %v700 = vld [vmem:[%s329 + $0x968] sm:$0xff]
        %v701 = vld [vmem:[%s329 + $0x970] sm:$0xff]
        %v702 = vld [vmem:[%s329 + $0x978] sm:$0xff]
        %v703 = vld [vmem:[%s329 + $0x980] sm:$0xff]
        %v704 = vld [vmem:[%s329 + $0x988] sm:$0xff]
        %v705 = vld [vmem:[%s329 + $0x990] sm:$0xff]
        %v706 = vld [vmem:[%s329 + $0x998] sm:$0xff]
        %v707 = vld [vmem:[%s329 + $0x9a0] sm:$0xff]
        %v708 = vld [vmem:[%s329 + $0x9a8] sm:$0xff]
        %v709 = vld [vmem:[%s329 + $0x9b0] sm:$0xff]
        %v710 = vld [vmem:[%s329 + $0x9b8] sm:$0xff]
        %v711 = vld [vmem:[%s329 + $0x9c0] sm:$0xff]
        %v712 = vld [vmem:[%s329 + $0x9c8] sm:$0xff]
        %v713 = vld [vmem:[%s329 + $0x9d0] sm:$0xff]
        %v714 = vld [vmem:[%s329 + $0x9d8] sm:$0xff]
        %v715 = vld [vmem:[%s329 + $0x9e0] sm:$0xff]
        %v716 = vld [vmem:[%s329 + $0x9e8] sm:$0xff]
        %v717 = vld [vmem:[%s329 + $0x9f0] sm:$0xff]
        %v718 = vld [vmem:[%s329 + $0x9f8] sm:$0xff]
        %v720 = vcombine.high %v398, %v398
        %v722 = vunpack.c.l.s4 1966171168
        %v723 = vunpack.c.0.s8 %v722
        %v724 = vlaneseq
        %v725 = vshrl.u32 %v724, 7
        %v726 = vsub.s32 %v723, %v725
        %v727 = vrot.slane %v398, %v726
        %v729 = vunpack.c.l.s4 1966171168
        %v730 = vunpack.c.0.s8 %v729
        %v731 = vlaneseq
        %v732 = vshrl.u32 %v731, 7
        %v733 = vsub.s32 %v730, %v732
        %v734 = vrot.slane %v720, %v733
        %v735 = vcombine.high %v727, %v727
        %v737 = vunpack.c.l.s4 1966171168
        %v738 = vunpack.c.0.s8 %v737
        %v739 = vlaneseq
        %v740 = vshrl.u32 %v739, 7
        %v741 = vsub.s32 %v738, %v740
        %v742 = vrot.slane %v727, %v741
        %v744 = vunpack.c.l.s4 1966171168
        %v745 = vunpack.c.0.s8 %v744
        %v746 = vlaneseq
        %v747 = vshrl.u32 %v746, 7
        %v748 = vsub.s32 %v745, %v747
        %v749 = vrot.slane %v734, %v748
        %v751 = vunpack.c.l.s4 1966171168
        %v752 = vunpack.c.0.s8 %v751
        %v753 = vlaneseq
        %v754 = vshrl.u32 %v753, 7
        %v755 = vsub.s32 %v752, %v754
        %v756 = vrot.slane %v735, %v755
        %v757 = vcombine.high %v742, %v742
        %v758 = vcombine.high %v756, %v756
        %v1084 = vunpack.c.l.b16 %v399
        %v1085 = vunpack.c.h.b16 %v399
        %v1086 = vunpack.c.l.b16 %v400
        %v1087 = vunpack.c.h.b16 %v400
        %v1088 = vunpack.c.l.b16 %v401
        %v1089 = vunpack.c.h.b16 %v401
        %v1090 = vunpack.c.l.b16 %v402
        %v1091 = vunpack.c.h.b16 %v402
        %v1092 = vunpack.c.l.b16 %v403
        %v1093 = vunpack.c.h.b16 %v403
        %v1094 = vunpack.c.l.b16 %v404
        %v1095 = vunpack.c.h.b16 %v404
        %v1096 = vunpack.c.l.b16 %v405
        %v1097 = vunpack.c.h.b16 %v405
        %v1098 = vunpack.c.l.b16 %v406
        %v1099 = vunpack.c.h.b16 %v406
        %v1100 = vunpack.c.l.b16 %v407
        %v1101 = vunpack.c.h.b16 %v407
        %v1102 = vunpack.c.l.b16 %v408
        %v1103 = vunpack.c.h.b16 %v408
        %v1104 = vunpack.c.l.b16 %v409
        %v1105 = vunpack.c.h.b16 %v409
        %v1106 = vunpack.c.l.b16 %v410
        %v1107 = vunpack.c.h.b16 %v410
        %v1108 = vunpack.c.l.b16 %v411
        %v1109 = vunpack.c.h.b16 %v411
        %v1110 = vunpack.c.l.b16 %v412
        %v1111 = vunpack.c.h.b16 %v412
        %v1112 = vunpack.c.l.b16 %v413
        %v1113 = vunpack.c.h.b16 %v413
        %v1114 = vunpack.c.l.b16 %v414
        %v1115 = vunpack.c.h.b16 %v414
        %v1116 = vunpack.c.l.b16 %v415
        %v1117 = vunpack.c.h.b16 %v415
        %v1118 = vunpack.c.l.b16 %v416
        %v1119 = vunpack.c.h.b16 %v416
        %v1120 = vunpack.c.l.b16 %v417
        %v1121 = vunpack.c.h.b16 %v417
        %v1122 = vunpack.c.l.b16 %v418
        %v1123 = vunpack.c.h.b16 %v418
        %v1124 = vunpack.c.l.b16 %v419
        %v1125 = vunpack.c.h.b16 %v419
        %v1126 = vunpack.c.l.b16 %v420
        %v1127 = vunpack.c.h.b16 %v420
        %v1128 = vunpack.c.l.b16 %v421
        %v1129 = vunpack.c.h.b16 %v421
        %v1130 = vunpack.c.l.b16 %v422
        %v1131 = vunpack.c.h.b16 %v422
        %v1132 = vunpack.c.l.b16 %v423
        %v1133 = vunpack.c.h.b16 %v423
        %v1134 = vunpack.c.l.b16 %v424
        %v1135 = vunpack.c.h.b16 %v424
        %v1136 = vunpack.c.l.b16 %v425
        %v1137 = vunpack.c.h.b16 %v425
        %v1138 = vunpack.c.l.b16 %v426
        %v1139 = vunpack.c.h.b16 %v426
        %v1140 = vunpack.c.l.b16 %v427
        %v1141 = vunpack.c.h.b16 %v427
        %v1142 = vunpack.c.l.b16 %v428
        %v1143 = vunpack.c.h.b16 %v428
        %v1144 = vunpack.c.l.b16 %v429
        %v1145 = vunpack.c.h.b16 %v429
        %v1146 = vunpack.c.l.b16 %v430
        %v1147 = vunpack.c.h.b16 %v430
        %v1148 = vunpack.c.l.b16 %v431
        %v1149 = vunpack.c.h.b16 %v431
        %v1150 = vunpack.c.l.b16 %v432
        %v1151 = vunpack.c.h.b16 %v432
        %v1152 = vunpack.c.l.b16 %v433
        %v1153 = vunpack.c.h.b16 %v433
        %v1154 = vunpack.c.l.b16 %v434
        %v1155 = vunpack.c.h.b16 %v434
        %v1156 = vunpack.c.l.b16 %v435
        %v1157 = vunpack.c.h.b16 %v435
        %v1158 = vunpack.c.l.b16 %v436
        %v1159 = vunpack.c.h.b16 %v436
        %v1160 = vunpack.c.l.b16 %v437
        %v1161 = vunpack.c.h.b16 %v437
        %v1162 = vunpack.c.l.b16 %v438
        %v1163 = vunpack.c.h.b16 %v438
        %v1164 = vunpack.c.l.b16 %v439
        %v1165 = vunpack.c.h.b16 %v439
        %v1166 = vunpack.c.l.b16 %v440
        %v1167 = vunpack.c.h.b16 %v440
        %v1168 = vunpack.c.l.b16 %v441
        %v1169 = vunpack.c.h.b16 %v441
        %v1170 = vunpack.c.l.b16 %v442
        %v1171 = vunpack.c.h.b16 %v442
        %v1172 = vunpack.c.l.b16 %v443
        %v1173 = vunpack.c.h.b16 %v443
        %v1174 = vunpack.c.l.b16 %v444
        %v1175 = vunpack.c.h.b16 %v444
        %v1176 = vunpack.c.l.b16 %v445
        %v1177 = vunpack.c.h.b16 %v445
        %v1178 = vunpack.c.l.b16 %v446
        %v1179 = vunpack.c.h.b16 %v446
        %v1180 = vunpack.c.l.b16 %v447
        %v1181 = vunpack.c.h.b16 %v447
        %v1182 = vunpack.c.l.b16 %v448
        %v1183 = vunpack.c.h.b16 %v448
        %v1184 = vunpack.c.l.b16 %v449
        %v1185 = vunpack.c.h.b16 %v449
        %v1186 = vunpack.c.l.b16 %v450
        %v1187 = vunpack.c.h.b16 %v450
        %v1188 = vunpack.c.l.b16 %v451
        %v1189 = vunpack.c.h.b16 %v451
        %v1190 = vunpack.c.l.b16 %v452
        %v1191 = vunpack.c.h.b16 %v452
        %v1192 = vunpack.c.l.b16 %v453
        %v1193 = vunpack.c.h.b16 %v453
        %v1194 = vunpack.c.l.b16 %v454
        %v1195 = vunpack.c.h.b16 %v454
        %v1196 = vunpack.c.l.b16 %v455
        %v1197 = vunpack.c.h.b16 %v455
        %v1198 = vunpack.c.l.b16 %v456
        %v1199 = vunpack.c.h.b16 %v456
        %v1200 = vunpack.c.l.b16 %v457
        %v1201 = vunpack.c.h.b16 %v457
        %v1202 = vunpack.c.l.b16 %v458
        %v1203 = vunpack.c.h.b16 %v458
        %v1204 = vunpack.c.l.b16 %v459
        %v1205 = vunpack.c.h.b16 %v459
        %v1206 = vunpack.c.l.b16 %v460
        %v1207 = vunpack.c.h.b16 %v460
        %v1208 = vunpack.c.l.b16 %v461
        %v1209 = vunpack.c.h.b16 %v461
        %v1210 = vunpack.c.l.b16 %v462
        %v1211 = vunpack.c.h.b16 %v462
        %v1212 = vunpack.c.l.b16 %v463
        %v1213 = vunpack.c.h.b16 %v463
        %v1214 = vunpack.c.l.b16 %v464
        %v1215 = vunpack.c.h.b16 %v464
        %v1216 = vunpack.c.l.b16 %v465
        %v1217 = vunpack.c.h.b16 %v465
        %v1218 = vunpack.c.l.b16 %v466
        %v1219 = vunpack.c.h.b16 %v466
        %v1220 = vunpack.c.l.b16 %v467
        %v1221 = vunpack.c.h.b16 %v467
        %v1222 = vunpack.c.l.b16 %v468
        %v1223 = vunpack.c.h.b16 %v468
        %v1224 = vunpack.c.l.b16 %v469
        %v1225 = vunpack.c.h.b16 %v469
        %v1226 = vunpack.c.l.b16 %v470
        %v1227 = vunpack.c.h.b16 %v470
        %v1228 = vunpack.c.l.b16 %v471
        %v1229 = vunpack.c.h.b16 %v471
        %v1230 = vunpack.c.l.b16 %v472
        %v1231 = vunpack.c.h.b16 %v472
        %v1232 = vunpack.c.l.b16 %v473
        %v1233 = vunpack.c.h.b16 %v473
        %v1234 = vunpack.c.l.b16 %v474
        %v1235 = vunpack.c.h.b16 %v474
        %v1236 = vunpack.c.l.b16 %v475
        %v1237 = vunpack.c.h.b16 %v475
        %v1238 = vunpack.c.l.b16 %v476
        %v1239 = vunpack.c.h.b16 %v476
        %v1240 = vunpack.c.l.b16 %v477
        %v1241 = vunpack.c.h.b16 %v477
        %v1242 = vunpack.c.l.b16 %v478
        %v1243 = vunpack.c.h.b16 %v478
        %v1244 = vunpack.c.l.b16 %v479
        %v1245 = vunpack.c.h.b16 %v479
        %v1246 = vunpack.c.l.b16 %v480
        %v1247 = vunpack.c.h.b16 %v480
        %v1248 = vunpack.c.l.b16 %v481
        %v1249 = vunpack.c.h.b16 %v481
        %v1250 = vunpack.c.l.b16 %v482
        %v1251 = vunpack.c.h.b16 %v482
        %v1252 = vunpack.c.l.b16 %v483
        %v1253 = vunpack.c.h.b16 %v483
        %v1254 = vunpack.c.l.b16 %v484
        %v1255 = vunpack.c.h.b16 %v484
        %v1256 = vunpack.c.l.b16 %v485
        %v1257 = vunpack.c.h.b16 %v485
        %v1258 = vunpack.c.l.b16 %v486
        %v1259 = vunpack.c.h.b16 %v486
        %v1260 = vunpack.c.l.b16 %v487
        %v1261 = vunpack.c.h.b16 %v487
        %v1262 = vunpack.c.l.b16 %v488
        %v1263 = vunpack.c.h.b16 %v488
        %v1264 = vunpack.c.l.b16 %v489
        %v1265 = vunpack.c.h.b16 %v489
        %v1266 = vunpack.c.l.b16 %v490
        %v1267 = vunpack.c.h.b16 %v490
        %v1268 = vunpack.c.l.b16 %v491
        %v1269 = vunpack.c.h.b16 %v491
        %v1270 = vunpack.c.l.b16 %v492
        %v1271 = vunpack.c.h.b16 %v492
        %v1272 = vunpack.c.l.b16 %v493
        %v1273 = vunpack.c.h.b16 %v493
        %v1274 = vunpack.c.l.b16 %v494
        %v1275 = vunpack.c.h.b16 %v494
        %v1276 = vunpack.c.l.b16 %v495
        %v1277 = vunpack.c.h.b16 %v495
        %v1278 = vunpack.c.l.b16 %v496
        %v1279 = vunpack.c.h.b16 %v496
        %v1280 = vunpack.c.l.b16 %v497
        %v1281 = vunpack.c.h.b16 %v497
        %v1282 = vunpack.c.l.b16 %v498
        %v1283 = vunpack.c.h.b16 %v498
        %v1284 = vunpack.c.l.b16 %v499
        %v1285 = vunpack.c.h.b16 %v499
        %v1286 = vunpack.c.l.b16 %v500
        %v1287 = vunpack.c.h.b16 %v500
        %v1288 = vunpack.c.l.b16 %v501
        %v1289 = vunpack.c.h.b16 %v501
        %v1290 = vunpack.c.l.b16 %v502
        %v1291 = vunpack.c.h.b16 %v502
        %v1292 = vunpack.c.l.b16 %v503
        %v1293 = vunpack.c.h.b16 %v503
        %v1294 = vunpack.c.l.b16 %v504
        %v1295 = vunpack.c.h.b16 %v504
        %v1296 = vunpack.c.l.b16 %v505
        %v1297 = vunpack.c.h.b16 %v505
        %v1298 = vunpack.c.l.b16 %v506
        %v1299 = vunpack.c.h.b16 %v506
        %v1300 = vunpack.c.l.b16 %v507
        %v1301 = vunpack.c.h.b16 %v507
        %v1302 = vunpack.c.l.b16 %v508
        %v1303 = vunpack.c.h.b16 %v508
        %v1304 = vunpack.c.l.b16 %v509
        %v1305 = vunpack.c.h.b16 %v509
        %v1306 = vunpack.c.l.b16 %v510
        %v1307 = vunpack.c.h.b16 %v510
        %v1308 = vunpack.c.l.b16 %v511
        %v1309 = vunpack.c.h.b16 %v511
        %v1310 = vunpack.c.l.b16 %v512
        %v1311 = vunpack.c.h.b16 %v512
        %v1312 = vunpack.c.l.b16 %v513
        %v1313 = vunpack.c.h.b16 %v513
        %v1314 = vunpack.c.l.b16 %v514
        %v1315 = vunpack.c.h.b16 %v514
        %v1316 = vunpack.c.l.b16 %v515
        %v1317 = vunpack.c.h.b16 %v515
        %v1318 = vunpack.c.l.b16 %v516
        %v1319 = vunpack.c.h.b16 %v516
        %v1320 = vunpack.c.l.b16 %v517
        %v1321 = vunpack.c.h.b16 %v517
        %v1322 = vunpack.c.l.b16 %v518
        %v1323 = vunpack.c.h.b16 %v518
        %v1324 = vunpack.c.l.b16 %v519
        %v1325 = vunpack.c.h.b16 %v519
        %v1326 = vunpack.c.l.b16 %v520
        %v1327 = vunpack.c.h.b16 %v520
        %v1328 = vunpack.c.l.b16 %v521
        %v1329 = vunpack.c.h.b16 %v521
        %v1330 = vunpack.c.l.b16 %v522
        %v1331 = vunpack.c.h.b16 %v522
        %v1332 = vunpack.c.l.b16 %v523
        %v1333 = vunpack.c.h.b16 %v523
        %v1334 = vunpack.c.l.b16 %v524
        %v1335 = vunpack.c.h.b16 %v524
        %v1336 = vunpack.c.l.b16 %v525
        %v1337 = vunpack.c.h.b16 %v525
        %v1338 = vunpack.c.l.b16 %v526
        %v1339 = vunpack.c.h.b16 %v526
        %v1340 = vunpack.c.l.b16 %v527
        %v1341 = vunpack.c.h.b16 %v527
        %v1342 = vunpack.c.l.b16 %v528
        %v1343 = vunpack.c.h.b16 %v528
        %v1344 = vunpack.c.l.b16 %v529
        %v1345 = vunpack.c.h.b16 %v529
        %v1346 = vunpack.c.l.b16 %v530
        %v1347 = vunpack.c.h.b16 %v530
        %v1348 = vunpack.c.l.b16 %v531
        %v1349 = vunpack.c.h.b16 %v531
        %v1350 = vunpack.c.l.b16 %v532
        %v1351 = vunpack.c.h.b16 %v532
        %v1352 = vunpack.c.l.b16 %v533
        %v1353 = vunpack.c.h.b16 %v533
        %v1354 = vunpack.c.l.b16 %v534
        %v1355 = vunpack.c.h.b16 %v534
        %v1356 = vunpack.c.l.b16 %v535
        %v1357 = vunpack.c.h.b16 %v535
        %v1358 = vunpack.c.l.b16 %v536
        %v1359 = vunpack.c.h.b16 %v536
        %v1360 = vunpack.c.l.b16 %v537
        %v1361 = vunpack.c.h.b16 %v537
        %v1362 = vunpack.c.l.b16 %v538
        %v1363 = vunpack.c.h.b16 %v538
        %v1364 = vunpack.c.l.b16 %v539
        %v1365 = vunpack.c.h.b16 %v539
        %v1366 = vunpack.c.l.b16 %v540
        %v1367 = vunpack.c.h.b16 %v540
        %v1368 = vunpack.c.l.b16 %v541
        %v1369 = vunpack.c.h.b16 %v541
        %v1370 = vunpack.c.l.b16 %v542
        %v1371 = vunpack.c.h.b16 %v542
        %v1372 = vunpack.c.l.b16 %v543
        %v1373 = vunpack.c.h.b16 %v543
        %v1374 = vunpack.c.l.b16 %v544
        %v1375 = vunpack.c.h.b16 %v544
        %v1376 = vunpack.c.l.b16 %v545
        %v1377 = vunpack.c.h.b16 %v545
        %v1378 = vunpack.c.l.b16 %v546
        %v1379 = vunpack.c.h.b16 %v546
        %v1380 = vunpack.c.l.b16 %v547
        %v1381 = vunpack.c.h.b16 %v547
        %v1382 = vunpack.c.l.b16 %v548
        %v1383 = vunpack.c.h.b16 %v548
        %v1384 = vunpack.c.l.b16 %v549
        %v1385 = vunpack.c.h.b16 %v549
        %v1386 = vunpack.c.l.b16 %v550
        %v1387 = vunpack.c.h.b16 %v550
        %v1388 = vunpack.c.l.b16 %v551
        %v1389 = vunpack.c.h.b16 %v551
        %v1390 = vunpack.c.l.b16 %v552
        %v1391 = vunpack.c.h.b16 %v552
        %v1392 = vunpack.c.l.b16 %v553
        %v1393 = vunpack.c.h.b16 %v553
        %v1394 = vunpack.c.l.b16 %v554
        %v1395 = vunpack.c.h.b16 %v554
        %v1396 = vunpack.c.l.b16 %v555
        %v1397 = vunpack.c.h.b16 %v555
        %v1398 = vunpack.c.l.b16 %v556
        %v1399 = vunpack.c.h.b16 %v556
        %v1400 = vunpack.c.l.b16 %v557
        %v1401 = vunpack.c.h.b16 %v557
        %v1402 = vunpack.c.l.b16 %v558
        %v1403 = vunpack.c.h.b16 %v558
        %v1404 = vunpack.c.l.b16 %v559
        %v1405 = vunpack.c.h.b16 %v559
        %v1406 = vunpack.c.l.b16 %v560
        %v1407 = vunpack.c.h.b16 %v560
        %v1408 = vunpack.c.l.b16 %v561
        %v1409 = vunpack.c.h.b16 %v561
        %v1410 = vunpack.c.l.b16 %v562
        %v1411 = vunpack.c.h.b16 %v562
        %v1412 = vunpack.c.l.b16 %v563
        %v1413 = vunpack.c.h.b16 %v563
        %v1414 = vunpack.c.l.b16 %v564
        %v1415 = vunpack.c.h.b16 %v564
        %v1416 = vunpack.c.l.b16 %v565
        %v1417 = vunpack.c.h.b16 %v565
        %v1418 = vunpack.c.l.b16 %v566
        %v1419 = vunpack.c.h.b16 %v566
        %v1420 = vunpack.c.l.b16 %v567
        %v1421 = vunpack.c.h.b16 %v567
        %v1422 = vunpack.c.l.b16 %v568
        %v1423 = vunpack.c.h.b16 %v568
        %v1424 = vunpack.c.l.b16 %v569
        %v1425 = vunpack.c.h.b16 %v569
        %v1426 = vunpack.c.l.b16 %v570
        %v1427 = vunpack.c.h.b16 %v570
        %v1428 = vunpack.c.l.b16 %v571
        %v1429 = vunpack.c.h.b16 %v571
        %v1430 = vunpack.c.l.b16 %v572
        %v1431 = vunpack.c.h.b16 %v572
        %v1432 = vunpack.c.l.b16 %v573
        %v1433 = vunpack.c.h.b16 %v573
        %v1434 = vunpack.c.l.b16 %v574
        %v1435 = vunpack.c.h.b16 %v574
        %v1436 = vunpack.c.l.b16 %v575
        %v1437 = vunpack.c.h.b16 %v575
        %v1438 = vunpack.c.l.b16 %v576
        %v1439 = vunpack.c.h.b16 %v576
        %v1440 = vunpack.c.l.b16 %v577
        %v1441 = vunpack.c.h.b16 %v577
        %v1442 = vunpack.c.l.b16 %v578
        %v1443 = vunpack.c.h.b16 %v578
        %v1444 = vunpack.c.l.b16 %v579
        %v1445 = vunpack.c.h.b16 %v579
        %v1446 = vunpack.c.l.b16 %v580
        %v1447 = vunpack.c.h.b16 %v580
        %v1448 = vunpack.c.l.b16 %v581
        %v1449 = vunpack.c.h.b16 %v581
        %v1450 = vunpack.c.l.b16 %v582
        %v1451 = vunpack.c.h.b16 %v582
        %v1452 = vunpack.c.l.b16 %v583
        %v1453 = vunpack.c.h.b16 %v583
        %v1454 = vunpack.c.l.b16 %v584
        %v1455 = vunpack.c.h.b16 %v584
        %v1456 = vunpack.c.l.b16 %v585
        %v1457 = vunpack.c.h.b16 %v585
        %v1458 = vunpack.c.l.b16 %v586
        %v1459 = vunpack.c.h.b16 %v586
        %v1460 = vunpack.c.l.b16 %v587
        %v1461 = vunpack.c.h.b16 %v587
        %v1462 = vunpack.c.l.b16 %v588
        %v1463 = vunpack.c.h.b16 %v588
        %v1464 = vunpack.c.l.b16 %v589
        %v1465 = vunpack.c.h.b16 %v589
        %v1466 = vunpack.c.l.b16 %v590
        %v1467 = vunpack.c.h.b16 %v590
        %v1468 = vunpack.c.l.b16 %v591
        %v1469 = vunpack.c.h.b16 %v591
        %v1470 = vunpack.c.l.b16 %v592
        %v1471 = vunpack.c.h.b16 %v592
        %v1472 = vunpack.c.l.b16 %v593
        %v1473 = vunpack.c.h.b16 %v593
        %v1474 = vunpack.c.l.b16 %v594
        %v1475 = vunpack.c.h.b16 %v594
        %v1476 = vunpack.c.l.b16 %v595
        %v1477 = vunpack.c.h.b16 %v595
        %v1478 = vunpack.c.l.b16 %v596
        %v1479 = vunpack.c.h.b16 %v596
        %v1480 = vunpack.c.l.b16 %v597
        %v1481 = vunpack.c.h.b16 %v597
        %v1482 = vunpack.c.l.b16 %v598
        %v1483 = vunpack.c.h.b16 %v598
        %v1484 = vunpack.c.l.b16 %v599
        %v1485 = vunpack.c.h.b16 %v599
        %v1486 = vunpack.c.l.b16 %v600
        %v1487 = vunpack.c.h.b16 %v600
        %v1488 = vunpack.c.l.b16 %v601
        %v1489 = vunpack.c.h.b16 %v601
        %v1490 = vunpack.c.l.b16 %v602
        %v1491 = vunpack.c.h.b16 %v602
        %v1492 = vunpack.c.l.b16 %v603
        %v1493 = vunpack.c.h.b16 %v603
        %v1494 = vunpack.c.l.b16 %v604
        %v1495 = vunpack.c.h.b16 %v604
        %v1496 = vunpack.c.l.b16 %v605
        %v1497 = vunpack.c.h.b16 %v605
        %v1498 = vunpack.c.l.b16 %v606
        %v1499 = vunpack.c.h.b16 %v606
        %v1500 = vunpack.c.l.b16 %v607
        %v1501 = vunpack.c.h.b16 %v607
        %v1502 = vunpack.c.l.b16 %v608
        %v1503 = vunpack.c.h.b16 %v608
        %v1504 = vunpack.c.l.b16 %v609
        %v1505 = vunpack.c.h.b16 %v609
        %v1506 = vunpack.c.l.b16 %v610
        %v1507 = vunpack.c.h.b16 %v610
        %v1508 = vunpack.c.l.b16 %v611
        %v1509 = vunpack.c.h.b16 %v611
        %v1510 = vunpack.c.l.b16 %v612
        %v1511 = vunpack.c.h.b16 %v612
        %v1512 = vunpack.c.l.b16 %v613
        %v1513 = vunpack.c.h.b16 %v613
        %v1514 = vunpack.c.l.b16 %v614
        %v1515 = vunpack.c.h.b16 %v614
        %v1516 = vunpack.c.l.b16 %v615
        %v1517 = vunpack.c.h.b16 %v615
        %v1518 = vunpack.c.l.b16 %v616
        %v1519 = vunpack.c.h.b16 %v616
        %v1520 = vunpack.c.l.b16 %v617
        %v1521 = vunpack.c.h.b16 %v617
        %v1522 = vunpack.c.l.b16 %v618
        %v1523 = vunpack.c.h.b16 %v618
        %v1524 = vunpack.c.l.b16 %v619
        %v1525 = vunpack.c.h.b16 %v619
        %v1526 = vunpack.c.l.b16 %v620
        %v1527 = vunpack.c.h.b16 %v620
        %v1528 = vunpack.c.l.b16 %v621
        %v1529 = vunpack.c.h.b16 %v621
        %v1530 = vunpack.c.l.b16 %v622
        %v1531 = vunpack.c.h.b16 %v622
        %v1532 = vunpack.c.l.b16 %v623
        %v1533 = vunpack.c.h.b16 %v623
        %v1534 = vunpack.c.l.b16 %v624
        %v1535 = vunpack.c.h.b16 %v624
        %v1536 = vunpack.c.l.b16 %v625
        %v1537 = vunpack.c.h.b16 %v625
        %v1538 = vunpack.c.l.b16 %v626
        %v1539 = vunpack.c.h.b16 %v626
        %v1540 = vunpack.c.l.b16 %v627
        %v1541 = vunpack.c.h.b16 %v627
        %v1542 = vunpack.c.l.b16 %v628
        %v1543 = vunpack.c.h.b16 %v628
        %v1544 = vunpack.c.l.b16 %v629
        %v1545 = vunpack.c.h.b16 %v629
        %v1546 = vunpack.c.l.b16 %v630
        %v1547 = vunpack.c.h.b16 %v630
        %v1548 = vunpack.c.l.b16 %v631
        %v1549 = vunpack.c.h.b16 %v631
        %v1550 = vunpack.c.l.b16 %v632
        %v1551 = vunpack.c.h.b16 %v632
        %v1552 = vunpack.c.l.b16 %v633
        %v1553 = vunpack.c.h.b16 %v633
        %v1554 = vunpack.c.l.b16 %v634
        %v1555 = vunpack.c.h.b16 %v634
        %v1556 = vunpack.c.l.b16 %v635
        %v1557 = vunpack.c.h.b16 %v635
        %v1558 = vunpack.c.l.b16 %v636
        %v1559 = vunpack.c.h.b16 %v636
        %v1560 = vunpack.c.l.b16 %v637
        %v1561 = vunpack.c.h.b16 %v637
        %v1562 = vunpack.c.l.b16 %v638
        %v1563 = vunpack.c.h.b16 %v638
        %v1564 = vunpack.c.l.b16 %v639
        %v1565 = vunpack.c.h.b16 %v639
        %v1566 = vunpack.c.l.b16 %v640
        %v1567 = vunpack.c.h.b16 %v640
        %v1568 = vunpack.c.l.b16 %v641
        %v1569 = vunpack.c.h.b16 %v641
        %v1570 = vunpack.c.l.b16 %v642
        %v1571 = vunpack.c.h.b16 %v642
        %v1572 = vunpack.c.l.b16 %v643
        %v1573 = vunpack.c.h.b16 %v643
        %v1574 = vunpack.c.l.b16 %v644
        %v1575 = vunpack.c.h.b16 %v644
        %v1576 = vunpack.c.l.b16 %v645
        %v1577 = vunpack.c.h.b16 %v645
        %v1578 = vunpack.c.l.b16 %v646
        %v1579 = vunpack.c.h.b16 %v646
        %v1580 = vunpack.c.l.b16 %v647
        %v1581 = vunpack.c.h.b16 %v647
        %v1582 = vunpack.c.l.b16 %v648
        %v1583 = vunpack.c.h.b16 %v648
        %v1584 = vunpack.c.l.b16 %v649
        %v1585 = vunpack.c.h.b16 %v649
        %v1586 = vunpack.c.l.b16 %v650
        %v1587 = vunpack.c.h.b16 %v650
        %v1588 = vunpack.c.l.b16 %v651
        %v1589 = vunpack.c.h.b16 %v651
        %v1590 = vunpack.c.l.b16 %v652
        %v1591 = vunpack.c.h.b16 %v652
        %v1592 = vunpack.c.l.b16 %v653
        %v1593 = vunpack.c.h.b16 %v653
        %v1594 = vunpack.c.l.b16 %v654
        %v1595 = vunpack.c.h.b16 %v654
        %v1596 = vunpack.c.l.b16 %v655
        %v1597 = vunpack.c.h.b16 %v655
        %v1598 = vunpack.c.l.b16 %v656
        %v1599 = vunpack.c.h.b16 %v656
        %v1600 = vunpack.c.l.b16 %v657
        %v1601 = vunpack.c.h.b16 %v657
        %v1602 = vunpack.c.l.b16 %v658
        %v1603 = vunpack.c.h.b16 %v658
        %v1604 = vunpack.c.l.b16 %v659
        %v1605 = vunpack.c.h.b16 %v659
        %v1606 = vunpack.c.l.b16 %v660
        %v1607 = vunpack.c.h.b16 %v660
        %v1608 = vunpack.c.l.b16 %v661
        %v1609 = vunpack.c.h.b16 %v661
        %v1610 = vunpack.c.l.b16 %v662
        %v1611 = vunpack.c.h.b16 %v662
        %v1612 = vunpack.c.l.b16 %v663
        %v1613 = vunpack.c.h.b16 %v663
        %v1614 = vunpack.c.l.b16 %v664
        %v1615 = vunpack.c.h.b16 %v664
        %v1616 = vunpack.c.l.b16 %v665
        %v1617 = vunpack.c.h.b16 %v665
        %v1618 = vunpack.c.l.b16 %v666
        %v1619 = vunpack.c.h.b16 %v666
        %v1620 = vunpack.c.l.b16 %v667
        %v1621 = vunpack.c.h.b16 %v667
        %v1622 = vunpack.c.l.b16 %v668
        %v1623 = vunpack.c.h.b16 %v668
        %v1624 = vunpack.c.l.b16 %v669
        %v1625 = vunpack.c.h.b16 %v669
        %v1626 = vunpack.c.l.b16 %v670
        %v1627 = vunpack.c.h.b16 %v670
        %v1628 = vunpack.c.l.b16 %v671
        %v1629 = vunpack.c.h.b16 %v671
        %v1630 = vunpack.c.l.b16 %v672
        %v1631 = vunpack.c.h.b16 %v672
        %v1632 = vunpack.c.l.b16 %v673
        %v1633 = vunpack.c.h.b16 %v673
        %v1634 = vunpack.c.l.b16 %v674
        %v1635 = vunpack.c.h.b16 %v674
        %v1636 = vunpack.c.l.b16 %v675
        %v1637 = vunpack.c.h.b16 %v675
        %v1638 = vunpack.c.l.b16 %v676
        %v1639 = vunpack.c.h.b16 %v676
        %v1640 = vunpack.c.l.b16 %v677
        %v1641 = vunpack.c.h.b16 %v677
        %v1642 = vunpack.c.l.b16 %v678
        %v1643 = vunpack.c.h.b16 %v678
        %v1644 = vunpack.c.l.b16 %v679
        %v1645 = vunpack.c.h.b16 %v679
        %v1646 = vunpack.c.l.b16 %v680
        %v1647 = vunpack.c.h.b16 %v680
        %v1648 = vunpack.c.l.b16 %v681
        %v1649 = vunpack.c.h.b16 %v681
        %v1650 = vunpack.c.l.b16 %v682
        %v1651 = vunpack.c.h.b16 %v682
        %v1652 = vunpack.c.l.b16 %v683
        %v1653 = vunpack.c.h.b16 %v683
        %v1654 = vunpack.c.l.b16 %v684
        %v1655 = vunpack.c.h.b16 %v684
        %v1656 = vunpack.c.l.b16 %v685
        %v1657 = vunpack.c.h.b16 %v685
        %v1658 = vunpack.c.l.b16 %v686
        %v1659 = vunpack.c.h.b16 %v686
        %v1660 = vunpack.c.l.b16 %v687
        %v1661 = vunpack.c.h.b16 %v687
        %v1662 = vunpack.c.l.b16 %v688
        %v1663 = vunpack.c.h.b16 %v688
        %v1664 = vunpack.c.l.b16 %v689
        %v1665 = vunpack.c.h.b16 %v689
        %v1666 = vunpack.c.l.b16 %v690
        %v1667 = vunpack.c.h.b16 %v690
        %v1668 = vunpack.c.l.b16 %v691
        %v1669 = vunpack.c.h.b16 %v691
        %v1670 = vunpack.c.l.b16 %v692
        %v1671 = vunpack.c.h.b16 %v692
        %v1672 = vunpack.c.l.b16 %v693
        %v1673 = vunpack.c.h.b16 %v693
        %v1674 = vunpack.c.l.b16 %v694
        %v1675 = vunpack.c.h.b16 %v694
        %v1676 = vunpack.c.l.b16 %v695
        %v1677 = vunpack.c.h.b16 %v695
        %v1678 = vunpack.c.l.b16 %v696
        %v1679 = vunpack.c.h.b16 %v696
        %v1680 = vunpack.c.l.b16 %v697
        %v1681 = vunpack.c.h.b16 %v697
        %v1682 = vunpack.c.l.b16 %v698
        %v1683 = vunpack.c.h.b16 %v698
        %v1684 = vunpack.c.l.b16 %v699
        %v1685 = vunpack.c.h.b16 %v699
        %v1686 = vunpack.c.l.b16 %v700
        %v1687 = vunpack.c.h.b16 %v700
        %v1688 = vunpack.c.l.b16 %v701
        %v1689 = vunpack.c.h.b16 %v701
        %v1690 = vunpack.c.l.b16 %v702
        %v1691 = vunpack.c.h.b16 %v702
        %v1692 = vunpack.c.l.b16 %v703
        %v1693 = vunpack.c.h.b16 %v703
        %v1694 = vunpack.c.l.b16 %v704
        %v1695 = vunpack.c.h.b16 %v704
        %v1696 = vunpack.c.l.b16 %v705
        %v1697 = vunpack.c.h.b16 %v705
        %v1698 = vunpack.c.l.b16 %v706
        %v1699 = vunpack.c.h.b16 %v706
        %v1700 = vunpack.c.l.b16 %v707
        %v1701 = vunpack.c.h.b16 %v707
        %v1702 = vunpack.c.l.b16 %v708
        %v1703 = vunpack.c.h.b16 %v708
        %v1704 = vunpack.c.l.b16 %v709
        %v1705 = vunpack.c.h.b16 %v709
        %v1706 = vunpack.c.l.b16 %v710
        %v1707 = vunpack.c.h.b16 %v710
        %v1708 = vunpack.c.l.b16 %v711
        %v1709 = vunpack.c.h.b16 %v711
        %v1710 = vunpack.c.l.b16 %v712
        %v1711 = vunpack.c.h.b16 %v712
        %v1712 = vunpack.c.l.b16 %v713
        %v1713 = vunpack.c.h.b16 %v713
        %v1714 = vunpack.c.l.b16 %v714
        %v1715 = vunpack.c.h.b16 %v714
        %v1716 = vunpack.c.l.b16 %v715
        %v1717 = vunpack.c.h.b16 %v715
        %v1718 = vunpack.c.l.b16 %v716
        %v1719 = vunpack.c.h.b16 %v716
        %v1720 = vunpack.c.l.b16 %v717
        %v1721 = vunpack.c.h.b16 %v717
        %v1722 = vunpack.c.l.b16 %v718
        %v1723 = vunpack.c.h.b16 %v718
        %v1724 = vpack.c.b16 %v1092, %v1084
        %v1725 = vpack.c.b16 %v1093, %v1085
        %v1726 = vpack.c.b16 %v1094, %v1086
        %v1727 = vpack.c.b16 %v1095, %v1087
        %v1728 = vpack.c.b16 %v1096, %v1088
        %v1729 = vpack.c.b16 %v1097, %v1089
        %v1730 = vpack.c.b16 %v1098, %v1090
        %v1731 = vpack.c.b16 %v1099, %v1091
        %v1732 = vpack.c.b16 %v1108, %v1100
        %v1733 = vpack.c.b16 %v1109, %v1101
        %v1734 = vpack.c.b16 %v1110, %v1102
        %v1735 = vpack.c.b16 %v1111, %v1103
        %v1736 = vpack.c.b16 %v1112, %v1104
        %v1737 = vpack.c.b16 %v1113, %v1105
        %v1738 = vpack.c.b16 %v1114, %v1106
        %v1739 = vpack.c.b16 %v1115, %v1107
        %v1740 = vpack.c.b16 %v1124, %v1116
        %v1741 = vpack.c.b16 %v1125, %v1117
        %v1742 = vpack.c.b16 %v1126, %v1118
        %v1743 = vpack.c.b16 %v1127, %v1119
        %v1744 = vpack.c.b16 %v1128, %v1120
        %v1745 = vpack.c.b16 %v1129, %v1121
        %v1746 = vpack.c.b16 %v1130, %v1122
        %v1747 = vpack.c.b16 %v1131, %v1123
        %v1748 = vpack.c.b16 %v1140, %v1132
        %v1749 = vpack.c.b16 %v1141, %v1133
        %v1750 = vpack.c.b16 %v1142, %v1134
        %v1751 = vpack.c.b16 %v1143, %v1135
        %v1752 = vpack.c.b16 %v1144, %v1136
        %v1753 = vpack.c.b16 %v1145, %v1137
        %v1754 = vpack.c.b16 %v1146, %v1138
        %v1755 = vpack.c.b16 %v1147, %v1139
        %v1756 = vpack.c.b16 %v1156, %v1148
        %v1757 = vpack.c.b16 %v1157, %v1149
        %v1758 = vpack.c.b16 %v1158, %v1150
        %v1759 = vpack.c.b16 %v1159, %v1151
        %v1760 = vpack.c.b16 %v1160, %v1152
        %v1761 = vpack.c.b16 %v1161, %v1153
        %v1762 = vpack.c.b16 %v1162, %v1154
        %v1763 = vpack.c.b16 %v1163, %v1155
        %v1764 = vpack.c.b16 %v1172, %v1164
        %v1765 = vpack.c.b16 %v1173, %v1165
        %v1766 = vpack.c.b16 %v1174, %v1166
        %v1767 = vpack.c.b16 %v1175, %v1167
        %v1768 = vpack.c.b16 %v1176, %v1168
        %v1769 = vpack.c.b16 %v1177, %v1169
        %v1770 = vpack.c.b16 %v1178, %v1170
        %v1771 = vpack.c.b16 %v1179, %v1171
        %v1772 = vpack.c.b16 %v1188, %v1180
        %v1773 = vpack.c.b16 %v1189, %v1181
        %v1774 = vpack.c.b16 %v1190, %v1182
        %v1775 = vpack.c.b16 %v1191, %v1183
        %v1776 = vpack.c.b16 %v1192, %v1184
        %v1777 = vpack.c.b16 %v1193, %v1185
        %v1778 = vpack.c.b16 %v1194, %v1186
        %v1779 = vpack.c.b16 %v1195, %v1187
        %v1780 = vpack.c.b16 %v1204, %v1196
        %v1781 = vpack.c.b16 %v1205, %v1197
        %v1782 = vpack.c.b16 %v1206, %v1198
        %v1783 = vpack.c.b16 %v1207, %v1199
        %v1784 = vpack.c.b16 %v1208, %v1200
        %v1785 = vpack.c.b16 %v1209, %v1201
        %v1786 = vpack.c.b16 %v1210, %v1202
        %v1787 = vpack.c.b16 %v1211, %v1203
        %v1788 = vpack.c.b16 %v1220, %v1212
        %v1789 = vpack.c.b16 %v1221, %v1213
        %v1790 = vpack.c.b16 %v1222, %v1214
        %v1791 = vpack.c.b16 %v1223, %v1215
        %v1792 = vpack.c.b16 %v1224, %v1216
        %v1793 = vpack.c.b16 %v1225, %v1217
        %v1794 = vpack.c.b16 %v1226, %v1218
        %v1795 = vpack.c.b16 %v1227, %v1219
        %v1796 = vpack.c.b16 %v1236, %v1228
        %v1797 = vpack.c.b16 %v1237, %v1229
        %v1798 = vpack.c.b16 %v1238, %v1230
        %v1799 = vpack.c.b16 %v1239, %v1231
        %v1800 = vpack.c.b16 %v1240, %v1232
        %v1801 = vpack.c.b16 %v1241, %v1233
        %v1802 = vpack.c.b16 %v1242, %v1234
        %v1803 = vpack.c.b16 %v1243, %v1235
        %v1804 = vpack.c.b16 %v1252, %v1244
        %v1805 = vpack.c.b16 %v1253, %v1245
        %v1806 = vpack.c.b16 %v1254, %v1246
        %v1807 = vpack.c.b16 %v1255, %v1247
        %v1808 = vpack.c.b16 %v1256, %v1248
        %v1809 = vpack.c.b16 %v1257, %v1249
        %v1810 = vpack.c.b16 %v1258, %v1250
        %v1811 = vpack.c.b16 %v1259, %v1251
        %v1812 = vpack.c.b16 %v1268, %v1260
        %v1813 = vpack.c.b16 %v1269, %v1261
        %v1814 = vpack.c.b16 %v1270, %v1262
        %v1815 = vpack.c.b16 %v1271, %v1263
        %v1816 = vpack.c.b16 %v1272, %v1264
        %v1817 = vpack.c.b16 %v1273, %v1265
        %v1818 = vpack.c.b16 %v1274, %v1266
        %v1819 = vpack.c.b16 %v1275, %v1267
        %v1820 = vpack.c.b16 %v1284, %v1276
        %v1821 = vpack.c.b16 %v1285, %v1277
        %v1822 = vpack.c.b16 %v1286, %v1278
        %v1823 = vpack.c.b16 %v1287, %v1279
        %v1824 = vpack.c.b16 %v1288, %v1280
        %v1825 = vpack.c.b16 %v1289, %v1281
        %v1826 = vpack.c.b16 %v1290, %v1282
        %v1827 = vpack.c.b16 %v1291, %v1283
        %v1828 = vpack.c.b16 %v1300, %v1292
        %v1829 = vpack.c.b16 %v1301, %v1293
        %v1830 = vpack.c.b16 %v1302, %v1294
        %v1831 = vpack.c.b16 %v1303, %v1295
        %v1832 = vpack.c.b16 %v1304, %v1296
        %v1833 = vpack.c.b16 %v1305, %v1297
        %v1834 = vpack.c.b16 %v1306, %v1298
        %v1835 = vpack.c.b16 %v1307, %v1299
        %v1836 = vpack.c.b16 %v1316, %v1308
        %v1837 = vpack.c.b16 %v1317, %v1309
        %v1838 = vpack.c.b16 %v1318, %v1310
        %v1839 = vpack.c.b16 %v1319, %v1311
        %v1840 = vpack.c.b16 %v1320, %v1312
        %v1841 = vpack.c.b16 %v1321, %v1313
        %v1842 = vpack.c.b16 %v1322, %v1314
        %v1843 = vpack.c.b16 %v1323, %v1315
        %v1844 = vpack.c.b16 %v1332, %v1324
        %v1845 = vpack.c.b16 %v1333, %v1325
        %v1846 = vpack.c.b16 %v1334, %v1326
        %v1847 = vpack.c.b16 %v1335, %v1327
        %v1848 = vpack.c.b16 %v1336, %v1328
        %v1849 = vpack.c.b16 %v1337, %v1329
        %v1850 = vpack.c.b16 %v1338, %v1330
        %v1851 = vpack.c.b16 %v1339, %v1331
        %v1852 = vpack.c.b16 %v1348, %v1340
        %v1853 = vpack.c.b16 %v1349, %v1341
        %v1854 = vpack.c.b16 %v1350, %v1342
        %v1855 = vpack.c.b16 %v1351, %v1343
        %v1856 = vpack.c.b16 %v1352, %v1344
        %v1857 = vpack.c.b16 %v1353, %v1345
        %v1858 = vpack.c.b16 %v1354, %v1346
        %v1859 = vpack.c.b16 %v1355, %v1347
        %v1860 = vpack.c.b16 %v1364, %v1356
        %v1861 = vpack.c.b16 %v1365, %v1357
        %v1862 = vpack.c.b16 %v1366, %v1358
        %v1863 = vpack.c.b16 %v1367, %v1359
        %v1864 = vpack.c.b16 %v1368, %v1360
        %v1865 = vpack.c.b16 %v1369, %v1361
        %v1866 = vpack.c.b16 %v1370, %v1362
        %v1867 = vpack.c.b16 %v1371, %v1363
        %v1868 = vpack.c.b16 %v1380, %v1372
        %v1869 = vpack.c.b16 %v1381, %v1373
        %v1870 = vpack.c.b16 %v1382, %v1374
        %v1871 = vpack.c.b16 %v1383, %v1375
        %v1872 = vpack.c.b16 %v1384, %v1376
        %v1873 = vpack.c.b16 %v1385, %v1377
        %v1874 = vpack.c.b16 %v1386, %v1378
        %v1875 = vpack.c.b16 %v1387, %v1379
        %v1876 = vpack.c.b16 %v1396, %v1388
        %v1877 = vpack.c.b16 %v1397, %v1389
        %v1878 = vpack.c.b16 %v1398, %v1390
        %v1879 = vpack.c.b16 %v1399, %v1391
        %v1880 = vpack.c.b16 %v1400, %v1392
        %v1881 = vpack.c.b16 %v1401, %v1393
        %v1882 = vpack.c.b16 %v1402, %v1394
        %v1883 = vpack.c.b16 %v1403, %v1395
        %v1884 = vpack.c.b16 %v1412, %v1404
        %v1885 = vpack.c.b16 %v1413, %v1405
        %v1886 = vpack.c.b16 %v1414, %v1406
        %v1887 = vpack.c.b16 %v1415, %v1407
        %v1888 = vpack.c.b16 %v1416, %v1408
        %v1889 = vpack.c.b16 %v1417, %v1409
        %v1890 = vpack.c.b16 %v1418, %v1410
        %v1891 = vpack.c.b16 %v1419, %v1411
        %v1892 = vpack.c.b16 %v1428, %v1420
        %v1893 = vpack.c.b16 %v1429, %v1421
        %v1894 = vpack.c.b16 %v1430, %v1422
        %v1895 = vpack.c.b16 %v1431, %v1423
        %v1896 = vpack.c.b16 %v1432, %v1424
        %v1897 = vpack.c.b16 %v1433, %v1425
        %v1898 = vpack.c.b16 %v1434, %v1426
        %v1899 = vpack.c.b16 %v1435, %v1427
        %v1900 = vpack.c.b16 %v1444, %v1436
        %v1901 = vpack.c.b16 %v1445, %v1437
        %v1902 = vpack.c.b16 %v1446, %v1438
        %v1903 = vpack.c.b16 %v1447, %v1439
        %v1904 = vpack.c.b16 %v1448, %v1440
        %v1905 = vpack.c.b16 %v1449, %v1441
        %v1906 = vpack.c.b16 %v1450, %v1442
        %v1907 = vpack.c.b16 %v1451, %v1443
        %v1908 = vpack.c.b16 %v1460, %v1452
        %v1909 = vpack.c.b16 %v1461, %v1453
        %v1910 = vpack.c.b16 %v1462, %v1454
        %v1911 = vpack.c.b16 %v1463, %v1455
        %v1912 = vpack.c.b16 %v1464, %v1456
        %v1913 = vpack.c.b16 %v1465, %v1457
        %v1914 = vpack.c.b16 %v1466, %v1458
        %v1915 = vpack.c.b16 %v1467, %v1459
        %v1916 = vpack.c.b16 %v1476, %v1468
        %v1917 = vpack.c.b16 %v1477, %v1469
        %v1918 = vpack.c.b16 %v1478, %v1470
        %v1919 = vpack.c.b16 %v1479, %v1471
        %v1920 = vpack.c.b16 %v1480, %v1472
        %v1921 = vpack.c.b16 %v1481, %v1473
        %v1922 = vpack.c.b16 %v1482, %v1474
        %v1923 = vpack.c.b16 %v1483, %v1475
        %v1924 = vpack.c.b16 %v1492, %v1484
        %v1925 = vpack.c.b16 %v1493, %v1485
        %v1926 = vpack.c.b16 %v1494, %v1486
        %v1927 = vpack.c.b16 %v1495, %v1487
        %v1928 = vpack.c.b16 %v1496, %v1488
        %v1929 = vpack.c.b16 %v1497, %v1489
        %v1930 = vpack.c.b16 %v1498, %v1490
        %v1931 = vpack.c.b16 %v1499, %v1491
        %v1932 = vpack.c.b16 %v1508, %v1500
        %v1933 = vpack.c.b16 %v1509, %v1501
        %v1934 = vpack.c.b16 %v1510, %v1502
        %v1935 = vpack.c.b16 %v1511, %v1503
        %v1936 = vpack.c.b16 %v1512, %v1504
        %v1937 = vpack.c.b16 %v1513, %v1505
        %v1938 = vpack.c.b16 %v1514, %v1506
        %v1939 = vpack.c.b16 %v1515, %v1507
        %v1940 = vpack.c.b16 %v1524, %v1516
        %v1941 = vpack.c.b16 %v1525, %v1517
        %v1942 = vpack.c.b16 %v1526, %v1518
        %v1943 = vpack.c.b16 %v1527, %v1519
        %v1944 = vpack.c.b16 %v1528, %v1520
        %v1945 = vpack.c.b16 %v1529, %v1521
        %v1946 = vpack.c.b16 %v1530, %v1522
        %v1947 = vpack.c.b16 %v1531, %v1523
        %v1948 = vpack.c.b16 %v1540, %v1532
        %v1949 = vpack.c.b16 %v1541, %v1533
        %v1950 = vpack.c.b16 %v1542, %v1534
        %v1951 = vpack.c.b16 %v1543, %v1535
        %v1952 = vpack.c.b16 %v1544, %v1536
        %v1953 = vpack.c.b16 %v1545, %v1537
        %v1954 = vpack.c.b16 %v1546, %v1538
        %v1955 = vpack.c.b16 %v1547, %v1539
        %v1956 = vpack.c.b16 %v1556, %v1548
        %v1957 = vpack.c.b16 %v1557, %v1549
        %v1958 = vpack.c.b16 %v1558, %v1550
        %v1959 = vpack.c.b16 %v1559, %v1551
        %v1960 = vpack.c.b16 %v1560, %v1552
        %v1961 = vpack.c.b16 %v1561, %v1553
        %v1962 = vpack.c.b16 %v1562, %v1554
        %v1963 = vpack.c.b16 %v1563, %v1555
        %v1964 = vpack.c.b16 %v1572, %v1564
        %v1965 = vpack.c.b16 %v1573, %v1565
        %v1966 = vpack.c.b16 %v1574, %v1566
        %v1967 = vpack.c.b16 %v1575, %v1567
        %v1968 = vpack.c.b16 %v1576, %v1568
        %v1969 = vpack.c.b16 %v1577, %v1569
        %v1970 = vpack.c.b16 %v1578, %v1570
        %v1971 = vpack.c.b16 %v1579, %v1571
        %v1972 = vpack.c.b16 %v1588, %v1580
        %v1973 = vpack.c.b16 %v1589, %v1581
        %v1974 = vpack.c.b16 %v1590, %v1582
        %v1975 = vpack.c.b16 %v1591, %v1583
        %v1976 = vpack.c.b16 %v1592, %v1584
        %v1977 = vpack.c.b16 %v1593, %v1585
        %v1978 = vpack.c.b16 %v1594, %v1586
        %v1979 = vpack.c.b16 %v1595, %v1587
        %v1980 = vpack.c.b16 %v1604, %v1596
        %v1981 = vpack.c.b16 %v1605, %v1597
        %v1982 = vpack.c.b16 %v1606, %v1598
        %v1983 = vpack.c.b16 %v1607, %v1599
        %v1984 = vpack.c.b16 %v1608, %v1600
        %v1985 = vpack.c.b16 %v1609, %v1601
        %v1986 = vpack.c.b16 %v1610, %v1602
        %v1987 = vpack.c.b16 %v1611, %v1603
        %v1988 = vpack.c.b16 %v1620, %v1612
        %v1989 = vpack.c.b16 %v1621, %v1613
        %v1990 = vpack.c.b16 %v1622, %v1614
        %v1991 = vpack.c.b16 %v1623, %v1615
        %v1992 = vpack.c.b16 %v1624, %v1616
        %v1993 = vpack.c.b16 %v1625, %v1617
        %v1994 = vpack.c.b16 %v1626, %v1618
        %v1995 = vpack.c.b16 %v1627, %v1619
        %v1996 = vpack.c.b16 %v1636, %v1628
        %v1997 = vpack.c.b16 %v1637, %v1629
        %v1998 = vpack.c.b16 %v1638, %v1630
        %v1999 = vpack.c.b16 %v1639, %v1631
        %v2000 = vpack.c.b16 %v1640, %v1632
        %v2001 = vpack.c.b16 %v1641, %v1633
        %v2002 = vpack.c.b16 %v1642, %v1634
        %v2003 = vpack.c.b16 %v1643, %v1635
        %v2004 = vpack.c.b16 %v1652, %v1644
        %v2005 = vpack.c.b16 %v1653, %v1645
        %v2006 = vpack.c.b16 %v1654, %v1646
        %v2007 = vpack.c.b16 %v1655, %v1647
        %v2008 = vpack.c.b16 %v1656, %v1648
        %v2009 = vpack.c.b16 %v1657, %v1649
        %v2010 = vpack.c.b16 %v1658, %v1650
        %v2011 = vpack.c.b16 %v1659, %v1651
        %v2012 = vpack.c.b16 %v1668, %v1660
        %v2013 = vpack.c.b16 %v1669, %v1661
        %v2014 = vpack.c.b16 %v1670, %v1662
        %v2015 = vpack.c.b16 %v1671, %v1663
        %v2016 = vpack.c.b16 %v1672, %v1664
        %v2017 = vpack.c.b16 %v1673, %v1665
        %v2018 = vpack.c.b16 %v1674, %v1666
        %v2019 = vpack.c.b16 %v1675, %v1667
        %v2020 = vpack.c.b16 %v1684, %v1676
        %v2021 = vpack.c.b16 %v1685, %v1677
        %v2022 = vpack.c.b16 %v1686, %v1678
        %v2023 = vpack.c.b16 %v1687, %v1679
        %v2024 = vpack.c.b16 %v1688, %v1680
        %v2025 = vpack.c.b16 %v1689, %v1681
        %v2026 = vpack.c.b16 %v1690, %v1682
        %v2027 = vpack.c.b16 %v1691, %v1683
        %v2028 = vpack.c.b16 %v1700, %v1692
        %v2029 = vpack.c.b16 %v1701, %v1693
        %v2030 = vpack.c.b16 %v1702, %v1694
        %v2031 = vpack.c.b16 %v1703, %v1695
        %v2032 = vpack.c.b16 %v1704, %v1696
        %v2033 = vpack.c.b16 %v1705, %v1697
        %v2034 = vpack.c.b16 %v1706, %v1698
        %v2035 = vpack.c.b16 %v1707, %v1699
        %v2036 = vpack.c.b16 %v1716, %v1708
        %v2037 = vpack.c.b16 %v1717, %v1709
        %v2038 = vpack.c.b16 %v1718, %v1710
        %v2039 = vpack.c.b16 %v1719, %v1711
        %v2040 = vpack.c.b16 %v1720, %v1712
        %v2041 = vpack.c.b16 %v1721, %v1713
        %v2042 = vpack.c.b16 %v1722, %v1714
        %v2043 = vpack.c.b16 %v1723, %v1715
        %2364 = vmatprep.subr.bf16.mxu0 %v1725
        %2365 = vmatpush1.bf16.msra.mxu0 %v1724
        %2366 = vmatprep.subr.bf16.mxu0 %v1733
        %2367 = vmatpush1.bf16.msra.mxu0 %v1732
        %2368 = vmatprep.subr.bf16.mxu0 %v1741
        %2369 = vmatpush1.bf16.msra.mxu0 %v1740
        %2370 = vmatprep.subr.bf16.mxu0 %v1749
        %2371 = vmatpush1.bf16.msra.mxu0 %v1748
        %2372 = vmatprep.subr.bf16.mxu0 %v1757
        %2373 = vmatpush1.bf16.msra.mxu0 %v1756
        %2374 = vmatprep.subr.bf16.mxu0 %v1765
        %2375 = vmatpush1.bf16.msra.mxu0 %v1764
        %2376 = vmatprep.subr.bf16.mxu0 %v1773
        %2377 = vmatpush1.bf16.msra.mxu0 %v1772
        %2378 = vmatprep.subr.bf16.mxu0 %v1781
        %2379 = vmatpush1.bf16.msra.mxu0 %v1780
        %2380 = vmatprep.subr.bf16.mxu0 %v1789
        %2381 = vmatpush1.bf16.msra.mxu0 %v1788
        %2382 = vmatprep.subr.bf16.mxu0 %v1797
        %2383 = vmatpush1.bf16.msra.mxu0 %v1796
        %2384 = vmatprep.subr.bf16.mxu0 %v1805
        %2385 = vmatpush1.bf16.msra.mxu0 %v1804
        %2386 = vmatprep.subr.bf16.mxu0 %v1813
        %2387 = vmatpush1.bf16.msra.mxu0 %v1812
        %2388 = vmatprep.subr.bf16.mxu0 %v1821
        %2389 = vmatpush1.bf16.msra.mxu0 %v1820
        %2390 = vmatprep.subr.bf16.mxu0 %v1829
        %2391 = vmatpush1.bf16.msra.mxu0 %v1828
        %2392 = vmatprep.subr.bf16.mxu0 %v1837
        %2393 = vmatpush1.bf16.msra.mxu0 %v1836
        %2394 = vmatprep.subr.bf16.mxu0 %v1845
        %2395 = vmatpush1.bf16.msra.mxu0 %v1844
        %2396 = vmatprep.mubr.bf16.mxu0 %v756
        %2397 = vmatmul.mubr.bf16.gmra.mrb[0].mxu0 %v742
        %v2398 = vpop.f32.mrb[0].mxu0
        %v2399 = vadd.f32 0.0, %v2398
        %v2400 = vpop.f32.mrb[0].mxu0
        %v2401 = vadd.f32 0.0, %v2400
        %v2402 = vpop.f32.mrb[0].mxu0
        %v2403 = vpop.f32.mrb[0].mxu0
        %2404 = vdwg.mxu0
        %2405 = vmatprep.subr.bf16.mxu0 %v1853
        %2406 = vmatpush1.bf16.msra.mxu0 %v1852
        %2407 = vmatprep.subr.bf16.mxu0 %v1861
        %2408 = vmatpush1.bf16.msra.mxu0 %v1860
        %2409 = vmatprep.subr.bf16.mxu0 %v1869
        %2410 = vmatpush1.bf16.msra.mxu0 %v1868
        %2411 = vmatprep.subr.bf16.mxu0 %v1877
        %2412 = vmatpush1.bf16.msra.mxu0 %v1876
        %2413 = vmatprep.subr.bf16.mxu0 %v1885
        %2414 = vmatpush1.bf16.msra.mxu0 %v1884
        %2415 = vmatprep.subr.bf16.mxu0 %v1893
        %2416 = vmatpush1.bf16.msra.mxu0 %v1892
        %2417 = vmatprep.subr.bf16.mxu0 %v1901
        %2418 = vmatpush1.bf16.msra.mxu0 %v1900
        %2419 = vmatprep.subr.bf16.mxu0 %v1909
        %2420 = vmatpush1.bf16.msra.mxu0 %v1908
        %2421 = vmatprep.subr.bf16.mxu0 %v1917
        %2422 = vmatpush1.bf16.msra.mxu0 %v1916
        %2423 = vmatprep.subr.bf16.mxu0 %v1925
        %2424 = vmatpush1.bf16.msra.mxu0 %v1924
        %2425 = vmatprep.subr.bf16.mxu0 %v1933
        %2426 = vmatpush1.bf16.msra.mxu0 %v1932
        %2427 = vmatprep.subr.bf16.mxu0 %v1941
        %2428 = vmatpush1.bf16.msra.mxu0 %v1940
        %2429 = vmatprep.subr.bf16.mxu0 %v1949
        %2430 = vmatpush1.bf16.msra.mxu0 %v1948
        %2431 = vmatprep.subr.bf16.mxu0 %v1957
        %2432 = vmatpush1.bf16.msra.mxu0 %v1956
        %2433 = vmatprep.subr.bf16.mxu0 %v1965
        %2434 = vmatpush1.bf16.msra.mxu0 %v1964
        %2435 = vmatprep.subr.bf16.mxu0 %v1973
        %2436 = vmatpush1.bf16.msra.mxu0 %v1972
        %2437 = vmatprep.mubr.bf16.mxu0 %v758
        %2438 = vmatmul.mubr.bf16.gmra.mrb[0].mxu0 %v757
        %v2439 = vpop.f32.mrb[0].mxu0
        %v2440 = vadd.f32 %v2399, %v2439
        %v2441 = vpop.f32.mrb[0].mxu0
        %v2442 = vadd.f32 %v2401, %v2441
        %v2443 = vpop.f32.mrb[0].mxu0
        %v2444 = vpop.f32.mrb[0].mxu0
        %2445 = vdwg.mxu0
        %2446 = vmatprep.subr.bf16.mxu0 %v1981
        %2447 = vmatpush1.bf16.msra.mxu0 %v1980
        %2448 = vmatprep.subr.bf16.mxu0 %v1989
        %2449 = vmatpush1.bf16.msra.mxu0 %v1988
        %2450 = vmatprep.subr.bf16.mxu0 %v1997
        %2451 = vmatpush1.bf16.msra.mxu0 %v1996
        %2452 = vmatprep.subr.bf16.mxu0 %v2005
        %2453 = vmatpush1.bf16.msra.mxu0 %v2004
        %2454 = vmatprep.subr.bf16.mxu0 %v2013
        %2455 = vmatpush1.bf16.msra.mxu0 %v2012
        %2456 = vmatprep.subr.bf16.mxu0 %v2021
        %2457 = vmatpush1.bf16.msra.mxu0 %v2020
        %2458 = vmatprep.subr.bf16.mxu0 %v2029
        %2459 = vmatpush1.bf16.msra.mxu0 %v2028
        %2460 = vmatprep.subr.bf16.mxu0 %v2037
        %2461 = vmatpush1.bf16.msra.mxu0 %v2036
        %2462 = vmatprep.subr.bf16.mxu0 0
        %2463 = vmatpush1.bf16.msra.mxu0 0
        %2464 = vmatprep.subr.bf16.mxu0 0
        %2465 = vmatpush1.bf16.msra.mxu0 0
        %2466 = vmatprep.subr.bf16.mxu0 0
        %2467 = vmatpush1.bf16.msra.mxu0 0
        %2468 = vmatprep.subr.bf16.mxu0 0
        %2469 = vmatpush1.bf16.msra.mxu0 0
        %2470 = vmatprep.subr.bf16.mxu0 0
        %2471 = vmatpush1.bf16.msra.mxu0 0
        %2472 = vmatprep.subr.bf16.mxu0 0
        %2473 = vmatpush1.bf16.msra.mxu0 0
        %2474 = vmatprep.subr.bf16.mxu0 0
        %2475 = vmatpush1.bf16.msra.mxu0 0
        %2476 = vmatprep.subr.bf16.mxu0 0
        %2477 = vmatpush1.bf16.msra.mxu0 0
        %2478 = vmatprep.mubr.bf16.mxu0 0
        %2479 = vmatmul.mubr.bf16.gmra.mrb[0].mxu0 %v749
        %v2480 = vpop.f32.mrb[0].mxu0
        %v2481 = vadd.f32 %v2440, %v2480
        %v2482 = vpop.f32.mrb[0].mxu0
        %v2483 = vadd.f32 %v2442, %v2482
        %v2484 = vpop.f32.mrb[0].mxu0
        %v2485 = vpop.f32.mrb[0].mxu0
        %2486 = vdwg.mxu0
        %2487 = vmatprep.subr.bf16.mxu0 %v1727
        %2488 = vmatpush1.bf16.msra.mxu0 %v1726
        %2489 = vmatprep.subr.bf16.mxu0 %v1735
        %2490 = vmatpush1.bf16.msra.mxu0 %v1734
        %2491 = vmatprep.subr.bf16.mxu0 %v1743
        %2492 = vmatpush1.bf16.msra.mxu0 %v1742
        %2493 = vmatprep.subr.bf16.mxu0 %v1751
        %2494 = vmatpush1.bf16.msra.mxu0 %v1750
        %2495 = vmatprep.subr.bf16.mxu0 %v1759
        %2496 = vmatpush1.bf16.msra.mxu0 %v1758
        %2497 = vmatprep.subr.bf16.mxu0 %v1767
        %2498 = vmatpush1.bf16.msra.mxu0 %v1766
        %2499 = vmatprep.subr.bf16.mxu0 %v1775
        %2500 = vmatpush1.bf16.msra.mxu0 %v1774
        %2501 = vmatprep.subr.bf16.mxu0 %v1783
        %2502 = vmatpush1.bf16.msra.mxu0 %v1782
        %2503 = vmatprep.subr.bf16.mxu0 %v1791
        %2504 = vmatpush1.bf16.msra.mxu0 %v1790
        %2505 = vmatprep.subr.bf16.mxu0 %v1799
        %2506 = vmatpush1.bf16.msra.mxu0 %v1798
        %2507 = vmatprep.subr.bf16.mxu0 %v1807
        %2508 = vmatpush1.bf16.msra.mxu0 %v1806
        %2509 = vmatprep.subr.bf16.mxu0 %v1815
        %2510 = vmatpush1.bf16.msra.mxu0 %v1814
        %2511 = vmatprep.subr.bf16.mxu0 %v1823
        %2512 = vmatpush1.bf16.msra.mxu0 %v1822
        %2513 = vmatprep.subr.bf16.mxu0 %v1831
        %2514 = vmatpush1.bf16.msra.mxu0 %v1830
        %2515 = vmatprep.subr.bf16.mxu0 %v1839
        %2516 = vmatpush1.bf16.msra.mxu0 %v1838
        %2517 = vmatprep.subr.bf16.mxu0 %v1847
        %2518 = vmatpush1.bf16.msra.mxu0 %v1846
        %2519 = vmatprep.mubr.bf16.mxu0 %v756
        %2520 = vmatmul.mubr.bf16.gmra.mrb[0].mxu0 %v742
        %v2521 = vpop.f32.mrb[0].mxu0
        %v2522 = vadd.f32 0.0, %v2521
        %v2523 = vpop.f32.mrb[0].mxu0
        %v2524 = vadd.f32 0.0, %v2523
        %v2525 = vpop.f32.mrb[0].mxu0
        %v2526 = vpop.f32.mrb[0].mxu0
        %2527 = vdwg.mxu0
        %2528 = vmatprep.subr.bf16.mxu0 %v1855
        %2529 = vmatpush1.bf16.msra.mxu0 %v1854
        %2530 = vmatprep.subr.bf16.mxu0 %v1863
        %2531 = vmatpush1.bf16.msra.mxu0 %v1862
        %2532 = vmatprep.subr.bf16.mxu0 %v1871
        %2533 = vmatpush1.bf16.msra.mxu0 %v1870
        %2534 = vmatprep.subr.bf16.mxu0 %v1879
        %2535 = vmatpush1.bf16.msra.mxu0 %v1878
        %2536 = vmatprep.subr.bf16.mxu0 %v1887
        %2537 = vmatpush1.bf16.msra.mxu0 %v1886
        %2538 = vmatprep.subr.bf16.mxu0 %v1895
        %2539 = vmatpush1.bf16.msra.mxu0 %v1894
        %2540 = vmatprep.subr.bf16.mxu0 %v1903
        %2541 = vmatpush1.bf16.msra.mxu0 %v1902
        %2542 = vmatprep.subr.bf16.mxu0 %v1911
        %2543 = vmatpush1.bf16.msra.mxu0 %v1910
        %2544 = vmatprep.subr.bf16.mxu0 %v1919
        %2545 = vmatpush1.bf16.msra.mxu0 %v1918
        %2546 = vmatprep.subr.bf16.mxu0 %v1927
        %2547 = vmatpush1.bf16.msra.mxu0 %v1926
        %2548 = vmatprep.subr.bf16.mxu0 %v1935
        %2549 = vmatpush1.bf16.msra.mxu0 %v1934
        %2550 = vmatprep.subr.bf16.mxu0 %v1943
        %2551 = vmatpush1.bf16.msra.mxu0 %v1942
        %2552 = vmatprep.subr.bf16.mxu0 %v1951
        %2553 = vmatpush1.bf16.msra.mxu0 %v1950
        %2554 = vmatprep.subr.bf16.mxu0 %v1959
        %2555 = vmatpush1.bf16.msra.mxu0 %v1958
        %2556 = vmatprep.subr.bf16.mxu0 %v1967
        %2557 = vmatpush1.bf16.msra.mxu0 %v1966
        %2558 = vmatprep.subr.bf16.mxu0 %v1975
        %2559 = vmatpush1.bf16.msra.mxu0 %v1974
        %2560 = vmatprep.mubr.bf16.mxu0 %v758
        %2561 = vmatmul.mubr.bf16.gmra.mrb[0].mxu0 %v757
        %v2562 = vpop.f32.mrb[0].mxu0
        %v2563 = vadd.f32 %v2522, %v2562
        %v2564 = vpop.f32.mrb[0].mxu0
        %v2565 = vadd.f32 %v2524, %v2564
        %v2566 = vpop.f32.mrb[0].mxu0
        %v2567 = vpop.f32.mrb[0].mxu0
        %2568 = vdwg.mxu0
        %2569 = vmatprep.subr.bf16.mxu0 %v1983
        %2570 = vmatpush1.bf16.msra.mxu0 %v1982
        %2571 = vmatprep.subr.bf16.mxu0 %v1991
        %2572 = vmatpush1.bf16.msra.mxu0 %v1990
        %2573 = vmatprep.subr.bf16.mxu0 %v1999
        %2574 = vmatpush1.bf16.msra.mxu0 %v1998
        %2575 = vmatprep.subr.bf16.mxu0 %v2007
        %2576 = vmatpush1.bf16.msra.mxu0 %v2006
        %2577 = vmatprep.subr.bf16.mxu0 %v2015
        %2578 = vmatpush1.bf16.msra.mxu0 %v2014
        %2579 = vmatprep.subr.bf16.mxu0 %v2023
        %2580 = vmatpush1.bf16.msra.mxu0 %v2022
        %2581 = vmatprep.subr.bf16.mxu0 %v2031
        %2582 = vmatpush1.bf16.msra.mxu0 %v2030
        %2583 = vmatprep.subr.bf16.mxu0 %v2039
        %2584 = vmatpush1.bf16.msra.mxu0 %v2038
        %2585 = vmatprep.subr.bf16.mxu0 0
        %2586 = vmatpush1.bf16.msra.mxu0 0
        %2587 = vmatprep.subr.bf16.mxu0 0
        %2588 = vmatpush1.bf16.msra.mxu0 0
        %2589 = vmatprep.subr.bf16.mxu0 0
        %2590 = vmatpush1.bf16.msra.mxu0 0
        %2591 = vmatprep.subr.bf16.mxu0 0
        %2592 = vmatpush1.bf16.msra.mxu0 0
        %2593 = vmatprep.subr.bf16.mxu0 0
        %2594 = vmatpush1.bf16.msra.mxu0 0
        %2595 = vmatprep.subr.bf16.mxu0 0
        %2596 = vmatpush1.bf16.msra.mxu0 0
        %2597 = vmatprep.subr.bf16.mxu0 0
        %2598 = vmatpush1.bf16.msra.mxu0 0
        %2599 = vmatprep.subr.bf16.mxu0 0
        %2600 = vmatpush1.bf16.msra.mxu0 0
        %2601 = vmatprep.mubr.bf16.mxu0 0
        %2602 = vmatmul.mubr.bf16.gmra.mrb[0].mxu0 %v749
        %v2603 = vpop.f32.mrb[0].mxu0
        %v2604 = vadd.f32 %v2563, %v2603
        %v2605 = vpop.f32.mrb[0].mxu0
        %v2606 = vadd.f32 %v2565, %v2605
        %v2607 = vpop.f32.mrb[0].mxu0
        %v2608 = vpop.f32.mrb[0].mxu0
        %2609 = vdwg.mxu0
        %2610 = vmatprep.subr.bf16.mxu0 %v1729
        %2611 = vmatpush1.bf16.msra.mxu0 %v1728
        %2612 = vmatprep.subr.bf16.mxu0 %v1737
        %2613 = vmatpush1.bf16.msra.mxu0 %v1736
        %2614 = vmatprep.subr.bf16.mxu0 %v1745
        %2615 = vmatpush1.bf16.msra.mxu0 %v1744
        %2616 = vmatprep.subr.bf16.mxu0 %v1753
        %2617 = vmatpush1.bf16.msra.mxu0 %v1752
        %2618 = vmatprep.subr.bf16.mxu0 %v1761
        %2619 = vmatpush1.bf16.msra.mxu0 %v1760
        %2620 = vmatprep.subr.bf16.mxu0 %v1769
        %2621 = vmatpush1.bf16.msra.mxu0 %v1768
        %2622 = vmatprep.subr.bf16.mxu0 %v1777
        %2623 = vmatpush1.bf16.msra.mxu0 %v1776
        %2624 = vmatprep.subr.bf16.mxu0 %v1785
        %2625 = vmatpush1.bf16.msra.mxu0 %v1784
        %2626 = vmatprep.subr.bf16.mxu0 %v1793
        %2627 = vmatpush1.bf16.msra.mxu0 %v1792
        %2628 = vmatprep.subr.bf16.mxu0 %v1801
        %2629 = vmatpush1.bf16.msra.mxu0 %v1800
        %2630 = vmatprep.subr.bf16.mxu0 %v1809
        %2631 = vmatpush1.bf16.msra.mxu0 %v1808
        %2632 = vmatprep.subr.bf16.mxu0 %v1817
        %2633 = vmatpush1.bf16.msra.mxu0 %v1816
        %2634 = vmatprep.subr.bf16.mxu0 %v1825
        %2635 = vmatpush1.bf16.msra.mxu0 %v1824
        %2636 = vmatprep.subr.bf16.mxu0 %v1833
        %2637 = vmatpush1.bf16.msra.mxu0 %v1832
        %2638 = vmatprep.subr.bf16.mxu0 %v1841
        %2639 = vmatpush1.bf16.msra.mxu0 %v1840
        %2640 = vmatprep.subr.bf16.mxu0 %v1849
        %2641 = vmatpush1.bf16.msra.mxu0 %v1848
        %2642 = vmatprep.mubr.bf16.mxu0 %v756
        %2643 = vmatmul.mubr.bf16.gmra.mrb[0].mxu0 %v742
        %v2644 = vpop.f32.mrb[0].mxu0
        %v2645 = vadd.f32 0.0, %v2644
        %v2646 = vpop.f32.mrb[0].mxu0
        %v2647 = vadd.f32 0.0, %v2646
        %v2648 = vpop.f32.mrb[0].mxu0
        %v2649 = vpop.f32.mrb[0].mxu0
        %2650 = vdwg.mxu0
        %2651 = vmatprep.subr.bf16.mxu0 %v1857
        %2652 = vmatpush1.bf16.msra.mxu0 %v1856
        %2653 = vmatprep.subr.bf16.mxu0 %v1865
        %2654 = vmatpush1.bf16.msra.mxu0 %v1864
        %2655 = vmatprep.subr.bf16.mxu0 %v1873
        %2656 = vmatpush1.bf16.msra.mxu0 %v1872
        %2657 = vmatprep.subr.bf16.mxu0 %v1881
        %2658 = vmatpush1.bf16.msra.mxu0 %v1880
        %2659 = vmatprep.subr.bf16.mxu0 %v1889
        %2660 = vmatpush1.bf16.msra.mxu0 %v1888
        %2661 = vmatprep.subr.bf16.mxu0 %v1897
        %2662 = vmatpush1.bf16.msra.mxu0 %v1896
        %2663 = vmatprep.subr.bf16.mxu0 %v1905
        %2664 = vmatpush1.bf16.msra.mxu0 %v1904
        %2665 = vmatprep.subr.bf16.mxu0 %v1913
        %2666 = vmatpush1.bf16.msra.mxu0 %v1912
        %2667 = vmatprep.subr.bf16.mxu0 %v1921
        %2668 = vmatpush1.bf16.msra.mxu0 %v1920
        %2669 = vmatprep.subr.bf16.mxu0 %v1929
        %2670 = vmatpush1.bf16.msra.mxu0 %v1928
        %2671 = vmatprep.subr.bf16.mxu0 %v1937
        %2672 = vmatpush1.bf16.msra.mxu0 %v1936
        %2673 = vmatprep.subr.bf16.mxu0 %v1945
        %2674 = vmatpush1.bf16.msra.mxu0 %v1944
        %2675 = vmatprep.subr.bf16.mxu0 %v1953
        %2676 = vmatpush1.bf16.msra.mxu0 %v1952
        %2677 = vmatprep.subr.bf16.mxu0 %v1961
        %2678 = vmatpush1.bf16.msra.mxu0 %v1960
        %2679 = vmatprep.subr.bf16.mxu0 %v1969
        %2680 = vmatpush1.bf16.msra.mxu0 %v1968
        %2681 = vmatprep.subr.bf16.mxu0 %v1977
        %2682 = vmatpush1.bf16.msra.mxu0 %v1976
        %2683 = vmatprep.mubr.bf16.mxu0 %v758
        %2684 = vmatmul.mubr.bf16.gmra.mrb[0].mxu0 %v757
        %v2685 = vpop.f32.mrb[0].mxu0
        %v2686 = vadd.f32 %v2645, %v2685
        %v2687 = vpop.f32.mrb[0].mxu0
        %v2688 = vadd.f32 %v2647, %v2687
        %v2689 = vpop.f32.mrb[0].mxu0
        %v2690 = vpop.f32.mrb[0].mxu0
        %2691 = vdwg.mxu0
        %2692 = vmatprep.subr.bf16.mxu0 %v1985
        %2693 = vmatpush1.bf16.msra.mxu0 %v1984
        %2694 = vmatprep.subr.bf16.mxu0 %v1993
        %2695 = vmatpush1.bf16.msra.mxu0 %v1992
        %2696 = vmatprep.subr.bf16.mxu0 %v2001
        %2697 = vmatpush1.bf16.msra.mxu0 %v2000
        %2698 = vmatprep.subr.bf16.mxu0 %v2009
        %2699 = vmatpush1.bf16.msra.mxu0 %v2008
        %2700 = vmatprep.subr.bf16.mxu0 %v2017
        %2701 = vmatpush1.bf16.msra.mxu0 %v2016
        %2702 = vmatprep.subr.bf16.mxu0 %v2025
        %2703 = vmatpush1.bf16.msra.mxu0 %v2024
        %2704 = vmatprep.subr.bf16.mxu0 %v2033
        %2705 = vmatpush1.bf16.msra.mxu0 %v2032
        %2706 = vmatprep.subr.bf16.mxu0 %v2041
        %2707 = vmatpush1.bf16.msra.mxu0 %v2040
        %2708 = vmatprep.subr.bf16.mxu0 0
        %2709 = vmatpush1.bf16.msra.mxu0 0
        %2710 = vmatprep.subr.bf16.mxu0 0
        %2711 = vmatpush1.bf16.msra.mxu0 0
        %2712 = vmatprep.subr.bf16.mxu0 0
        %2713 = vmatpush1.bf16.msra.mxu0 0
        %2714 = vmatprep.subr.bf16.mxu0 0
        %2715 = vmatpush1.bf16.msra.mxu0 0
        %2716 = vmatprep.subr.bf16.mxu0 0
        %2717 = vmatpush1.bf16.msra.mxu0 0
        %2718 = vmatprep.subr.bf16.mxu0 0
        %2719 = vmatpush1.bf16.msra.mxu0 0
        %2720 = vmatprep.subr.bf16.mxu0 0
        %2721 = vmatpush1.bf16.msra.mxu0 0
        %2722 = vmatprep.subr.bf16.mxu0 0
        %2723 = vmatpush1.bf16.msra.mxu0 0
        %2724 = vmatprep.mubr.bf16.mxu0 0
        %2725 = vmatmul.mubr.bf16.gmra.mrb[0].mxu0 %v749
        %v2726 = vpop.f32.mrb[0].mxu0
        %v2727 = vadd.f32 %v2686, %v2726
        %v2728 = vpop.f32.mrb[0].mxu0
        %v2729 = vadd.f32 %v2688, %v2728
        %v2730 = vpop.f32.mrb[0].mxu0
        %v2731 = vpop.f32.mrb[0].mxu0
        %2732 = vdwg.mxu0
        %2733 = vmatprep.subr.bf16.mxu0 %v1731
        %2734 = vmatpush1.bf16.msra.mxu0 %v1730
        %2735 = vmatprep.subr.bf16.mxu0 %v1739
        %2736 = vmatpush1.bf16.msra.mxu0 %v1738
        %2737 = vmatprep.subr.bf16.mxu0 %v1747
        %2738 = vmatpush1.bf16.msra.mxu0 %v1746
        %2739 = vmatprep.subr.bf16.mxu0 %v1755
        %2740 = vmatpush1.bf16.msra.mxu0 %v1754
        %2741 = vmatprep.subr.bf16.mxu0 %v1763
        %2742 = vmatpush1.bf16.msra.mxu0 %v1762
        %2743 = vmatprep.subr.bf16.mxu0 %v1771
        %2744 = vmatpush1.bf16.msra.mxu0 %v1770
        %2745 = vmatprep.subr.bf16.mxu0 %v1779
        %2746 = vmatpush1.bf16.msra.mxu0 %v1778
        %2747 = vmatprep.subr.bf16.mxu0 %v1787
        %2748 = vmatpush1.bf16.msra.mxu0 %v1786
        %2749 = vmatprep.subr.bf16.mxu0 %v1795
        %2750 = vmatpush1.bf16.msra.mxu0 %v1794
        %2751 = vmatprep.subr.bf16.mxu0 %v1803
        %2752 = vmatpush1.bf16.msra.mxu0 %v1802
        %2753 = vmatprep.subr.bf16.mxu0 %v1811
        %2754 = vmatpush1.bf16.msra.mxu0 %v1810
        %2755 = vmatprep.subr.bf16.mxu0 %v1819
        %2756 = vmatpush1.bf16.msra.mxu0 %v1818
        %2757 = vmatprep.subr.bf16.mxu0 %v1827
        %2758 = vmatpush1.bf16.msra.mxu0 %v1826
        %2759 = vmatprep.subr.bf16.mxu0 %v1835
        %2760 = vmatpush1.bf16.msra.mxu0 %v1834
        %2761 = vmatprep.subr.bf16.mxu0 %v1843
        %2762 = vmatpush1.bf16.msra.mxu0 %v1842
        %2763 = vmatprep.subr.bf16.mxu0 %v1851
        %2764 = vmatpush1.bf16.msra.mxu0 %v1850
        %2765 = vmatprep.mubr.bf16.mxu0 %v756
        %2766 = vmatmul.mubr.bf16.gmra.mrb[0].mxu0 %v742
        %v2767 = vpop.f32.mrb[0].mxu0
        %v2768 = vadd.f32 0.0, %v2767
        %v2769 = vpop.f32.mrb[0].mxu0
        %v2770 = vadd.f32 0.0, %v2769
        %v2771 = vpop.f32.mrb[0].mxu0
        %v2772 = vpop.f32.mrb[0].mxu0
        %2773 = vdwg.mxu0
        %2774 = vmatprep.subr.bf16.mxu0 %v1859
        %2775 = vmatpush1.bf16.msra.mxu0 %v1858
        %2776 = vmatprep.subr.bf16.mxu0 %v1867
        %2777 = vmatpush1.bf16.msra.mxu0 %v1866
        %2778 = vmatprep.subr.bf16.mxu0 %v1875
        %2779 = vmatpush1.bf16.msra.mxu0 %v1874
        %2780 = vmatprep.subr.bf16.mxu0 %v1883
        %2781 = vmatpush1.bf16.msra.mxu0 %v1882
        %2782 = vmatprep.subr.bf16.mxu0 %v1891
        %2783 = vmatpush1.bf16.msra.mxu0 %v1890
        %2784 = vmatprep.subr.bf16.mxu0 %v1899
        %2785 = vmatpush1.bf16.msra.mxu0 %v1898
        %2786 = vmatprep.subr.bf16.mxu0 %v1907
        %2787 = vmatpush1.bf16.msra.mxu0 %v1906
        %2788 = vmatprep.subr.bf16.mxu0 %v1915
        %2789 = vmatpush1.bf16.msra.mxu0 %v1914
        %2790 = vmatprep.subr.bf16.mxu0 %v1923
        %2791 = vmatpush1.bf16.msra.mxu0 %v1922
        %2792 = vmatprep.subr.bf16.mxu0 %v1931
        %2793 = vmatpush1.bf16.msra.mxu0 %v1930
        %2794 = vmatprep.subr.bf16.mxu0 %v1939
        %2795 = vmatpush1.bf16.msra.mxu0 %v1938
        %2796 = vmatprep.subr.bf16.mxu0 %v1947
        %2797 = vmatpush1.bf16.msra.mxu0 %v1946
        %2798 = vmatprep.subr.bf16.mxu0 %v1955
        %2799 = vmatpush1.bf16.msra.mxu0 %v1954
        %2800 = vmatprep.subr.bf16.mxu0 %v1963
        %2801 = vmatpush1.bf16.msra.mxu0 %v1962
        %2802 = vmatprep.subr.bf16.mxu0 %v1971
        %2803 = vmatpush1.bf16.msra.mxu0 %v1970
        %2804 = vmatprep.subr.bf16.mxu0 %v1979
        %2805 = vmatpush1.bf16.msra.mxu0 %v1978
        %2806 = vmatprep.mubr.bf16.mxu0 %v758
        %2807 = vmatmul.mubr.bf16.gmra.mrb[0].mxu0 %v757
        %v2808 = vpop.f32.mrb[0].mxu0
        %v2809 = vadd.f32 %v2768, %v2808
        %v2810 = vpop.f32.mrb[0].mxu0
        %v2811 = vadd.f32 %v2770, %v2810
        %v2812 = vpop.f32.mrb[0].mxu0
        %v2813 = vpop.f32.mrb[0].mxu0
        %2814 = vdwg.mxu0
        %2815 = vmatprep.subr.bf16.mxu0 %v1987
        %2816 = vmatpush1.bf16.msra.mxu0 %v1986
        %2817 = vmatprep.subr.bf16.mxu0 %v1995
        %2818 = vmatpush1.bf16.msra.mxu0 %v1994
        %2819 = vmatprep.subr.bf16.mxu0 %v2003
        %2820 = vmatpush1.bf16.msra.mxu0 %v2002
        %2821 = vmatprep.subr.bf16.mxu0 %v2011
        %2822 = vmatpush1.bf16.msra.mxu0 %v2010
        %2823 = vmatprep.subr.bf16.mxu0 %v2019
        %2824 = vmatpush1.bf16.msra.mxu0 %v2018
        %2825 = vmatprep.subr.bf16.mxu0 %v2027
        %2826 = vmatpush1.bf16.msra.mxu0 %v2026
        %2827 = vmatprep.subr.bf16.mxu0 %v2035
        %2828 = vmatpush1.bf16.msra.mxu0 %v2034
        %2829 = vmatprep.subr.bf16.mxu0 %v2043
        %2830 = vmatpush1.bf16.msra.mxu0 %v2042
        %2831 = vmatprep.subr.bf16.mxu0 0
        %2832 = vmatpush1.bf16.msra.mxu0 0
        %2833 = vmatprep.subr.bf16.mxu0 0
        %2834 = vmatpush1.bf16.msra.mxu0 0
        %2835 = vmatprep.subr.bf16.mxu0 0
        %2836 = vmatpush1.bf16.msra.mxu0 0
        %2837 = vmatprep.subr.bf16.mxu0 0
        %2838 = vmatpush1.bf16.msra.mxu0 0
        %2839 = vmatprep.subr.bf16.mxu0 0
        %2840 = vmatpush1.bf16.msra.mxu0 0
        %2841 = vmatprep.subr.bf16.mxu0 0
        %2842 = vmatpush1.bf16.msra.mxu0 0
        %2843 = vmatprep.subr.bf16.mxu0 0
        %2844 = vmatpush1.bf16.msra.mxu0 0
        %2845 = vmatprep.subr.bf16.mxu0 0
        %2846 = vmatpush1.bf16.msra.mxu0 0
        %2847 = vmatprep.mubr.bf16.mxu0 0
        %2848 = vmatmul.mubr.bf16.gmra.mrb[0].mxu0 %v749
        %v2849 = vpop.f32.mrb[0].mxu0
        %v2850 = vadd.f32 %v2809, %v2849
        %v2851 = vpop.f32.mrb[0].mxu0
        %v2852 = vadd.f32 %v2811, %v2851
        %v2853 = vpop.f32.mrb[0].mxu0
        %v2854 = vpop.f32.mrb[0].mxu0
        %2855 = vdwg.mxu0
        %v2864 = vcombine.low %v2481, %v2483
        %v2865 = vcombine.low %v2604, %v2606
        %v2867 = vunpack.c.l.s4 1983009808
        %v2868 = vunpack.c.0.s8 %v2867
        %v2869 = vlaneseq
        %v2870 = vshrl.u32 %v2869, 7
        %v2871 = vsub.s32 %v2868, %v2870
        %v2872 = vrot.slane %v2864, %v2871
        %v2874 = vunpack.c.l.s4 1983009808
        %v2875 = vunpack.c.0.s8 %v2874
        %v2876 = vlaneseq
        %v2877 = vshrl.u32 %v2876, 7
        %v2878 = vsub.s32 %v2875, %v2877
        %v2879 = vrot.slane %v2865, %v2878
        %v2880 = vcombine.low %v2872, %v2879
        %v2881 = vcombine.low %v2727, %v2729
        %v2882 = vcombine.low %v2850, %v2852
        %v2884 = vunpack.c.l.s4 1983009808
        %v2885 = vunpack.c.0.s8 %v2884
        %v2886 = vlaneseq
        %v2887 = vshrl.u32 %v2886, 7
        %v2888 = vsub.s32 %v2885, %v2887
        %v2889 = vrot.slane %v2881, %v2888
        %v2891 = vunpack.c.l.s4 1983009808
        %v2892 = vunpack.c.0.s8 %v2891
        %v2893 = vlaneseq
        %v2894 = vshrl.u32 %v2893, 7
        %v2895 = vsub.s32 %v2892, %v2894
        %v2896 = vrot.slane %v2882, %v2895
        %v2897 = vcombine.low %v2889, %v2896
        %v2900 = vadd.f32 %v396, %v2880
        %v2901 = vadd.f32 %v397, %v2897
        %2902 = vst [vmem:[#allocation2] sm:$0xff] %v2900
        %2903 = vst [vmem:[#allocation2 + $0x8] sm:$0xff] %v2901
        %p2904 = scmp.eq.s32.totalorder %s29, 4
        // Predicated region
        $region73: #{cnn2_forward.3} parent=47 // pred_check
          %p2905 = pneg %p2904
        $region74: #{cnn2_forward.3} parent=47 // pred_check_branch
          %2907 = sbr.rel (%p2905) target = $region76
        $region75: #{cnn2_forward.3} parent=47 // pred_region
          %v2908 = vld [vmem:[#allocation2] sm:$0xff]
          %v2909 = vld [vmem:[#allocation2 + $0x8] sm:$0xff]
          %v2910 = vld [vmem:[#allocation6] sm:$0xff]
          %v2912 = vlaneseq
          %v2913 = vshrl.u32 %v2912, 7
          %v2914 = vsub.s32 0, %v2913
          %v2915 = vrot.slane %v2910, %v2914
          %v2916 = vlaneseq
          %v2917 = vshrl.u32 %v2916, 7
          %v2918 = vsub.s32 1, %v2917
          %v2919 = vrot.slane %v2910, %v2918
          %v2920 = vlaneseq
          %v2921 = vshrl.u32 %v2920, 7
          %v2922 = vsub.s32 2, %v2921
          %v2923 = vrot.slane %v2910, %v2922
          %v2924 = vlaneseq
          %v2925 = vshrl.u32 %v2924, 7
          %v2926 = vsub.s32 3, %v2925
          %v2927 = vrot.slane %v2910, %v2926
          %v2928 = vlaneseq
          %v2929 = vshrl.u32 %v2928, 7
          %v2930 = vsub.s32 4, %v2929
          %v2931 = vrot.slane %v2910, %v2930
          %v2932 = vlaneseq
          %v2933 = vshrl.u32 %v2932, 7
          %v2934 = vsub.s32 5, %v2933
          %v2935 = vrot.slane %v2910, %v2934
          %v2936 = vlaneseq
          %v2937 = vshrl.u32 %v2936, 7
          %v2938 = vsub.s32 6, %v2937
          %v2939 = vrot.slane %v2910, %v2938
          %v2940 = vlaneseq
          %v2941 = vshrl.u32 %v2940, 7
          %v2942 = vsub.s32 7, %v2941
          %v2943 = vrot.slane %v2910, %v2942
          %v2944 = vcombine.low %v2915, %v2919
          %v2945 = vcombine.low %v2923, %v2927
          %v2947 = vunpack.c.l.s4 1983009808
          %v2948 = vunpack.c.0.s8 %v2947
          %v2949 = vlaneseq
          %v2950 = vshrl.u32 %v2949, 7
          %v2951 = vsub.s32 %v2948, %v2950
          %v2952 = vrot.slane %v2944, %v2951
          %v2954 = vunpack.c.l.s4 1983009808
          %v2955 = vunpack.c.0.s8 %v2954
          %v2956 = vlaneseq
          %v2957 = vshrl.u32 %v2956, 7
          %v2958 = vsub.s32 %v2955, %v2957
          %v2959 = vrot.slane %v2945, %v2958
          %v2960 = vcombine.low %v2952, %v2959
          %v2961 = vcombine.low %v2931, %v2935
          %v2962 = vcombine.low %v2939, %v2943
          %v2964 = vunpack.c.l.s4 1983009808
          %v2965 = vunpack.c.0.s8 %v2964
          %v2966 = vlaneseq
          %v2967 = vshrl.u32 %v2966, 7
          %v2968 = vsub.s32 %v2965, %v2967
          %v2969 = vrot.slane %v2961, %v2968
          %v2971 = vunpack.c.l.s4 1983009808
          %v2972 = vunpack.c.0.s8 %v2971
          %v2973 = vlaneseq
          %v2974 = vshrl.u32 %v2973, 7
          %v2975 = vsub.s32 %v2972, %v2974
          %v2976 = vrot.slane %v2962, %v2975
          %v2977 = vcombine.low %v2969, %v2976
          %v2980 = vadd.f32 %v2908, %v2960
          %v2981 = vadd.f32 %v2909, %v2977
          %v2982 = vsub.f32 0.0, %v2980
          %v2983 = vsub.f32 0.0, %v2981
          %v2984 = vmul.f32 %v2982, 1.442695
          %v2985 = vpow.pop %v2984
          %v2986 = vmul.f32 %v2983, 1.442695
          %v2987 = vpow.pop %v2986
          %v2988 = vadd.f32 %v2985, 1.0
          %v2989 = vadd.f32 %v2987, 1.0
          %v2990 = vrcp.pop %v2988
          %v2991 = vrcp.pop %v2989
          %v2994 = vcombine.high %v2990, %v2990
          %v2996 = vunpack.c.l.s4 1983009808
          %v2997 = vunpack.c.0.s8 %v2996
          %v2998 = vlaneseq
          %v2999 = vshrl.u32 %v2998, 7
          %v3000 = vsub.s32 %v2997, %v2999
          %v3001 = vrot.slane %v2990, %v3000
          %v3003 = vunpack.c.l.s4 1983009808
          %v3004 = vunpack.c.0.s8 %v3003
          %v3005 = vlaneseq
          %v3006 = vshrl.u32 %v3005, 7
          %v3007 = vsub.s32 %v3004, %v3006
          %v3008 = vrot.slane %v2994, %v3007
          %v3009 = vcombine.high %v3001, %v3001
          %v3010 = vcombine.high %v3008, %v3008
          %v3011 = vcombine.high %v2991, %v2991
          %v3013 = vunpack.c.l.s4 1983009808
          %v3014 = vunpack.c.0.s8 %v3013
          %v3015 = vlaneseq
          %v3016 = vshrl.u32 %v3015, 7
          %v3017 = vsub.s32 %v3014, %v3016
          %v3018 = vrot.slane %v2991, %v3017
          %v3020 = vunpack.c.l.s4 1983009808
          %v3021 = vunpack.c.0.s8 %v3020
          %v3022 = vlaneseq
          %v3023 = vshrl.u32 %v3022, 7
          %v3024 = vsub.s32 %v3021, %v3023
          %v3025 = vrot.slane %v3011, %v3024
          %v3026 = vcombine.high %v3018, %v3018
          %v3027 = vcombine.high %v3025, %v3025
          %v3036 = vpack.c.bf16 %v3001, %v3001
          %v3037 = vpack.c.bf16 %v3009, %v3009
          %v3038 = vpack.c.bf16 %v3008, %v3008
          %v3039 = vpack.c.bf16 %v3010, %v3010
          %v3040 = vpack.c.bf16 %v3018, %v3018
          %v3041 = vpack.c.bf16 %v3026, %v3026
          %v3042 = vpack.c.bf16 %v3025, %v3025
          %v3043 = vpack.c.bf16 %v3027, %v3027
          %v3044 = vld [vmem:[#allocation8] sm:$0xff]
          %v3045 = vld [vmem:[#allocation8 + $0x8] sm:$0xff]
          %v3046 = vld [vmem:[#allocation8 + $0x10] sm:$0xff]
          %v3047 = vld [vmem:[#allocation8 + $0x18] sm:$0xff]
          %v3048 = vld [vmem:[#allocation8 + $0x20] sm:$0xff]
          %v3049 = vld [vmem:[#allocation8 + $0x28] sm:$0xff]
          %v3050 = vld [vmem:[#allocation8 + $0x30] sm:$0xff]
          %v3051 = vld [vmem:[#allocation8 + $0x38] sm:$0xff]
          %v3052 = vld [vmem:[#allocation8 + $0x40] sm:$0xff]
          %v3053 = vld [vmem:[#allocation8 + $0x48] sm:$0xff]
          %v3054 = vld [vmem:[#allocation8 + $0x50] sm:$0xff]
          %v3055 = vld [vmem:[#allocation8 + $0x58] sm:$0xff]
          %v3056 = vld [vmem:[#allocation8 + $0x60] sm:$0xff]
          %v3057 = vld [vmem:[#allocation8 + $0x68] sm:$0xff]
          %v3058 = vld [vmem:[#allocation8 + $0x70] sm:$0xff]
          %v3059 = vld [vmem:[#allocation8 + $0x78] sm:$0xff]
          %v3060 = vld [vmem:[#allocation8 + $0x80] sm:$0xff]
          %v3061 = vld [vmem:[#allocation8 + $0x88] sm:$0xff]
          %v3062 = vld [vmem:[#allocation8 + $0x90] sm:$0xff]
          %v3063 = vld [vmem:[#allocation8 + $0x98] sm:$0xff]
          %v3064 = vld [vmem:[#allocation8 + $0xa0] sm:$0xff]
          %v3065 = vld [vmem:[#allocation8 + $0xa8] sm:$0xff]
          %v3066 = vld [vmem:[#allocation8 + $0xb0] sm:$0xff]
          %v3067 = vld [vmem:[#allocation8 + $0xb8] sm:$0xff]
          %v3068 = vld [vmem:[#allocation8 + $0xc0] sm:$0xff]
          %v3069 = vld [vmem:[#allocation8 + $0xc8] sm:$0xff]
          %v3070 = vld [vmem:[#allocation8 + $0xd0] sm:$0xff]
          %v3071 = vld [vmem:[#allocation8 + $0xd8] sm:$0xff]
          %v3072 = vld [vmem:[#allocation8 + $0xe0] sm:$0xff]
          %v3073 = vld [vmem:[#allocation8 + $0xe8] sm:$0xff]
          %v3074 = vld [vmem:[#allocation8 + $0xf0] sm:$0xff]
          %v3075 = vld [vmem:[#allocation8 + $0xf8] sm:$0xff]
          %v3076 = vld [vmem:[#allocation8 + $0x100] sm:$0xff]
          %v3077 = vld [vmem:[#allocation8 + $0x108] sm:$0xff]
          %v3078 = vld [vmem:[#allocation8 + $0x110] sm:$0xff]
          %v3079 = vld [vmem:[#allocation8 + $0x118] sm:$0xff]
          %v3080 = vld [vmem:[#allocation8 + $0x120] sm:$0xff]
          %v3081 = vld [vmem:[#allocation8 + $0x128] sm:$0xff]
          %v3082 = vld [vmem:[#allocation8 + $0x130] sm:$0xff]
          %v3083 = vld [vmem:[#allocation8 + $0x138] sm:$0xff]
          %v3084 = vld [vmem:[#allocation8 + $0x140] sm:$0xff]
          %v3085 = vld [vmem:[#allocation8 + $0x148] sm:$0xff]
          %v3086 = vld [vmem:[#allocation8 + $0x150] sm:$0xff]
          %v3087 = vld [vmem:[#allocation8 + $0x158] sm:$0xff]
          %v3088 = vld [vmem:[#allocation8 + $0x160] sm:$0xff]
          %v3089 = vld [vmem:[#allocation8 + $0x168] sm:$0xff]
          %v3090 = vld [vmem:[#allocation8 + $0x170] sm:$0xff]
          %v3091 = vld [vmem:[#allocation8 + $0x178] sm:$0xff]
          %v3092 = vld [vmem:[#allocation8 + $0x180] sm:$0xff]
          %v3093 = vld [vmem:[#allocation8 + $0x188] sm:$0xff]
          %v3094 = vld [vmem:[#allocation8 + $0x190] sm:$0xff]
          %v3095 = vld [vmem:[#allocation8 + $0x198] sm:$0xff]
          %v3096 = vld [vmem:[#allocation8 + $0x1a0] sm:$0xff]
          %v3097 = vld [vmem:[#allocation8 + $0x1a8] sm:$0xff]
          %v3098 = vld [vmem:[#allocation8 + $0x1b0] sm:$0xff]
          %v3099 = vld [vmem:[#allocation8 + $0x1b8] sm:$0xff]
          %v3100 = vld [vmem:[#allocation8 + $0x1c0] sm:$0xff]
          %v3101 = vld [vmem:[#allocation8 + $0x1c8] sm:$0xff]
          %v3102 = vld [vmem:[#allocation8 + $0x1d0] sm:$0xff]
          %v3103 = vld [vmem:[#allocation8 + $0x1d8] sm:$0xff]
          %v3104 = vld [vmem:[#allocation8 + $0x1e0] sm:$0xff]
          %v3105 = vld [vmem:[#allocation8 + $0x1e8] sm:$0xff]
          %v3106 = vld [vmem:[#allocation8 + $0x1f0] sm:$0xff]
          %v3107 = vld [vmem:[#allocation8 + $0x1f8] sm:$0xff]
          %v3108 = vld [vmem:[#allocation8 + $0x200] sm:$0xff]
          %v3109 = vld [vmem:[#allocation8 + $0x208] sm:$0xff]
          %v3110 = vld [vmem:[#allocation8 + $0x210] sm:$0xff]
          %v3111 = vld [vmem:[#allocation8 + $0x218] sm:$0xff]
          %v3112 = vld [vmem:[#allocation8 + $0x220] sm:$0xff]
          %v3113 = vld [vmem:[#allocation8 + $0x228] sm:$0xff]
          %v3114 = vld [vmem:[#allocation8 + $0x230] sm:$0xff]
          %v3115 = vld [vmem:[#allocation8 + $0x238] sm:$0xff]
          %v3116 = vld [vmem:[#allocation8 + $0x240] sm:$0xff]
          %v3117 = vld [vmem:[#allocation8 + $0x248] sm:$0xff]
          %v3118 = vld [vmem:[#allocation8 + $0x250] sm:$0xff]
          %v3119 = vld [vmem:[#allocation8 + $0x258] sm:$0xff]
          %v3120 = vld [vmem:[#allocation8 + $0x260] sm:$0xff]
          %v3121 = vld [vmem:[#allocation8 + $0x268] sm:$0xff]
          %v3122 = vld [vmem:[#allocation8 + $0x270] sm:$0xff]
          %v3123 = vld [vmem:[#allocation8 + $0x278] sm:$0xff]
          %v3124 = vld [vmem:[#allocation8 + $0x280] sm:$0xff]
          %v3125 = vld [vmem:[#allocation8 + $0x288] sm:$0xff]
          %v3126 = vld [vmem:[#allocation8 + $0x290] sm:$0xff]
          %v3127 = vld [vmem:[#allocation8 + $0x298] sm:$0xff]
          %v3128 = vld [vmem:[#allocation8 + $0x2a0] sm:$0xff]
          %v3129 = vld [vmem:[#allocation8 + $0x2a8] sm:$0xff]
          %v3130 = vld [vmem:[#allocation8 + $0x2b0] sm:$0xff]
          %v3131 = vld [vmem:[#allocation8 + $0x2b8] sm:$0xff]
          %v3132 = vld [vmem:[#allocation8 + $0x2c0] sm:$0xff]
          %v3133 = vld [vmem:[#allocation8 + $0x2c8] sm:$0xff]
          %v3134 = vld [vmem:[#allocation8 + $0x2d0] sm:$0xff]
          %v3135 = vld [vmem:[#allocation8 + $0x2d8] sm:$0xff]
          %v3136 = vld [vmem:[#allocation8 + $0x2e0] sm:$0xff]
          %v3137 = vld [vmem:[#allocation8 + $0x2e8] sm:$0xff]
          %v3138 = vld [vmem:[#allocation8 + $0x2f0] sm:$0xff]
          %v3139 = vld [vmem:[#allocation8 + $0x2f8] sm:$0xff]
          %v3140 = vld [vmem:[#allocation8 + $0x300] sm:$0xff]
          %v3141 = vld [vmem:[#allocation8 + $0x308] sm:$0xff]
          %v3142 = vld [vmem:[#allocation8 + $0x310] sm:$0xff]
          %v3143 = vld [vmem:[#allocation8 + $0x318] sm:$0xff]
          %v3144 = vld [vmem:[#allocation8 + $0x320] sm:$0xff]
          %v3145 = vld [vmem:[#allocation8 + $0x328] sm:$0xff]
          %v3146 = vld [vmem:[#allocation8 + $0x330] sm:$0xff]
          %v3147 = vld [vmem:[#allocation8 + $0x338] sm:$0xff]
          %v3148 = vld [vmem:[#allocation8 + $0x340] sm:$0xff]
          %v3149 = vld [vmem:[#allocation8 + $0x348] sm:$0xff]
          %v3150 = vld [vmem:[#allocation8 + $0x350] sm:$0xff]
          %v3151 = vld [vmem:[#allocation8 + $0x358] sm:$0xff]
          %v3152 = vld [vmem:[#allocation8 + $0x360] sm:$0xff]
          %v3153 = vld [vmem:[#allocation8 + $0x368] sm:$0xff]
          %v3154 = vld [vmem:[#allocation8 + $0x370] sm:$0xff]
          %v3155 = vld [vmem:[#allocation8 + $0x378] sm:$0xff]
          %v3156 = vld [vmem:[#allocation8 + $0x380] sm:$0xff]
          %v3157 = vld [vmem:[#allocation8 + $0x388] sm:$0xff]
          %v3158 = vld [vmem:[#allocation8 + $0x390] sm:$0xff]
          %v3159 = vld [vmem:[#allocation8 + $0x398] sm:$0xff]
          %v3160 = vld [vmem:[#allocation8 + $0x3a0] sm:$0xff]
          %v3161 = vld [vmem:[#allocation8 + $0x3a8] sm:$0xff]
          %v3162 = vld [vmem:[#allocation8 + $0x3b0] sm:$0xff]
          %v3163 = vld [vmem:[#allocation8 + $0x3b8] sm:$0xff]
          %v3164 = vld [vmem:[#allocation8 + $0x3c0] sm:$0xff]
          %v3165 = vld [vmem:[#allocation8 + $0x3c8] sm:$0xff]
          %v3166 = vld [vmem:[#allocation8 + $0x3d0] sm:$0xff]
          %v3167 = vld [vmem:[#allocation8 + $0x3d8] sm:$0xff]
          %v3168 = vld [vmem:[#allocation8 + $0x3e0] sm:$0xff]
          %v3169 = vld [vmem:[#allocation8 + $0x3e8] sm:$0xff]
          %v3170 = vld [vmem:[#allocation8 + $0x3f0] sm:$0xff]
          %v3171 = vld [vmem:[#allocation8 + $0x3f8] sm:$0xff]
          %v3172 = vld [vmem:[#allocation9] sm:$0x3]
          %v3174 = vlaneseq
          %v3175 = vshrl.u32 %v3174, 7
          %v3176 = vsub.s32 0, %v3175
          %v3177 = vrot.slane %v3172, %v3176
          %v3178 = vlaneseq
          %v3179 = vshrl.u32 %v3178, 7
          %v3180 = vsub.s32 1, %v3179
          %v3181 = vrot.slane %v3172, %v3180
          %v3312 = vunpack.c.l.b16 %v3044
          %v3313 = vunpack.c.h.b16 %v3044
          %v3314 = vunpack.c.l.b16 %v3045
          %v3315 = vunpack.c.h.b16 %v3045
          %v3316 = vunpack.c.l.b16 %v3046
          %v3317 = vunpack.c.h.b16 %v3046
          %v3318 = vunpack.c.l.b16 %v3047
          %v3319 = vunpack.c.h.b16 %v3047
          %v3320 = vunpack.c.l.b16 %v3048
          %v3321 = vunpack.c.h.b16 %v3048
          %v3322 = vunpack.c.l.b16 %v3049
          %v3323 = vunpack.c.h.b16 %v3049
          %v3324 = vunpack.c.l.b16 %v3050
          %v3325 = vunpack.c.h.b16 %v3050
          %v3326 = vunpack.c.l.b16 %v3051
          %v3327 = vunpack.c.h.b16 %v3051
          %v3328 = vunpack.c.l.b16 %v3052
          %v3329 = vunpack.c.h.b16 %v3052
          %v3330 = vunpack.c.l.b16 %v3053
          %v3331 = vunpack.c.h.b16 %v3053
          %v3332 = vunpack.c.l.b16 %v3054
          %v3333 = vunpack.c.h.b16 %v3054
          %v3334 = vunpack.c.l.b16 %v3055
          %v3335 = vunpack.c.h.b16 %v3055
          %v3336 = vunpack.c.l.b16 %v3056
          %v3337 = vunpack.c.h.b16 %v3056
          %v3338 = vunpack.c.l.b16 %v3057
          %v3339 = vunpack.c.h.b16 %v3057
          %v3340 = vunpack.c.l.b16 %v3058
          %v3341 = vunpack.c.h.b16 %v3058
          %v3342 = vunpack.c.l.b16 %v3059
          %v3343 = vunpack.c.h.b16 %v3059
          %v3344 = vunpack.c.l.b16 %v3060
          %v3345 = vunpack.c.h.b16 %v3060
          %v3346 = vunpack.c.l.b16 %v3061
          %v3347 = vunpack.c.h.b16 %v3061
          %v3348 = vunpack.c.l.b16 %v3062
          %v3349 = vunpack.c.h.b16 %v3062
          %v3350 = vunpack.c.l.b16 %v3063
          %v3351 = vunpack.c.h.b16 %v3063
          %v3352 = vunpack.c.l.b16 %v3064
          %v3353 = vunpack.c.h.b16 %v3064
          %v3354 = vunpack.c.l.b16 %v3065
          %v3355 = vunpack.c.h.b16 %v3065
          %v3356 = vunpack.c.l.b16 %v3066
          %v3357 = vunpack.c.h.b16 %v3066
          %v3358 = vunpack.c.l.b16 %v3067
          %v3359 = vunpack.c.h.b16 %v3067
          %v3360 = vunpack.c.l.b16 %v3068
          %v3361 = vunpack.c.h.b16 %v3068
          %v3362 = vunpack.c.l.b16 %v3069
          %v3363 = vunpack.c.h.b16 %v3069
          %v3364 = vunpack.c.l.b16 %v3070
          %v3365 = vunpack.c.h.b16 %v3070
          %v3366 = vunpack.c.l.b16 %v3071
          %v3367 = vunpack.c.h.b16 %v3071
          %v3368 = vunpack.c.l.b16 %v3072
          %v3369 = vunpack.c.h.b16 %v3072
          %v3370 = vunpack.c.l.b16 %v3073
          %v3371 = vunpack.c.h.b16 %v3073
          %v3372 = vunpack.c.l.b16 %v3074
          %v3373 = vunpack.c.h.b16 %v3074
          %v3374 = vunpack.c.l.b16 %v3075
          %v3375 = vunpack.c.h.b16 %v3075
          %v3376 = vunpack.c.l.b16 %v3076
          %v3377 = vunpack.c.h.b16 %v3076
          %v3378 = vunpack.c.l.b16 %v3077
          %v3379 = vunpack.c.h.b16 %v3077
          %v3380 = vunpack.c.l.b16 %v3078
          %v3381 = vunpack.c.h.b16 %v3078
          %v3382 = vunpack.c.l.b16 %v3079
          %v3383 = vunpack.c.h.b16 %v3079
          %v3384 = vunpack.c.l.b16 %v3080
          %v3385 = vunpack.c.h.b16 %v3080
          %v3386 = vunpack.c.l.b16 %v3081
          %v3387 = vunpack.c.h.b16 %v3081
          %v3388 = vunpack.c.l.b16 %v3082
          %v3389 = vunpack.c.h.b16 %v3082
          %v3390 = vunpack.c.l.b16 %v3083
          %v3391 = vunpack.c.h.b16 %v3083
          %v3392 = vunpack.c.l.b16 %v3084
          %v3393 = vunpack.c.h.b16 %v3084
          %v3394 = vunpack.c.l.b16 %v3085
          %v3395 = vunpack.c.h.b16 %v3085
          %v3396 = vunpack.c.l.b16 %v3086
          %v3397 = vunpack.c.h.b16 %v3086
          %v3398 = vunpack.c.l.b16 %v3087
          %v3399 = vunpack.c.h.b16 %v3087
          %v3400 = vunpack.c.l.b16 %v3088
          %v3401 = vunpack.c.h.b16 %v3088
          %v3402 = vunpack.c.l.b16 %v3089
          %v3403 = vunpack.c.h.b16 %v3089
          %v3404 = vunpack.c.l.b16 %v3090
          %v3405 = vunpack.c.h.b16 %v3090
          %v3406 = vunpack.c.l.b16 %v3091
          %v3407 = vunpack.c.h.b16 %v3091
          %v3408 = vunpack.c.l.b16 %v3092
          %v3409 = vunpack.c.h.b16 %v3092
          %v3410 = vunpack.c.l.b16 %v3093
          %v3411 = vunpack.c.h.b16 %v3093
          %v3412 = vunpack.c.l.b16 %v3094
          %v3413 = vunpack.c.h.b16 %v3094
          %v3414 = vunpack.c.l.b16 %v3095
          %v3415 = vunpack.c.h.b16 %v3095
          %v3416 = vunpack.c.l.b16 %v3096
          %v3417 = vunpack.c.h.b16 %v3096
          %v3418 = vunpack.c.l.b16 %v3097
          %v3419 = vunpack.c.h.b16 %v3097
          %v3420 = vunpack.c.l.b16 %v3098
          %v3421 = vunpack.c.h.b16 %v3098
          %v3422 = vunpack.c.l.b16 %v3099
          %v3423 = vunpack.c.h.b16 %v3099
          %v3424 = vunpack.c.l.b16 %v3100
          %v3425 = vunpack.c.h.b16 %v3100
          %v3426 = vunpack.c.l.b16 %v3101
          %v3427 = vunpack.c.h.b16 %v3101
          %v3428 = vunpack.c.l.b16 %v3102
          %v3429 = vunpack.c.h.b16 %v3102
          %v3430 = vunpack.c.l.b16 %v3103
          %v3431 = vunpack.c.h.b16 %v3103
          %v3432 = vunpack.c.l.b16 %v3104
          %v3433 = vunpack.c.h.b16 %v3104
          %v3434 = vunpack.c.l.b16 %v3105
          %v3435 = vunpack.c.h.b16 %v3105
          %v3436 = vunpack.c.l.b16 %v3106
          %v3437 = vunpack.c.h.b16 %v3106
          %v3438 = vunpack.c.l.b16 %v3107
          %v3439 = vunpack.c.h.b16 %v3107
          %v3440 = vunpack.c.l.b16 %v3108
          %v3441 = vunpack.c.h.b16 %v3108
          %v3442 = vunpack.c.l.b16 %v3109
          %v3443 = vunpack.c.h.b16 %v3109
          %v3444 = vunpack.c.l.b16 %v3110
          %v3445 = vunpack.c.h.b16 %v3110
          %v3446 = vunpack.c.l.b16 %v3111
          %v3447 = vunpack.c.h.b16 %v3111
          %v3448 = vunpack.c.l.b16 %v3112
          %v3449 = vunpack.c.h.b16 %v3112
          %v3450 = vunpack.c.l.b16 %v3113
          %v3451 = vunpack.c.h.b16 %v3113
          %v3452 = vunpack.c.l.b16 %v3114
          %v3453 = vunpack.c.h.b16 %v3114
          %v3454 = vunpack.c.l.b16 %v3115
          %v3455 = vunpack.c.h.b16 %v3115
          %v3456 = vunpack.c.l.b16 %v3116
          %v3457 = vunpack.c.h.b16 %v3116
          %v3458 = vunpack.c.l.b16 %v3117
          %v3459 = vunpack.c.h.b16 %v3117
          %v3460 = vunpack.c.l.b16 %v3118
          %v3461 = vunpack.c.h.b16 %v3118
          %v3462 = vunpack.c.l.b16 %v3119
          %v3463 = vunpack.c.h.b16 %v3119
          %v3464 = vunpack.c.l.b16 %v3120
          %v3465 = vunpack.c.h.b16 %v3120
          %v3466 = vunpack.c.l.b16 %v3121
          %v3467 = vunpack.c.h.b16 %v3121
          %v3468 = vunpack.c.l.b16 %v3122
          %v3469 = vunpack.c.h.b16 %v3122
          %v3470 = vunpack.c.l.b16 %v3123
          %v3471 = vunpack.c.h.b16 %v3123
          %v3472 = vunpack.c.l.b16 %v3124
          %v3473 = vunpack.c.h.b16 %v3124
          %v3474 = vunpack.c.l.b16 %v3125
          %v3475 = vunpack.c.h.b16 %v3125
          %v3476 = vunpack.c.l.b16 %v3126
          %v3477 = vunpack.c.h.b16 %v3126
          %v3478 = vunpack.c.l.b16 %v3127
          %v3479 = vunpack.c.h.b16 %v3127
          %v3480 = vunpack.c.l.b16 %v3128
          %v3481 = vunpack.c.h.b16 %v3128
          %v3482 = vunpack.c.l.b16 %v3129
          %v3483 = vunpack.c.h.b16 %v3129
          %v3484 = vunpack.c.l.b16 %v3130
          %v3485 = vunpack.c.h.b16 %v3130
          %v3486 = vunpack.c.l.b16 %v3131
          %v3487 = vunpack.c.h.b16 %v3131
          %v3488 = vunpack.c.l.b16 %v3132
          %v3489 = vunpack.c.h.b16 %v3132
          %v3490 = vunpack.c.l.b16 %v3133
          %v3491 = vunpack.c.h.b16 %v3133
          %v3492 = vunpack.c.l.b16 %v3134
          %v3493 = vunpack.c.h.b16 %v3134
          %v3494 = vunpack.c.l.b16 %v3135
          %v3495 = vunpack.c.h.b16 %v3135
          %v3496 = vunpack.c.l.b16 %v3136
          %v3497 = vunpack.c.h.b16 %v3136
          %v3498 = vunpack.c.l.b16 %v3137
          %v3499 = vunpack.c.h.b16 %v3137
          %v3500 = vunpack.c.l.b16 %v3138
          %v3501 = vunpack.c.h.b16 %v3138
          %v3502 = vunpack.c.l.b16 %v3139
          %v3503 = vunpack.c.h.b16 %v3139
          %v3504 = vunpack.c.l.b16 %v3140
          %v3505 = vunpack.c.h.b16 %v3140
          %v3506 = vunpack.c.l.b16 %v3141
          %v3507 = vunpack.c.h.b16 %v3141
          %v3508 = vunpack.c.l.b16 %v3142
          %v3509 = vunpack.c.h.b16 %v3142
          %v3510 = vunpack.c.l.b16 %v3143
          %v3511 = vunpack.c.h.b16 %v3143
          %v3512 = vunpack.c.l.b16 %v3144
          %v3513 = vunpack.c.h.b16 %v3144
          %v3514 = vunpack.c.l.b16 %v3145
          %v3515 = vunpack.c.h.b16 %v3145
          %v3516 = vunpack.c.l.b16 %v3146
          %v3517 = vunpack.c.h.b16 %v3146
          %v3518 = vunpack.c.l.b16 %v3147
          %v3519 = vunpack.c.h.b16 %v3147
          %v3520 = vunpack.c.l.b16 %v3148
          %v3521 = vunpack.c.h.b16 %v3148
          %v3522 = vunpack.c.l.b16 %v3149
          %v3523 = vunpack.c.h.b16 %v3149
          %v3524 = vunpack.c.l.b16 %v3150
          %v3525 = vunpack.c.h.b16 %v3150
          %v3526 = vunpack.c.l.b16 %v3151
          %v3527 = vunpack.c.h.b16 %v3151
          %v3528 = vunpack.c.l.b16 %v3152
          %v3529 = vunpack.c.h.b16 %v3152
          %v3530 = vunpack.c.l.b16 %v3153
          %v3531 = vunpack.c.h.b16 %v3153
          %v3532 = vunpack.c.l.b16 %v3154
          %v3533 = vunpack.c.h.b16 %v3154
          %v3534 = vunpack.c.l.b16 %v3155
          %v3535 = vunpack.c.h.b16 %v3155
          %v3536 = vunpack.c.l.b16 %v3156
          %v3537 = vunpack.c.h.b16 %v3156
          %v3538 = vunpack.c.l.b16 %v3157
          %v3539 = vunpack.c.h.b16 %v3157
          %v3540 = vunpack.c.l.b16 %v3158
          %v3541 = vunpack.c.h.b16 %v3158
          %v3542 = vunpack.c.l.b16 %v3159
          %v3543 = vunpack.c.h.b16 %v3159
          %v3544 = vunpack.c.l.b16 %v3160
          %v3545 = vunpack.c.h.b16 %v3160
          %v3546 = vunpack.c.l.b16 %v3161
          %v3547 = vunpack.c.h.b16 %v3161
          %v3548 = vunpack.c.l.b16 %v3162
          %v3549 = vunpack.c.h.b16 %v3162
          %v3550 = vunpack.c.l.b16 %v3163
          %v3551 = vunpack.c.h.b16 %v3163
          %v3552 = vunpack.c.l.b16 %v3164
          %v3553 = vunpack.c.h.b16 %v3164
          %v3554 = vunpack.c.l.b16 %v3165
          %v3555 = vunpack.c.h.b16 %v3165
          %v3556 = vunpack.c.l.b16 %v3166
          %v3557 = vunpack.c.h.b16 %v3166
          %v3558 = vunpack.c.l.b16 %v3167
          %v3559 = vunpack.c.h.b16 %v3167
          %v3560 = vunpack.c.l.b16 %v3168
          %v3561 = vunpack.c.h.b16 %v3168
          %v3562 = vunpack.c.l.b16 %v3169
          %v3563 = vunpack.c.h.b16 %v3169
          %v3564 = vunpack.c.l.b16 %v3170
          %v3565 = vunpack.c.h.b16 %v3170
          %v3566 = vunpack.c.l.b16 %v3171
          %v3567 = vunpack.c.h.b16 %v3171
          %v3568 = vpack.c.b16 %v3314, %v3312
          %v3569 = vpack.c.b16 %v3315, %v3313
          %v3570 = vpack.c.b16 %v3318, %v3316
          %v3571 = vpack.c.b16 %v3319, %v3317
          %v3572 = vpack.c.b16 %v3322, %v3320
          %v3573 = vpack.c.b16 %v3323, %v3321
          %v3574 = vpack.c.b16 %v3326, %v3324
          %v3575 = vpack.c.b16 %v3327, %v3325
          %v3576 = vpack.c.b16 %v3330, %v3328
          %v3577 = vpack.c.b16 %v3331, %v3329
          %v3578 = vpack.c.b16 %v3334, %v3332
          %v3579 = vpack.c.b16 %v3335, %v3333
          %v3580 = vpack.c.b16 %v3338, %v3336
          %v3581 = vpack.c.b16 %v3339, %v3337
          %v3582 = vpack.c.b16 %v3342, %v3340
          %v3583 = vpack.c.b16 %v3343, %v3341
          %v3584 = vpack.c.b16 %v3346, %v3344
          %v3585 = vpack.c.b16 %v3347, %v3345
          %v3586 = vpack.c.b16 %v3350, %v3348
          %v3587 = vpack.c.b16 %v3351, %v3349
          %v3588 = vpack.c.b16 %v3354, %v3352
          %v3589 = vpack.c.b16 %v3355, %v3353
          %v3590 = vpack.c.b16 %v3358, %v3356
          %v3591 = vpack.c.b16 %v3359, %v3357
          %v3592 = vpack.c.b16 %v3362, %v3360
          %v3593 = vpack.c.b16 %v3363, %v3361
          %v3594 = vpack.c.b16 %v3366, %v3364
          %v3595 = vpack.c.b16 %v3367, %v3365
          %v3596 = vpack.c.b16 %v3370, %v3368
          %v3597 = vpack.c.b16 %v3371, %v3369
          %v3598 = vpack.c.b16 %v3374, %v3372
          %v3599 = vpack.c.b16 %v3375, %v3373
          %v3600 = vpack.c.b16 %v3378, %v3376
          %v3601 = vpack.c.b16 %v3379, %v3377
          %v3602 = vpack.c.b16 %v3382, %v3380
          %v3603 = vpack.c.b16 %v3383, %v3381
          %v3604 = vpack.c.b16 %v3386, %v3384
          %v3605 = vpack.c.b16 %v3387, %v3385
          %v3606 = vpack.c.b16 %v3390, %v3388
          %v3607 = vpack.c.b16 %v3391, %v3389
          %v3608 = vpack.c.b16 %v3394, %v3392
          %v3609 = vpack.c.b16 %v3395, %v3393
          %v3610 = vpack.c.b16 %v3398, %v3396
          %v3611 = vpack.c.b16 %v3399, %v3397
          %v3612 = vpack.c.b16 %v3402, %v3400
          %v3613 = vpack.c.b16 %v3403, %v3401
          %v3614 = vpack.c.b16 %v3406, %v3404
          %v3615 = vpack.c.b16 %v3407, %v3405
          %v3616 = vpack.c.b16 %v3410, %v3408
          %v3617 = vpack.c.b16 %v3411, %v3409
          %v3618 = vpack.c.b16 %v3414, %v3412
          %v3619 = vpack.c.b16 %v3415, %v3413
          %v3620 = vpack.c.b16 %v3418, %v3416
          %v3621 = vpack.c.b16 %v3419, %v3417
          %v3622 = vpack.c.b16 %v3422, %v3420
          %v3623 = vpack.c.b16 %v3423, %v3421
          %v3624 = vpack.c.b16 %v3426, %v3424
          %v3625 = vpack.c.b16 %v3427, %v3425
          %v3626 = vpack.c.b16 %v3430, %v3428
          %v3627 = vpack.c.b16 %v3431, %v3429
          %v3628 = vpack.c.b16 %v3434, %v3432
          %v3629 = vpack.c.b16 %v3435, %v3433
          %v3630 = vpack.c.b16 %v3438, %v3436
          %v3631 = vpack.c.b16 %v3439, %v3437
          %v3632 = vpack.c.b16 %v3442, %v3440
          %v3633 = vpack.c.b16 %v3443, %v3441
          %v3634 = vpack.c.b16 %v3446, %v3444
          %v3635 = vpack.c.b16 %v3447, %v3445
          %v3636 = vpack.c.b16 %v3450, %v3448
          %v3637 = vpack.c.b16 %v3451, %v3449
          %v3638 = vpack.c.b16 %v3454, %v3452
          %v3639 = vpack.c.b16 %v3455, %v3453
          %v3640 = vpack.c.b16 %v3458, %v3456
          %v3641 = vpack.c.b16 %v3459, %v3457
          %v3642 = vpack.c.b16 %v3462, %v3460
          %v3643 = vpack.c.b16 %v3463, %v3461
          %v3644 = vpack.c.b16 %v3466, %v3464
          %v3645 = vpack.c.b16 %v3467, %v3465
          %v3646 = vpack.c.b16 %v3470, %v3468
          %v3647 = vpack.c.b16 %v3471, %v3469
          %v3648 = vpack.c.b16 %v3474, %v3472
          %v3649 = vpack.c.b16 %v3475, %v3473
          %v3650 = vpack.c.b16 %v3478, %v3476
          %v3651 = vpack.c.b16 %v3479, %v3477
          %v3652 = vpack.c.b16 %v3482, %v3480
          %v3653 = vpack.c.b16 %v3483, %v3481
          %v3654 = vpack.c.b16 %v3486, %v3484
          %v3655 = vpack.c.b16 %v3487, %v3485
          %v3656 = vpack.c.b16 %v3490, %v3488
          %v3657 = vpack.c.b16 %v3491, %v3489
          %v3658 = vpack.c.b16 %v3494, %v3492
          %v3659 = vpack.c.b16 %v3495, %v3493
          %v3660 = vpack.c.b16 %v3498, %v3496
          %v3661 = vpack.c.b16 %v3499, %v3497
          %v3662 = vpack.c.b16 %v3502, %v3500
          %v3663 = vpack.c.b16 %v3503, %v3501
          %v3664 = vpack.c.b16 %v3506, %v3504
          %v3665 = vpack.c.b16 %v3507, %v3505
          %v3666 = vpack.c.b16 %v3510, %v3508
          %v3667 = vpack.c.b16 %v3511, %v3509
          %v3668 = vpack.c.b16 %v3514, %v3512
          %v3669 = vpack.c.b16 %v3515, %v3513
          %v3670 = vpack.c.b16 %v3518, %v3516
          %v3671 = vpack.c.b16 %v3519, %v3517
          %v3672 = vpack.c.b16 %v3522, %v3520
          %v3673 = vpack.c.b16 %v3523, %v3521
          %v3674 = vpack.c.b16 %v3526, %v3524
          %v3675 = vpack.c.b16 %v3527, %v3525
          %v3676 = vpack.c.b16 %v3530, %v3528
          %v3677 = vpack.c.b16 %v3531, %v3529
          %v3678 = vpack.c.b16 %v3534, %v3532
          %v3679 = vpack.c.b16 %v3535, %v3533
          %v3680 = vpack.c.b16 %v3538, %v3536
          %v3681 = vpack.c.b16 %v3539, %v3537
          %v3682 = vpack.c.b16 %v3542, %v3540
          %v3683 = vpack.c.b16 %v3543, %v3541
          %v3684 = vpack.c.b16 %v3546, %v3544
          %v3685 = vpack.c.b16 %v3547, %v3545
          %v3686 = vpack.c.b16 %v3550, %v3548
          %v3687 = vpack.c.b16 %v3551, %v3549
          %v3688 = vpack.c.b16 %v3554, %v3552
          %v3689 = vpack.c.b16 %v3555, %v3553
          %v3690 = vpack.c.b16 %v3558, %v3556
          %v3691 = vpack.c.b16 %v3559, %v3557
          %v3692 = vpack.c.b16 %v3562, %v3560
          %v3693 = vpack.c.b16 %v3563, %v3561
          %v3694 = vpack.c.b16 %v3566, %v3564
          %v3695 = vpack.c.b16 %v3567, %v3565
          %3824 = vmatprep.subr.bf16.mxu0 %v3569
          %3825 = vmatpush1.bf16.msra.mxu0 %v3568
          %3826 = vmatprep.subr.bf16.mxu0 %v3571
          %3827 = vmatpush1.bf16.msra.mxu0 %v3570
          %3828 = vmatprep.subr.bf16.mxu0 %v3573
          %3829 = vmatpush1.bf16.msra.mxu0 %v3572
          %3830 = vmatprep.subr.bf16.mxu0 %v3575
          %3831 = vmatpush1.bf16.msra.mxu0 %v3574
          %3832 = vmatprep.subr.bf16.mxu0 %v3577
          %3833 = vmatpush1.bf16.msra.mxu0 %v3576
          %3834 = vmatprep.subr.bf16.mxu0 %v3579
          %3835 = vmatpush1.bf16.msra.mxu0 %v3578
          %3836 = vmatprep.subr.bf16.mxu0 %v3581
          %3837 = vmatpush1.bf16.msra.mxu0 %v3580
          %3838 = vmatprep.subr.bf16.mxu0 %v3583
          %3839 = vmatpush1.bf16.msra.mxu0 %v3582
          %3840 = vmatprep.subr.bf16.mxu0 %v3585
          %3841 = vmatpush1.bf16.msra.mxu0 %v3584
          %3842 = vmatprep.subr.bf16.mxu0 %v3587
          %3843 = vmatpush1.bf16.msra.mxu0 %v3586
          %3844 = vmatprep.subr.bf16.mxu0 %v3589
          %3845 = vmatpush1.bf16.msra.mxu0 %v3588
          %3846 = vmatprep.subr.bf16.mxu0 %v3591
          %3847 = vmatpush1.bf16.msra.mxu0 %v3590
          %3848 = vmatprep.subr.bf16.mxu0 %v3593
          %3849 = vmatpush1.bf16.msra.mxu0 %v3592
          %3850 = vmatprep.subr.bf16.mxu0 %v3595
          %3851 = vmatpush1.bf16.msra.mxu0 %v3594
          %3852 = vmatprep.subr.bf16.mxu0 %v3597
          %3853 = vmatpush1.bf16.msra.mxu0 %v3596
          %3854 = vmatprep.subr.bf16.mxu0 %v3599
          %3855 = vmatpush1.bf16.msra.mxu0 %v3598
          %3856 = vmatprep.mubr.bf16.mxu0 %v3037
          %3857 = vmatmul.mubr.bf16.gmra.mrb[0].mxu0 %v3036
          %v3858 = vpop.f32.mrb[0].mxu0
          %v3859 = vadd.f32 %v3177, %v3858
          %v3860 = vpop.f32.mrb[0].mxu0
          %v3861 = vadd.f32 %v3181, %v3860
          %v3862 = vpop.f32.mrb[0].mxu0
          %v3863 = vpop.f32.mrb[0].mxu0
          %3864 = vdwg.mxu0
          %3865 = vmatprep.subr.bf16.mxu0 %v3601
          %3866 = vmatpush1.bf16.msra.mxu0 %v3600
          %3867 = vmatprep.subr.bf16.mxu0 %v3603
          %3868 = vmatpush1.bf16.msra.mxu0 %v3602
          %3869 = vmatprep.subr.bf16.mxu0 %v3605
          %3870 = vmatpush1.bf16.msra.mxu0 %v3604
          %3871 = vmatprep.subr.bf16.mxu0 %v3607
          %3872 = vmatpush1.bf16.msra.mxu0 %v3606
          %3873 = vmatprep.subr.bf16.mxu0 %v3609
          %3874 = vmatpush1.bf16.msra.mxu0 %v3608
          %3875 = vmatprep.subr.bf16.mxu0 %v3611
          %3876 = vmatpush1.bf16.msra.mxu0 %v3610
          %3877 = vmatprep.subr.bf16.mxu0 %v3613
          %3878 = vmatpush1.bf16.msra.mxu0 %v3612
          %3879 = vmatprep.subr.bf16.mxu0 %v3615
          %3880 = vmatpush1.bf16.msra.mxu0 %v3614
          %3881 = vmatprep.subr.bf16.mxu0 %v3617
          %3882 = vmatpush1.bf16.msra.mxu0 %v3616
          %3883 = vmatprep.subr.bf16.mxu0 %v3619
          %3884 = vmatpush1.bf16.msra.mxu0 %v3618
          %3885 = vmatprep.subr.bf16.mxu0 %v3621
          %3886 = vmatpush1.bf16.msra.mxu0 %v3620
          %3887 = vmatprep.subr.bf16.mxu0 %v3623
          %3888 = vmatpush1.bf16.msra.mxu0 %v3622
          %3889 = vmatprep.subr.bf16.mxu0 %v3625
          %3890 = vmatpush1.bf16.msra.mxu0 %v3624
          %3891 = vmatprep.subr.bf16.mxu0 %v3627
          %3892 = vmatpush1.bf16.msra.mxu0 %v3626
          %3893 = vmatprep.subr.bf16.mxu0 %v3629
          %3894 = vmatpush1.bf16.msra.mxu0 %v3628
          %3895 = vmatprep.subr.bf16.mxu0 %v3631
          %3896 = vmatpush1.bf16.msra.mxu0 %v3630
          %3897 = vmatprep.mubr.bf16.mxu0 %v3039
          %3898 = vmatmul.mubr.bf16.gmra.mrb[0].mxu0 %v3038
          %v3899 = vpop.f32.mrb[0].mxu0
          %v3900 = vadd.f32 %v3859, %v3899
          %v3901 = vpop.f32.mrb[0].mxu0
          %v3902 = vadd.f32 %v3861, %v3901
          %v3903 = vpop.f32.mrb[0].mxu0
          %v3904 = vpop.f32.mrb[0].mxu0
          %3905 = vdwg.mxu0
          %3906 = vmatprep.subr.bf16.mxu0 %v3633
          %3907 = vmatpush1.bf16.msra.mxu0 %v3632
          %3908 = vmatprep.subr.bf16.mxu0 %v3635
          %3909 = vmatpush1.bf16.msra.mxu0 %v3634
          %3910 = vmatprep.subr.bf16.mxu0 %v3637
          %3911 = vmatpush1.bf16.msra.mxu0 %v3636
          %3912 = vmatprep.subr.bf16.mxu0 %v3639
          %3913 = vmatpush1.bf16.msra.mxu0 %v3638
          %3914 = vmatprep.subr.bf16.mxu0 %v3641
          %3915 = vmatpush1.bf16.msra.mxu0 %v3640
          %3916 = vmatprep.subr.bf16.mxu0 %v3643
          %3917 = vmatpush1.bf16.msra.mxu0 %v3642
          %3918 = vmatprep.subr.bf16.mxu0 %v3645
          %3919 = vmatpush1.bf16.msra.mxu0 %v3644
          %3920 = vmatprep.subr.bf16.mxu0 %v3647
          %3921 = vmatpush1.bf16.msra.mxu0 %v3646
          %3922 = vmatprep.subr.bf16.mxu0 %v3649
          %3923 = vmatpush1.bf16.msra.mxu0 %v3648
          %3924 = vmatprep.subr.bf16.mxu0 %v3651
          %3925 = vmatpush1.bf16.msra.mxu0 %v3650
          %3926 = vmatprep.subr.bf16.mxu0 %v3653
          %3927 = vmatpush1.bf16.msra.mxu0 %v3652
          %3928 = vmatprep.subr.bf16.mxu0 %v3655
          %3929 = vmatpush1.bf16.msra.mxu0 %v3654
          %3930 = vmatprep.subr.bf16.mxu0 %v3657
          %3931 = vmatpush1.bf16.msra.mxu0 %v3656
          %3932 = vmatprep.subr.bf16.mxu0 %v3659
          %3933 = vmatpush1.bf16.msra.mxu0 %v3658
          %3934 = vmatprep.subr.bf16.mxu0 %v3661
          %3935 = vmatpush1.bf16.msra.mxu0 %v3660
          %3936 = vmatprep.subr.bf16.mxu0 %v3663
          %3937 = vmatpush1.bf16.msra.mxu0 %v3662
          %3938 = vmatprep.mubr.bf16.mxu0 %v3041
          %3939 = vmatmul.mubr.bf16.gmra.mrb[0].mxu0 %v3040
          %v3940 = vpop.f32.mrb[0].mxu0
          %v3941 = vadd.f32 %v3900, %v3940
          %v3942 = vpop.f32.mrb[0].mxu0
          %v3943 = vadd.f32 %v3902, %v3942
          %v3944 = vpop.f32.mrb[0].mxu0
          %v3945 = vpop.f32.mrb[0].mxu0
          %3946 = vdwg.mxu0
          %3947 = vmatprep.subr.bf16.mxu0 %v3665
          %3948 = vmatpush1.bf16.msra.mxu0 %v3664
          %3949 = vmatprep.subr.bf16.mxu0 %v3667
          %3950 = vmatpush1.bf16.msra.mxu0 %v3666
          %3951 = vmatprep.subr.bf16.mxu0 %v3669
          %3952 = vmatpush1.bf16.msra.mxu0 %v3668
          %3953 = vmatprep.subr.bf16.mxu0 %v3671
          %3954 = vmatpush1.bf16.msra.mxu0 %v3670
          %3955 = vmatprep.subr.bf16.mxu0 %v3673
          %3956 = vmatpush1.bf16.msra.mxu0 %v3672
          %3957 = vmatprep.subr.bf16.mxu0 %v3675
          %3958 = vmatpush1.bf16.msra.mxu0 %v3674
          %3959 = vmatprep.subr.bf16.mxu0 %v3677
          %3960 = vmatpush1.bf16.msra.mxu0 %v3676
          %3961 = vmatprep.subr.bf16.mxu0 %v3679
          %3962 = vmatpush1.bf16.msra.mxu0 %v3678
          %3963 = vmatprep.subr.bf16.mxu0 %v3681
          %3964 = vmatpush1.bf16.msra.mxu0 %v3680
          %3965 = vmatprep.subr.bf16.mxu0 %v3683
          %3966 = vmatpush1.bf16.msra.mxu0 %v3682
          %3967 = vmatprep.subr.bf16.mxu0 %v3685
          %3968 = vmatpush1.bf16.msra.mxu0 %v3684
          %3969 = vmatprep.subr.bf16.mxu0 %v3687
          %3970 = vmatpush1.bf16.msra.mxu0 %v3686
          %3971 = vmatprep.subr.bf16.mxu0 %v3689
          %3972 = vmatpush1.bf16.msra.mxu0 %v3688
          %3973 = vmatprep.subr.bf16.mxu0 %v3691
          %3974 = vmatpush1.bf16.msra.mxu0 %v3690
          %3975 = vmatprep.subr.bf16.mxu0 %v3693
          %3976 = vmatpush1.bf16.msra.mxu0 %v3692
          %3977 = vmatprep.subr.bf16.mxu0 %v3695
          %3978 = vmatpush1.bf16.msra.mxu0 %v3694
          %3979 = vmatprep.mubr.bf16.mxu0 %v3043
          %3980 = vmatmul.mubr.bf16.gmra.mrb[0].mxu0 %v3042
          %v3981 = vpop.f32.mrb[0].mxu0
          %v3982 = vadd.f32 %v3941, %v3981
          %v3983 = vpop.f32.mrb[0].mxu0
          %v3984 = vadd.f32 %v3943, %v3983
          %v3985 = vpop.f32.mrb[0].mxu0
          %v3986 = vpop.f32.mrb[0].mxu0
          %3987 = vdwg.mxu0
          %v3988 = vsub.f32 0.0, %v3982
          %v3989 = vsub.f32 0.0, %v3984
          %v3990 = vmul.f32 %v3988, 1.442695
          %v3991 = vpow.pop %v3990
          %v3992 = vmul.f32 %v3989, 1.442695
          %v3993 = vpow.pop %v3992
          %v3994 = vadd.f32 %v3991, 1.0
          %v3995 = vadd.f32 %v3993, 1.0
          %v3996 = vrcp.pop %v3994
          %v3997 = vrcp.pop %v3995
          %v3998 = vpack.c.bf16 %v3996, %v3996
          %v3999 = vpack.c.bf16 %v3997, %v3997
          %v4000 = vld [vmem:[%s5] sm:$0xf]
          %v4001 = vld [vmem:[%s5 + $0x4] sm:$0xf]
          %v4002 = vld [vmem:[%s5 + $0x8] sm:$0xf]
          %v4003 = vld [vmem:[%s5 + $0xc] sm:$0xf]
          %v4004 = vld [vmem:[%s5 + $0x10] sm:$0xf]
          %v4005 = vld [vmem:[%s5 + $0x14] sm:$0xf]
          %v4006 = vld [vmem:[%s5 + $0x18] sm:$0xf]
          %v4007 = vld [vmem:[%s5 + $0x1c] sm:$0xf]
          %v4008 = vld [vmem:[%s5 + $0x20] sm:$0xf]
          %v4009 = vld [vmem:[%s5 + $0x24] sm:$0xf]
          %v4010 = vld [vmem:[%s5 + $0x28] sm:$0xf]
          %v4011 = vld [vmem:[%s5 + $0x2c] sm:$0xf]
          %v4012 = vld [vmem:[%s5 + $0x30] sm:$0xf]
          %v4013 = vld [vmem:[%s5 + $0x34] sm:$0xf]
          %v4014 = vld [vmem:[%s5 + $0x38] sm:$0xf]
          %v4015 = vld [vmem:[%s5 + $0x3c] sm:$0xf]
          %v4016 = vld [vmem:[%s5 + $0x40] sm:$0xf]
          %v4017 = vld [vmem:[%s5 + $0x44] sm:$0xf]
          %v4018 = vld [vmem:[%s5 + $0x48] sm:$0xf]
          %v4019 = vld [vmem:[%s5 + $0x4c] sm:$0xf]
          %v4020 = vld [vmem:[%s5 + $0x50] sm:$0xf]
          %v4021 = vld [vmem:[%s5 + $0x54] sm:$0xf]
          %v4022 = vld [vmem:[%s5 + $0x58] sm:$0xf]
          %v4023 = vld [vmem:[%s5 + $0x5c] sm:$0xf]
          %v4024 = vld [vmem:[%s5 + $0x60] sm:$0xf]
          %v4025 = vld [vmem:[%s5 + $0x64] sm:$0xf]
          %v4026 = vld [vmem:[%s5 + $0x68] sm:$0xf]
          %v4027 = vld [vmem:[%s5 + $0x6c] sm:$0xf]
          %v4028 = vld [vmem:[%s5 + $0x70] sm:$0xf]
          %v4029 = vld [vmem:[%s5 + $0x74] sm:$0xf]
          %v4030 = vld [vmem:[%s5 + $0x78] sm:$0xf]
          %v4031 = vld [vmem:[%s5 + $0x7c] sm:$0xf]
          %v4032 = vld [vmem:[#allocation11] sm:$0x1]
          %v4034 = vlaneseq
          %v4035 = vshrl.u32 %v4034, 7
          %v4036 = vsub.s32 0, %v4035
          %v4037 = vrot.slane %v4032, %v4036
          %v4071 = vunpack.c.l.b16 %v4000
          %v4072 = vunpack.c.l.b16 %v4001
          %v4073 = vunpack.c.l.b16 %v4002
          %v4074 = vunpack.c.l.b16 %v4003
          %v4075 = vunpack.c.l.b16 %v4004
          %v4076 = vunpack.c.l.b16 %v4005
          %v4077 = vunpack.c.l.b16 %v4006
          %v4078 = vunpack.c.l.b16 %v4007
          %v4079 = vunpack.c.l.b16 %v4008
          %v4080 = vunpack.c.l.b16 %v4009
          %v4081 = vunpack.c.l.b16 %v4010
          %v4082 = vunpack.c.l.b16 %v4011
          %v4083 = vunpack.c.l.b16 %v4012
          %v4084 = vunpack.c.l.b16 %v4013
          %v4085 = vunpack.c.l.b16 %v4014
          %v4086 = vunpack.c.l.b16 %v4015
          %v4087 = vunpack.c.l.b16 %v4016
          %v4088 = vunpack.c.l.b16 %v4017
          %v4089 = vunpack.c.l.b16 %v4018
          %v4090 = vunpack.c.l.b16 %v4019
          %v4091 = vunpack.c.l.b16 %v4020
          %v4092 = vunpack.c.l.b16 %v4021
          %v4093 = vunpack.c.l.b16 %v4022
          %v4094 = vunpack.c.l.b16 %v4023
          %v4095 = vunpack.c.l.b16 %v4024
          %v4096 = vunpack.c.l.b16 %v4025
          %v4097 = vunpack.c.l.b16 %v4026
          %v4098 = vunpack.c.l.b16 %v4027
          %v4099 = vunpack.c.l.b16 %v4028
          %v4100 = vunpack.c.l.b16 %v4029
          %v4101 = vunpack.c.l.b16 %v4030
          %v4102 = vunpack.c.l.b16 %v4031
          %v4103 = vpack.c.b16 %v4072, %v4071
          %v4104 = vpack.c.b16 %v4074, %v4073
          %v4105 = vpack.c.b16 %v4076, %v4075
          %v4106 = vpack.c.b16 %v4078, %v4077
          %v4107 = vpack.c.b16 %v4080, %v4079
          %v4108 = vpack.c.b16 %v4082, %v4081
          %v4109 = vpack.c.b16 %v4084, %v4083
          %v4110 = vpack.c.b16 %v4086, %v4085
          %v4111 = vpack.c.b16 %v4088, %v4087
          %v4112 = vpack.c.b16 %v4090, %v4089
          %v4113 = vpack.c.b16 %v4092, %v4091
          %v4114 = vpack.c.b16 %v4094, %v4093
          %v4115 = vpack.c.b16 %v4096, %v4095
          %v4116 = vpack.c.b16 %v4098, %v4097
          %v4117 = vpack.c.b16 %v4100, %v4099
          %v4118 = vpack.c.b16 %v4102, %v4101
          %4135 = vmatprep.subr.bf16.mxu0 0
          %4136 = vmatpush1.bf16.msra.mxu0 %v4103
          %4137 = vmatprep.subr.bf16.mxu0 0
          %4138 = vmatpush1.bf16.msra.mxu0 %v4104
          %4139 = vmatprep.subr.bf16.mxu0 0
          %4140 = vmatpush1.bf16.msra.mxu0 %v4105
          %4141 = vmatprep.subr.bf16.mxu0 0
          %4142 = vmatpush1.bf16.msra.mxu0 %v4106
          %4143 = vmatprep.subr.bf16.mxu0 0
          %4144 = vmatpush1.bf16.msra.mxu0 %v4107
          %4145 = vmatprep.subr.bf16.mxu0 0
          %4146 = vmatpush1.bf16.msra.mxu0 %v4108
          %4147 = vmatprep.subr.bf16.mxu0 0
          %4148 = vmatpush1.bf16.msra.mxu0 %v4109
          %4149 = vmatprep.subr.bf16.mxu0 0
          %4150 = vmatpush1.bf16.msra.mxu0 %v4110
          %4151 = vmatprep.subr.bf16.mxu0 0
          %4152 = vmatpush1.bf16.msra.mxu0 %v4111
          %4153 = vmatprep.subr.bf16.mxu0 0
          %4154 = vmatpush1.bf16.msra.mxu0 %v4112
          %4155 = vmatprep.subr.bf16.mxu0 0
          %4156 = vmatpush1.bf16.msra.mxu0 %v4113
          %4157 = vmatprep.subr.bf16.mxu0 0
          %4158 = vmatpush1.bf16.msra.mxu0 %v4114
          %4159 = vmatprep.subr.bf16.mxu0 0
          %4160 = vmatpush1.bf16.msra.mxu0 %v4115
          %4161 = vmatprep.subr.bf16.mxu0 0
          %4162 = vmatpush1.bf16.msra.mxu0 %v4116
          %4163 = vmatprep.subr.bf16.mxu0 0
          %4164 = vmatpush1.bf16.msra.mxu0 %v4117
          %4165 = vmatprep.subr.bf16.mxu0 0
          %4166 = vmatpush1.bf16.msra.mxu0 %v4118
          %4167 = vmatprep.mubr.bf16.mxu0 %v3999
          %4168 = vmatmul.mubr.bf16.gmra.mrb[0].mxu0 %v3998
          %v4169 = vpop.f32.mrb[0].mxu0
          %v4170 = vadd.f32 %v4037, %v4169
          %v4171 = vpop.f32.mrb[0].mxu0
          %v4172 = vpop.f32.mrb[0].mxu0
          %v4173 = vpop.f32.mrb[0].mxu0
          %4174 = vdwg.mxu0
          %v4175 = vsub.f32 0.0, %v4170
          %v4176 = vmul.f32 %v4175, 1.442695
          %v4177 = vpow.pop %v4176
          %v4178 = vadd.f32 %v4177, 1.0
          %v4179 = vrcp.pop %v4178
          %vm4180 = vcmask 74752
          %v4181 = vsel %vm4180, %v4179, 0.0
          %4182 = vadd.xlane.f32.xlu0 %v4181
          %v4183 = vpop.xlane.xlu0 %4182
          %v4184 = vrcp.pop %v4183
          %v4185 = vmul.f32 %v4179, %v4184
          %4186 = vst.msk [vmem:[#allocation12] sm:$0x3] %vm4180, %v4185
        $region76: #{cnn2_forward.3} parent=47 // pred_fallthru
          _
        // Predicated region
        $region77: #{cnn2_forward.3} parent=47 // pred_check
          %p4187 = pneg %p213
        $region78: #{cnn2_forward.3} parent=47 // pred_check_branch
          %4189 = sbr.rel (%p4187) target = $region80
        $region79: #{cnn2_forward.3} parent=47 // pred_region
          %s4191 = ssub.s32 32, 32
          %4192 = vsyncadd [#allocation5], %s4191
          %s4193 = smul.addr %s28, 32
          %s4194 = scalar_lea.hbm %s7, %s4193
          %s4196 = sshll.u32 [#allocation12], 4
          %s4197 = int_to_ptr.vmem [resolvable:$true] %s4196
          %4199 = dma.vmem_to_hbm [thread:$0]  %s4197, 32, %s4194, [#allocation5]
        $region80: #{cnn2_forward.3} parent=47 // pred_fallthru
          _
        // Predicated region
        $region81: #{cnn2_forward.3} parent=47 // pred_check
          %p4200 = pneg %p213
        $region82: #{cnn2_forward.3} parent=47 // pred_check_branch
          %4202 = sbr.rel (%p4200) target = $region84
        $region83: #{cnn2_forward.3} parent=47 // pred_region
          %4203 = dma.done [#allocation5], 32
        $region84: #{cnn2_forward.3} parent=47 // pred_fallthru
          _
      $region48: #{cnn2_forward.3} parent=5 // pred_fallthru
        _
      %p4204 = scmp.le.s32.totalorder 2, %s19
      // Predicated region
      $region85: #{cnn2_forward.3} parent=5 // pred_check
        %p4205 = pneg %p4204
      $region86: #{cnn2_forward.3} parent=5 // pred_check_branch
        %4207 = sbr.rel (%p4205) target = $region88
      $region87: #{cnn2_forward.3} parent=5 // pred_region
        %s4208 = ssub.s32 %s19, 2
      $region88: #{cnn2_forward.3} parent=5 // pred_fallthru
        _
    $region6: #{cnn2_forward.3} parent=1 // loop_footer
      %s23 = sadd.s32 1, %s19
    $region7: #{cnn2_forward.3} parent=1 // loop_footer_branch
      %18 = sbr.rel target = $region3
    $region8: #{cnn2_forward.3} parent=1 // loop_exit
      _
    %4209 = vsyncpa [#allocation4], 1
    %s4210 = scalar_lea.sflag [#allocation4], 1
    %4211 = vsyncpa %s4210, 1
    %4212 = vsyncpa [#allocation7], 1
    %4213 = vsyncpa [#allocation10], 1
    %4214 = vsyncpa [#allocation5], 1
    %s4215 = scalar_lea.sflag [#allocation5], 1
    %4216 = vsyncpa %s4215, 1

</llo_original>
